<compile_context>
chip_gen: v7x
topology: tpu7x:2x2x1
jax: 0.10.0
libtpu: 0.0.40
codegen_flags: <defaults>
</compile_context>

<pallas_src>
import math
import functools

import numpy as np
import jax
import jax.numpy as jnp
from jax.experimental import pallas as pl
from jax.experimental.pallas import tpu as pltpu


# ----------------------------------------------------------------------------
# helpers
# ----------------------------------------------------------------------------
def _rotary_tables(max_pos, rdim):
    """ChatGLM RotaryEmbedding tables: cos/sin of shape [max_pos, rdim] (float32, pure JAX)."""
    inv_freq = 1.0 / (10000.0 ** (jnp.arange(0, rdim, 2, dtype=jnp.float32) / float(rdim)))
    t = jnp.arange(max_pos, dtype=jnp.float32)
    freqs = jnp.outer(t, inv_freq)                     # [max_pos, rdim/2]
    emb = jnp.concatenate([freqs, freqs], axis=-1)     # [max_pos, rdim]
    return jnp.cos(emb), jnp.sin(emb)


def _rotate_half_blocks(x, w, neg_mask):
    """rotate_half applied independently to every contiguous width-w block of the last axis.

    rotate_half(y) = concat([-y[..., w//2:], y[..., :w//2]]) per block. Implemented as two
    full-width lane rotations + a select (stays off the MXU). When the lane width is a multiple
    of 128 the rotations go through the XLU via pltpu.roll; otherwise a slice+concat fallback.
    """
    n = x.shape[-1]
    s = w // 2
    if n % 128 == 0:
        fwd = pltpu.roll(x, s, axis=x.ndim - 1)        # fwd[i] = x[i - s]
        bwd = pltpu.roll(x, n - s, axis=x.ndim - 1)    # bwd[i] = x[i + s]
    else:
        fwd = jnp.concatenate([x[..., n - s:], x[..., :n - s]], axis=-1)
        bwd = jnp.concatenate([x[..., s:], x[..., :s]], axis=-1)
    return jnp.where(neg_mask, -bwd, fwd)


def _pick_batch_block(b, sq, target_rows=256):
    """Largest divisor of b such that batch_block*sq stays near the MXU M target."""
    cap = max(1, target_rows // max(sq, 1))
    best = 1
    for d in range(1, b + 1):
        if b % d == 0 and d <= cap:
            best = d
    return best


# ----------------------------------------------------------------------------
# Pallas kernel: one GLM block forward for a block of batch elements (grid = batch blocks)
# ----------------------------------------------------------------------------
def _glm_block_kernel(hs_ref, cos_ref, sin_ref, mask_ref, pk_ref, pv_ref,
                      ln1_w_ref, ln1_b_ref, qkv_w_ref, qkv_b_ref, dw_ref, db_ref,
                      ln2_w_ref, ln2_b_ref, h4h_w_ref, h4h_b_ref, f4h_w_ref, f4h_b_ref,
                      out_ref, newk_ref, newv_ref, *, layer_id, num_layers, eps):
    bblk, sq, H = hs_ref.shape
    _, nh, skp, hn = pk_ref.shape
    sk = skp + sq
    w = hn // 2                      # rotary block width (2-D rotary: two width-w halves / head)
    R = bblk * sq                    # rows folded into the matmul M dimension
    G = bblk * nh                    # batched-head dim for the attention contractions

    alpha = float(math.sqrt(2.0 * num_layers))
    coeff = float(layer_id + 1)
    inv_norm = 1.0 / math.sqrt(hn)   # coeff folded out of the q scale ...
    mask_val = -10000.0 * coeff      # ... and into the fill value (exactly equivalent)

    def layer_norm(x, g, bias):
        mu = jnp.mean(x, axis=-1, keepdims=True)
        var = jnp.mean((x - mu) * (x - mu), axis=-1, keepdims=True)
        return (x - mu) * jax.lax.rsqrt(var + eps) * g + bias

    x = hs_ref[...].reshape(R, H)                                        # [R, H] f32
    cosf = jnp.tile(cos_ref[...].reshape(R, hn), (1, nh))                # broadcast heads once
    sinf = jnp.tile(sin_ref[...].reshape(R, hn), (1, nh))

    # ---- input LayerNorm + fused QKV projection (M = bblk*sq keeps the MXU fed) ----
    attn_in = layer_norm(x, ln1_w_ref[...], ln1_b_ref[...])
    mixed = jnp.dot(attn_in.astype(jnp.bfloat16), qkv_w_ref[...],
                    preferred_element_type=jnp.float32) + qkv_b_ref[...]  # [R, 3H]
    q_all = mixed[:, 0:H]
    k_all = mixed[:, H:2 * H]
    v_all = mixed[:, 2 * H:3 * H]

    # ---- 2-D rotary on all heads at once (rolls + select, no MXU) ----
    lane = jax.lax.broadcasted_iota(jnp.int32, (R, H), 1)
    neg_mask = (lane % w) < (w // 2)
    q_all = q_all * cosf + _rotate_half_blocks(q_all, w, neg_mask) * sinf
    k_all = k_all * cosf + _rotate_half_blocks(k_all, w, neg_mask) * sinf

    # ---- new K/V written once; cache passthrough handled outside the kernel ----
    newk_ref[...] = k_all.reshape(bblk, sq, H)
    newv_ref[...] = v_all.reshape(bblk, sq, H)

    # ---- head-batched attention: no K/V concat, two matmuls per side ----
    def heads(x2d):                  # [R, H] head-major -> [G, sq, hn] bf16
        return jnp.transpose(x2d.reshape(bblk, sq, nh, hn),
                             (0, 2, 1, 3)).reshape(G, sq, hn).astype(jnp.bfloat16)

    q_h = heads(q_all * inv_norm)
    k_h = heads(k_all)
    v_h = heads(v_all)
    pk = pk_ref[...].reshape(G, skp, hn)                                 # bf16 cache as-is
    pv = pv_ref[...].reshape(G, skp, hn)

    s_past = jnp.einsum('gqd,gkd->gqk', q_h, pk, preferred_element_type=jnp.float32)
    s_new = jnp.einsum('gqd,gkd->gqk', q_h, k_h, preferred_element_type=jnp.float32)
    scores = jnp.concatenate([s_past, s_new], axis=-1).reshape(bblk, nh, sq, sk)

    maskb = mask_ref[...]                                                # [bblk, sq, sk] int8
    scores = jnp.where((maskb != 0)[:, None, :, :], mask_val, scores)
    smax = jnp.max(scores, axis=-1, keepdims=True)
    p = jnp.exp(scores - smax)
    p = p * pl.reciprocal(jnp.sum(p, axis=-1, keepdims=True), approx=True)
    p = p.reshape(G, sq, sk)

    ctx = jnp.einsum('gqk,gkd->gqd', p[:, :, :skp].astype(jnp.bfloat16), pv,
                     preferred_element_type=jnp.float32)
    ctx = ctx + jnp.einsum('gqk,gkd->gqd', p[:, :, skp:].astype(jnp.bfloat16), v_h,
                           preferred_element_type=jnp.float32)
    ctx = jnp.transpose(ctx.reshape(bblk, nh, sq, hn), (0, 2, 1, 3)).reshape(R, H)

    # ---- dense projection + residual ----
    attn_out = jnp.dot(ctx.astype(jnp.bfloat16), dw_ref[...],
                       preferred_element_type=jnp.float32) + db_ref[...]
    hidden = attn_in * alpha + attn_out

    # ---- MLP (gelu-tanh), f32 elementwise, bf16 matmul inputs ----
    mlp_in = layer_norm(hidden, ln2_w_ref[...], ln2_b_ref[...])
    inter = jnp.dot(mlp_in.astype(jnp.bfloat16), h4h_w_ref[...],
                    preferred_element_type=jnp.float32) + h4h_b_ref[...]
    inter = 0.5 * inter * (1.0 + jnp.tanh(
        0.7978845608028654 * inter * (1.0 + 0.044715 * inter * inter)))
    mlp_out = jnp.dot(inter.astype(jnp.bfloat16), f4h_w_ref[...],
                      preferred_element_type=jnp.float32) + f4h_b_ref[...]

    out_ref[...] = (mlp_in * alpha + mlp_out).reshape(bblk, sq, H)


# ----------------------------------------------------------------------------
# Wrapper: GlmBlockCache.forward
# ----------------------------------------------------------------------------
def glm_block_cache_forward(hidden_states, position_ids, attention_mask,
                            past_k, past_v, params, *, layer_id, num_layers,
                            batch_block=None):
    sq, b, H = hidden_states.shape
    skp, _, nh, hn = past_k.shape
    assert skp >= 1
    sk = skp + sq
    r = hn // 2
    eps = 1e-5

    bblk = batch_block if batch_block is not None else _pick_batch_block(b, sq)
    assert b % bblk == 0
    grid_b = b // bblk

    # --- rotary cos/sin gathered by (position_ids, block_position_ids), [b, sq, hn] only ---
    cos_tab, sin_tab = _rotary_tables(sk, r)
    position_ids = jnp.asarray(position_ids, jnp.int32)
    pos = position_ids[:, 0, :]                          # [b, sq]
    blk = position_ids[:, 1, :]
    cos_head = jnp.concatenate([cos_tab[pos], cos_tab[blk]], axis=-1)    # [b, sq, hn]
    sin_head = jnp.concatenate([sin_tab[pos], sin_tab[blk]], axis=-1)

    # --- re-layout module tensors for the kernel (batch/head leading) ---
    hs_b = jnp.transpose(hidden_states, (1, 0, 2)).astype(jnp.float32)   # [b, sq, H]
    pk_b = jnp.transpose(past_k, (1, 2, 0, 3)).astype(jnp.bfloat16)      # [b, nh, skp, hn] bf16
    pv_b = jnp.transpose(past_v, (1, 2, 0, 3)).astype(jnp.bfloat16)
    mask_b = (jnp.asarray(attention_mask)[:, 0] != 0).astype(jnp.int8)   # [b, sq, sk] int8

    # --- fused, rearranged weights: one [H,3H] QKV matmul whose output columns are
    #     [q(all heads, head-major) | k(...) | v(...)]; dense/MLP transposed; bf16 ---
    qkv_w_r = jnp.transpose(params['qkv_w'].T.reshape(H, nh, 3, hn), (0, 2, 1, 3))
    qkv_w_r = qkv_w_r.reshape(H, 3 * H).astype(jnp.bfloat16)
    qkv_b_r = jnp.transpose(params['qkv_b'].reshape(nh, 3, hn),
                            (1, 0, 2)).reshape(1, 3 * H).astype(jnp.float32)
    dw_r = params['dense_w'].T.astype(jnp.bfloat16)                      # [H, H]
    h4h_w_r = params['h4h_w'].T.astype(jnp.bfloat16)                     # [H, 4H]
    f4h_w_r = params['f4h_w'].T.astype(jnp.bfloat16)                     # [4H, H]

    ln1_w = params['ln1_w'][None].astype(jnp.float32)
    ln1_b = params['ln1_b'][None].astype(jnp.float32)
    dense_b = params['dense_b'][None].astype(jnp.float32)
    ln2_w = params['ln2_w'][None].astype(jnp.float32)
    ln2_b = params['ln2_b'][None].astype(jnp.float32)
    h4h_b = params['h4h_b'][None].astype(jnp.float32)
    f4h_b = params['f4h_b'][None].astype(jnp.float32)

    weight_args = (ln1_w, ln1_b, qkv_w_r, qkv_b_r, dw_r, dense_b,
                   ln2_w, ln2_b, h4h_w_r, h4h_b, f4h_w_r, f4h_b)
    batched_args = (hs_b, cos_head, sin_head, mask_b, pk_b, pv_b)

    # --- VMEM limit derived from actual block/weight sizes, clamped under every gen's VMEM ---
    def _nbytes(a):
        return int(np.prod(a.shape)) * jnp.dtype(a.dtype).itemsize

    block_in = sum(_nbytes(a) // grid_b for a in batched_args)
    block_out = 3 * bblk * sq * H * 4
    weight_bytes = sum(_nbytes(a) for a in weight_args)
    vmem_limit = int(min(48 << 20,
                         max(16 << 20, 2 * (block_in + block_out + weight_bytes) + (8 << 20))))

    kernel = functools.partial(_glm_block_kernel, layer_id=layer_id,
                               num_layers=num_layers, eps=eps)

    def batch_spec(*tail):
        return pl.BlockSpec((bblk,) + tail, lambda bi: (bi,) + (0,) * len(tail))

    def full_spec(*shape):
        return pl.BlockSpec(shape, lambda bi: (0,) * len(shape))

    out, newk, newv = pl.pallas_call(
        kernel,
        grid=(grid_b,),
        out_shape=(
            jax.ShapeDtypeStruct((b, sq, H), jnp.float32),
            jax.ShapeDtypeStruct((b, sq, H), jnp.float32),
            jax.ShapeDtypeStruct((b, sq, H), jnp.float32),
        ),
        in_specs=[
            batch_spec(sq, H),            # hidden states
            batch_spec(sq, hn),           # cos (per head-dim, broadcast in-kernel)
            batch_spec(sq, hn),           # sin
            batch_spec(sq, sk),           # attention mask (int8)
            batch_spec(nh, skp, hn),      # past_k (bf16)
            batch_spec(nh, skp, hn),      # past_v (bf16)
            full_spec(1, H),              # ln1_w
            full_spec(1, H),              # ln1_b
            full_spec(H, 3 * H),          # qkv_w (bf16)
            full_spec(1, 3 * H),          # qkv_b
            full_spec(H, H),              # dense_w (bf16)
            full_spec(1, H),              # dense_b
            full_spec(1, H),              # ln2_w
            full_spec(1, H),              # ln2_b
            full_spec(H, 4 * H),          # h4h_w (bf16)
            full_spec(1, 4 * H),          # h4h_b
            full_spec(4 * H, H),          # f4h_w (bf16)
            full_spec(1, H),              # f4h_b
        ],
        out_specs=(
            batch_spec(sq, H),
            batch_spec(sq, H),
            batch_spec(sq, H),
        ),
        compiler_params=pltpu.CompilerParams(
            dimension_semantics=("parallel",),
            vmem_limit_bytes=vmem_limit),
    )(hs_b, cos_head, sin_head, mask_b, pk_b, pv_b, *weight_args[0:2], qkv_w_r, qkv_b_r,
      dw_r, dense_b, ln2_w, ln2_b, h4h_w_r, h4h_b, f4h_w_r, f4h_b)

    # --- back to module layout; present = concat(past, new)[1:] via XLA slice+concat ---
    hidden_out = jnp.transpose(out, (1, 0, 2))                            # [sq, b, H]
    new_k = jnp.transpose(newk.reshape(b, sq, nh, hn), (1, 0, 2, 3))      # [sq, b, nh, hn]
    new_v = jnp.transpose(newv.reshape(b, sq, nh, hn), (1, 0, 2, 3))
    past_k32 = jnp.asarray(past_k, jnp.float32)
    past_v32 = jnp.asarray(past_v, jnp.float32)
    present_k = jnp.concatenate([past_k32[1:], new_k], axis=0)            # [sk-1, b, nh, hn]
    present_v = jnp.concatenate([past_v32[1:], new_v], axis=0)
    return hidden_out, present_k, present_v


# ----------------------------------------------------------------------------
# Pure-JAX reference (direct translation of the PyTorch block) for validation
# ----------------------------------------------------------------------------
def glm_block_cache_reference(hidden_states, position_ids, attention_mask,
                              past_k, past_v, params, *, layer_id, num_layers, nh):
    sq, b, H = hidden_states.shape
    skp = past_k.shape[0]
    hn = H // nh
    r = hn // 2
    eps = 1e-5

    def ln(x, w, bb):
        mu = x.mean(-1, keepdims=True)
        var = ((x - mu) ** 2).mean(-1, keepdims=True)
        return (x - mu) / jnp.sqrt(var + eps) * w + bb

    attn_in = ln(hidden_states, params['ln1_w'], params['ln1_b'])
    mixed = attn_in @ params['qkv_w'].T + params['qkv_b']
    mixed = mixed.reshape(sq, b, nh, 3 * hn)
    q, k, v = jnp.split(mixed, 3, axis=-1)

    cos_tab, sin_tab = _rotary_tables(skp + sq, r)
    pos = jnp.transpose(position_ids[:, 0, :], (1, 0))      # [sq, b]
    blk = jnp.transpose(position_ids[:, 1, :], (1, 0))

    def rot_half(x):
        h = x.shape[-1] // 2
        return jnp.concatenate([-x[..., h:], x[..., :h]], axis=-1)

    def apply_rot(x, pid):
        c = cos_tab[pid][:, :, None, :]
        s = sin_tab[pid][:, :, None, :]
        return x * c + rot_half(x) * s

    q1, q2 = q[..., :r], q[..., r:]
    k1, k2 = k[..., :r], k[..., r:]
    q1, k1 = apply_rot(q1, pos), apply_rot(k1, pos)
    q2, k2 = apply_rot(q2, blk), apply_rot(k2, blk)
    q = jnp.concatenate([q1, q2], axis=-1)
    k = jnp.concatenate([k1, k2], axis=-1)

    key_layer = jnp.concatenate([past_k, k], axis=0)        # [sk, b, nh, hn]
    value_layer = jnp.concatenate([past_v, v], axis=0)

    coeff = float(layer_id + 1)
    qs = q / (math.sqrt(hn) * coeff)
    scores = jnp.einsum('qbnh,kbnh->bnqk', qs, key_layer)
    scores = jnp.where(attention_mask, -10000.0, scores)
    scores = scores * coeff
    probs = jax.nn.softmax(scores, axis=-1)
    ctx = jnp.einsum('bnqk,kbnh->qbnh', probs, value_layer).reshape(sq, b, H)
    attn_out = ctx @ params['dense_w'].T + params['dense_b']

    alpha = (2.0 * num_layers) ** 0.5
    hidden = attn_in * alpha + attn_out
    mlp_in = ln(hidden, params['ln2_w'], params['ln2_b'])
    inter = mlp_in @ params['h4h_w'].T + params['h4h_b']
    inter = 0.5 * inter * (1.0 + jnp.tanh(
        0.7978845608028654 * inter * (1.0 + 0.044715 * inter * inter)))
    mlp_out = inter @ params['f4h_w'].T + params['f4h_b']
    out = mlp_in * alpha + mlp_out
    return out, key_layer[1:], value_layer[1:]


# ----------------------------------------------------------------------------
if __name__ == "__main__":
    sq, b = 8, 2          # query seq len, batch
    H, nh = 32, 2         # hidden, heads
    hn = H // nh          # head dim (rotary dim = hn//2, 2D encoding)
    skp = 8               # cached (past) seq len
    sk = skp + sq
    layer_id = 1
    num_layers = 28       # alpha = sqrt(2*num_layers), as in ChatGLM-6B config

    key = jax.random.PRNGKey(0)
    keys = jax.random.split(key, 16)

    def w(k_, shape, scale=0.05):
        return jax.random.normal(k_, shape, jnp.float32) * scale

    params = {
        'ln1_w': 1.0 + 0.1 * jax.random.normal(keys[0], (H,), jnp.float32),
        'ln1_b': 0.1 * jax.random.normal(keys[1], (H,), jnp.float32),
        'qkv_w': w(keys[2], (3 * H, H)),
        'qkv_b': w(keys[3], (3 * H,)),
        'dense_w': w(keys[4], (H, H)),
        'dense_b': w(keys[5], (H,)),
        'ln2_w': 1.0 + 0.1 * jax.random.normal(keys[6], (H,), jnp.float32),
        'ln2_b': 0.1 * jax.random.normal(keys[7], (H,), jnp.float32),
        'h4h_w': w(keys[8], (4 * H, H)),
        'h4h_b': w(keys[9], (4 * H,)),
        'f4h_w': w(keys[10], (H, 4 * H)),
        'f4h_b': w(keys[11], (H,)),
    }

    hidden_states = jax.random.normal(keys[12], (sq, b, H), jnp.float32)
    past_k = jax.random.normal(keys[13], (skp, b, nh, hn), jnp.float32)
    past_v = jax.random.normal(keys[14], (skp, b, nh, hn), jnp.float32)

    pos = np.broadcast_to(np.arange(skp, skp + sq, dtype=np.int32), (b, sq))
    blk = np.broadcast_to(np.arange(sq, dtype=np.int32), (b, sq))
    position_ids = np.stack([pos, blk], axis=1).copy()       # [b, 2, sq]

    q_glob = skp + np.arange(sq)[:, None]
    k_glob = np.arange(sk)[None, :]
    attention_mask = np.broadcast_to(k_glob > q_glob, (b, 1, sq, sk)).copy()  # bool, True = masked

    out, pk, pv = glm_block_cache_forward(
        hidden_states, position_ids, attention_mask, past_k, past_v, params,
        layer_id=layer_id, num_layers=num_layers)
    jax.block_until_ready((out, pk, pv))

    ref_out, ref_pk, ref_pv = glm_block_cache_reference(
        hidden_states, jnp.asarray(position_ids), jnp.asarray(attention_mask),
        past_k, past_v, params, layer_id=layer_id, num_layers=num_layers, nh=nh)

    np.testing.assert_allclose(np.asarray(out), np.asarray(ref_out), rtol=5e-2, atol=5e-2)
    np.testing.assert_allclose(np.asarray(pk), np.asarray(ref_pk), rtol=5e-2, atol=5e-2)
    np.testing.assert_allclose(np.asarray(pv), np.asarray(ref_pv), rtol=5e-2, atol=5e-2)

    assert out.shape == (sq, b, H)
    assert pk.shape == (sk - 1, b, nh, hn) and pv.shape == (sk - 1, b, nh, hn)
    print("KERNEL_OK")
</pallas_src>

<mosaic_0001>
module attributes {stable_mosaic.version = 11 : i64} {
  func.func @_glm_block_kernel(%arg0: i32, %arg1: memref<2x8x32xf32, #tpu.memory_space<vmem>>, %arg2: memref<2x8x16xf32, #tpu.memory_space<vmem>>, %arg3: memref<2x8x16xf32, #tpu.memory_space<vmem>>, %arg4: memref<2x8x16xi8, #tpu.memory_space<vmem>>, %arg5: memref<2x2x8x16xbf16, #tpu.memory_space<vmem>>, %arg6: memref<2x2x8x16xbf16, #tpu.memory_space<vmem>>, %arg7: memref<1x32xf32, #tpu.memory_space<vmem>>, %arg8: memref<1x32xf32, #tpu.memory_space<vmem>>, %arg9: memref<32x96xbf16, #tpu.memory_space<vmem>>, %arg10: memref<1x96xf32, #tpu.memory_space<vmem>>, %arg11: memref<32x32xbf16, #tpu.memory_space<vmem>>, %arg12: memref<1x32xf32, #tpu.memory_space<vmem>>, %arg13: memref<1x32xf32, #tpu.memory_space<vmem>>, %arg14: memref<1x32xf32, #tpu.memory_space<vmem>>, %arg15: memref<32x128xbf16, #tpu.memory_space<vmem>>, %arg16: memref<1x128xf32, #tpu.memory_space<vmem>>, %arg17: memref<128x32xbf16, #tpu.memory_space<vmem>>, %arg18: memref<1x32xf32, #tpu.memory_space<vmem>>, %arg19: memref<2x8x32xf32, #tpu.memory_space<vmem>>, %arg20: memref<2x8x32xf32, #tpu.memory_space<vmem>>, %arg21: memref<2x8x32xf32, #tpu.memory_space<vmem>>) attributes {dimension_semantics = [#tpu.dimension_semantics<parallel>], iteration_bounds = array<i64: 1>, scalar_prefetch = 0 : i64, scratch_operands = 0 : i64, tpu.core_type = #tpu.core_type<tc>, window_params = [{transform_indices = @transform_0, window_bounds = array<i64: 2, 8, 32>}, {transform_indices = @transform_1, window_bounds = array<i64: 2, 8, 16>}, {transform_indices = @transform_2, window_bounds = array<i64: 2, 8, 16>}, {transform_indices = @transform_3, window_bounds = array<i64: 2, 8, 16>}, {transform_indices = @transform_4, window_bounds = array<i64: 2, 2, 8, 16>}, {transform_indices = @transform_5, window_bounds = array<i64: 2, 2, 8, 16>}, {pipeline_mode = #tpu.pipeline_mode<synchronous>, transform_indices = @transform_6, window_bounds = array<i64: 1, 32>}, {pipeline_mode = #tpu.pipeline_mode<synchronous>, transform_indices = @transform_7, window_bounds = array<i64: 1, 32>}, {pipeline_mode = #tpu.pipeline_mode<synchronous>, transform_indices = @transform_8, window_bounds = array<i64: 32, 96>}, {pipeline_mode = #tpu.pipeline_mode<synchronous>, transform_indices = @transform_9, window_bounds = array<i64: 1, 96>}, {pipeline_mode = #tpu.pipeline_mode<synchronous>, transform_indices = @transform_10, window_bounds = array<i64: 32, 32>}, {pipeline_mode = #tpu.pipeline_mode<synchronous>, transform_indices = @transform_11, window_bounds = array<i64: 1, 32>}, {pipeline_mode = #tpu.pipeline_mode<synchronous>, transform_indices = @transform_12, window_bounds = array<i64: 1, 32>}, {pipeline_mode = #tpu.pipeline_mode<synchronous>, transform_indices = @transform_13, window_bounds = array<i64: 1, 32>}, {pipeline_mode = #tpu.pipeline_mode<synchronous>, transform_indices = @transform_14, window_bounds = array<i64: 32, 128>}, {pipeline_mode = #tpu.pipeline_mode<synchronous>, transform_indices = @transform_15, window_bounds = array<i64: 1, 128>}, {pipeline_mode = #tpu.pipeline_mode<synchronous>, transform_indices = @transform_16, window_bounds = array<i64: 128, 32>}, {pipeline_mode = #tpu.pipeline_mode<synchronous>, transform_indices = @transform_17, window_bounds = array<i64: 1, 32>}, {transform_indices = @transform_18, window_bounds = array<i64: 2, 8, 32>}, {transform_indices = @transform_19, window_bounds = array<i64: 2, 8, 32>}, {transform_indices = @transform_20, window_bounds = array<i64: 2, 8, 32>}]} {
    %c0 = arith.constant 0 : index
    %c0_0 = arith.constant 0 : index
    %c0_1 = arith.constant 0 : index
    %0 = vector.load %arg1[%c0, %c0_0, %c0_1] : memref<2x8x32xf32, #tpu.memory_space<vmem>>, vector<2x8x32xf32>
    %1 = vector.shape_cast %0 : vector<2x8x32xf32> to vector<16x32xf32>
    %c0_2 = arith.constant 0 : index
    %c0_3 = arith.constant 0 : index
    %c0_4 = arith.constant 0 : index
    %2 = vector.load %arg2[%c0_2, %c0_3, %c0_4] : memref<2x8x16xf32, #tpu.memory_space<vmem>>, vector<2x8x16xf32>
    %3 = vector.shape_cast %2 : vector<2x8x16xf32> to vector<16x16xf32>
    %4 = tpu.concatenate %3, %3 in 1 : vector<16x16xf32>, vector<16x16xf32> -> vector<16x32xf32>
    %c0_5 = arith.constant 0 : index
    %c0_6 = arith.constant 0 : index
    %c0_7 = arith.constant 0 : index
    %5 = vector.load %arg3[%c0_5, %c0_6, %c0_7] : memref<2x8x16xf32, #tpu.memory_space<vmem>>, vector<2x8x16xf32>
    %6 = vector.shape_cast %5 : vector<2x8x16xf32> to vector<16x16xf32>
    %7 = tpu.concatenate %6, %6 in 1 : vector<16x16xf32>, vector<16x16xf32> -> vector<16x32xf32>
    %c0_8 = arith.constant 0 : index
    %c0_9 = arith.constant 0 : index
    %8 = vector.load %arg7[%c0_8, %c0_9] : memref<1x32xf32, #tpu.memory_space<vmem>>, vector<1x32xf32>
    %c0_10 = arith.constant 0 : index
    %c0_11 = arith.constant 0 : index
    %9 = vector.load %arg8[%c0_10, %c0_11] : memref<1x32xf32, #tpu.memory_space<vmem>>, vector<1x32xf32>
    %cst = arith.constant dense<0.000000e+00> : vector<16xf32>
    %10 = vector.multi_reduction <add>, %1, %cst [1] : vector<16x32xf32> to vector<16xf32>
    %11 = vector.shape_cast %10 : vector<16xf32> to vector<16x1xf32>
    %cst_12 = arith.constant 3.200000e+01 : f32
    %12 = vector.broadcast %cst_12 : f32 to vector<16x1xf32>
    %13 = arith.divf %11, %12 : vector<16x1xf32>
    %14 = vector.broadcast %13 : vector<16x1xf32> to vector<16x32xf32>
    %15 = arith.subf %1, %14 : vector<16x32xf32>
    %16 = vector.broadcast %13 : vector<16x1xf32> to vector<16x32xf32>
    %17 = arith.subf %1, %16 : vector<16x32xf32>
    %18 = arith.mulf %15, %17 : vector<16x32xf32>
    %cst_13 = arith.constant dense<0.000000e+00> : vector<16xf32>
    %19 = vector.multi_reduction <add>, %18, %cst_13 [1] : vector<16x32xf32> to vector<16xf32>
    %20 = vector.shape_cast %19 : vector<16xf32> to vector<16x1xf32>
    %cst_14 = arith.constant 3.200000e+01 : f32
    %21 = vector.broadcast %cst_14 : f32 to vector<16x1xf32>
    %22 = arith.divf %20, %21 : vector<16x1xf32>
    %23 = vector.broadcast %13 : vector<16x1xf32> to vector<16x32xf32>
    %24 = arith.subf %1, %23 : vector<16x32xf32>
    %cst_15 = arith.constant 9.99999974E-6 : f32
    %25 = vector.broadcast %cst_15 : f32 to vector<16x1xf32>
    %26 = arith.addf %22, %25 : vector<16x1xf32>
    %27 = math.rsqrt %26 : vector<16x1xf32>
    %28 = vector.broadcast %27 : vector<16x1xf32> to vector<16x32xf32>
    %29 = arith.mulf %24, %28 : vector<16x32xf32>
    %30 = vector.broadcast %8 : vector<1x32xf32> to vector<16x32xf32>
    %31 = arith.mulf %29, %30 : vector<16x32xf32>
    %32 = vector.broadcast %9 : vector<1x32xf32> to vector<16x32xf32>
    %33 = arith.addf %31, %32 : vector<16x32xf32>
    %34 = arith.truncf %33 : vector<16x32xf32> to vector<16x32xbf16>
    %c0_16 = arith.constant 0 : index
    %c0_17 = arith.constant 0 : index
    %35 = vector.load %arg9[%c0_16, %c0_17] : memref<32x96xbf16, #tpu.memory_space<vmem>>, vector<32x96xbf16>
    %cst_18 = arith.constant dense<0.000000e+00> : vector<16x96xf32>
    %36 = tpu.matmul %34, %35, %cst_18 {dimension_numbers = #tpu.dot_dimension_numbers<[1], [0], [0], [1], [0, 0, 1, 1], [], []>} : vector<16x32xbf16>, vector<32x96xbf16>, vector<16x96xf32> -> vector<16x96xf32>
    %c0_19 = arith.constant 0 : index
    %c0_20 = arith.constant 0 : index
    %37 = vector.load %arg10[%c0_19, %c0_20] : memref<1x96xf32, #tpu.memory_space<vmem>>, vector<1x96xf32>
    %38 = vector.broadcast %37 : vector<1x96xf32> to vector<16x96xf32>
    %39 = arith.addf %36, %38 : vector<16x96xf32>
    %40 = vector.extract_strided_slice %39 {offsets = [0, 0], sizes = [16, 32], strides = [1, 1]} : vector<16x96xf32> to vector<16x32xf32>
    %41 = vector.extract_strided_slice %39 {offsets = [0, 32], sizes = [16, 32], strides = [1, 1]} : vector<16x96xf32> to vector<16x32xf32>
    %42 = vector.extract_strided_slice %39 {offsets = [0, 64], sizes = [16, 32], strides = [1, 1]} : vector<16x96xf32> to vector<16x32xf32>
    %43 = tpu.iota {dimensions = array<i32: 1>} : vector<16x32xi32>
    %c8_i32 = arith.constant 8 : i32
    %c0_i32 = arith.constant 0 : i32
    %44 = arith.cmpi eq, %c8_i32, %c0_i32 : i32
    %c1_i32 = arith.constant 1 : i32
    %45 = arith.select %44, %c1_i32, %c8_i32 : i32
    %46 = vector.broadcast %45 : i32 to vector<16x32xi32>
    %47 = arith.remsi %43, %46 : vector<16x32xi32>
    %c0_i32_21 = arith.constant 0 : i32
    %48 = vector.broadcast %c0_i32_21 : i32 to vector<16x32xi32>
    %49 = arith.cmpi ne, %47, %48 : vector<16x32xi32>
    %c0_i32_22 = arith.constant 0 : i32
    %50 = vector.broadcast %c0_i32_22 : i32 to vector<16x32xi32>
    %51 = arith.cmpi slt, %47, %50 : vector<16x32xi32>
    %c0_i32_23 = arith.constant 0 : i32
    %52 = arith.cmpi slt, %45, %c0_i32_23 : i32
    %53 = vector.broadcast %52 : i1 to vector<16x32xi1>
    %54 = vector.broadcast %53 : vector<16x32xi1> to vector<16x32xi1>
    %55 = arith.xori %51, %54 : vector<16x32xi1>
    %56 = arith.andi %55, %49 : vector<16x32xi1>
    %57 = vector.broadcast %45 : i32 to vector<16x32xi32>
    %58 = arith.addi %47, %57 : vector<16x32xi32>
    %59 = arith.select %56, %58, %47 : vector<16x32xi1>, vector<16x32xi32>
    %c4_i32 = arith.constant 4 : i32
    %60 = vector.broadcast %c4_i32 : i32 to vector<16x32xi32>
    %61 = arith.cmpi slt, %59, %60 : vector<16x32xi32>
    %62 = arith.mulf %40, %4 : vector<16x32xf32>
    %63 = vector.extract_strided_slice %40 {offsets = [0, 28], sizes = [16, 4], strides = [1, 1]} : vector<16x32xf32> to vector<16x4xf32>
    %64 = vector.extract_strided_slice %40 {offsets = [0, 0], sizes = [16, 28], strides = [1, 1]} : vector<16x32xf32> to vector<16x28xf32>
    %65 = tpu.concatenate %63, %64 in 1 : vector<16x4xf32>, vector<16x28xf32> -> vector<16x32xf32>
    %66 = vector.extract_strided_slice %40 {offsets = [0, 4], sizes = [16, 28], strides = [1, 1]} : vector<16x32xf32> to vector<16x28xf32>
    %67 = vector.extract_strided_slice %40 {offsets = [0, 0], sizes = [16, 4], strides = [1, 1]} : vector<16x32xf32> to vector<16x4xf32>
    %68 = tpu.concatenate %66, %67 in 1 : vector<16x28xf32>, vector<16x4xf32> -> vector<16x32xf32>
    %cst_24 = arith.constant 0.000000e+00 : f32
    %69 = vector.broadcast %cst_24 : f32 to vector<16x32xf32>
    %70 = arith.subf %69, %68 : vector<16x32xf32>
    %71 = arith.select %61, %70, %65 : vector<16x32xi1>, vector<16x32xf32>
    %72 = arith.mulf %71, %7 : vector<16x32xf32>
    %73 = arith.addf %62, %72 : vector<16x32xf32>
    %74 = arith.mulf %41, %4 : vector<16x32xf32>
    %75 = vector.extract_strided_slice %41 {offsets = [0, 28], sizes = [16, 4], strides = [1, 1]} : vector<16x32xf32> to vector<16x4xf32>
    %76 = vector.extract_strided_slice %41 {offsets = [0, 0], sizes = [16, 28], strides = [1, 1]} : vector<16x32xf32> to vector<16x28xf32>
    %77 = tpu.concatenate %75, %76 in 1 : vector<16x4xf32>, vector<16x28xf32> -> vector<16x32xf32>
    %78 = vector.extract_strided_slice %41 {offsets = [0, 4], sizes = [16, 28], strides = [1, 1]} : vector<16x32xf32> to vector<16x28xf32>
    %79 = vector.extract_strided_slice %41 {offsets = [0, 0], sizes = [16, 4], strides = [1, 1]} : vector<16x32xf32> to vector<16x4xf32>
    %80 = tpu.concatenate %78, %79 in 1 : vector<16x28xf32>, vector<16x4xf32> -> vector<16x32xf32>
    %cst_25 = arith.constant 0.000000e+00 : f32
    %81 = vector.broadcast %cst_25 : f32 to vector<16x32xf32>
    %82 = arith.subf %81, %80 : vector<16x32xf32>
    %83 = arith.select %61, %82, %77 : vector<16x32xi1>, vector<16x32xf32>
    %84 = arith.mulf %83, %7 : vector<16x32xf32>
    %85 = arith.addf %74, %84 : vector<16x32xf32>
    %86 = vector.shape_cast %85 : vector<16x32xf32> to vector<2x8x32xf32>
    %c0_26 = arith.constant 0 : index
    %c0_27 = arith.constant 0 : index
    %c0_28 = arith.constant 0 : index
    %87 = vector.load %arg20[%c0_26, %c0_27, %c0_28] : memref<2x8x32xf32, #tpu.memory_space<vmem>>, vector<2x8x32xf32>
    tpu.vector_store %arg20[%c0_26, %c0_27, %c0_28], %86 {strides = array<i32>} : memref<2x8x32xf32, #tpu.memory_space<vmem>>, vector<2x8x32xf32>,
    %88 = vector.shape_cast %42 : vector<16x32xf32> to vector<2x8x32xf32>
    %c0_29 = arith.constant 0 : index
    %c0_30 = arith.constant 0 : index
    %c0_31 = arith.constant 0 : index
    %89 = vector.load %arg21[%c0_29, %c0_30, %c0_31] : memref<2x8x32xf32, #tpu.memory_space<vmem>>, vector<2x8x32xf32>
    tpu.vector_store %arg21[%c0_29, %c0_30, %c0_31], %88 {strides = array<i32>} : memref<2x8x32xf32, #tpu.memory_space<vmem>>, vector<2x8x32xf32>,
    %cst_32 = arith.constant 2.500000e-01 : f32
    %90 = vector.broadcast %cst_32 : f32 to vector<16x32xf32>
    %91 = arith.mulf %73, %90 : vector<16x32xf32>
    %92 = vector.shape_cast %91 : vector<16x32xf32> to vector<2x8x2x16xf32>
    %93 = tpu.transpose %92, [0, 2, 1, 3] : vector<2x8x2x16xf32> -> vector<2x2x8x16xf32>
    %94 = vector.shape_cast %93 : vector<2x2x8x16xf32> to vector<4x8x16xf32>
    %95 = arith.truncf %94 : vector<4x8x16xf32> to vector<4x8x16xbf16>
    %96 = vector.shape_cast %85 : vector<16x32xf32> to vector<2x8x2x16xf32>
    %97 = tpu.transpose %96, [0, 2, 1, 3] : vector<2x8x2x16xf32> -> vector<2x2x8x16xf32>
    %98 = vector.shape_cast %97 : vector<2x2x8x16xf32> to vector<4x8x16xf32>
    %99 = arith.truncf %98 : vector<4x8x16xf32> to vector<4x8x16xbf16>
    %100 = vector.shape_cast %42 : vector<16x32xf32> to vector<2x8x2x16xf32>
    %101 = tpu.transpose %100, [0, 2, 1, 3] : vector<2x8x2x16xf32> -> vector<2x2x8x16xf32>
    %102 = vector.shape_cast %101 : vector<2x2x8x16xf32> to vector<4x8x16xf32>
    %103 = arith.truncf %102 : vector<4x8x16xf32> to vector<4x8x16xbf16>
    %c0_33 = arith.constant 0 : index
    %c0_34 = arith.constant 0 : index
    %c0_35 = arith.constant 0 : index
    %c0_36 = arith.constant 0 : index
    %104 = vector.load %arg5[%c0_33, %c0_34, %c0_35, %c0_36] : memref<2x2x8x16xbf16, #tpu.memory_space<vmem>>, vector<2x2x8x16xbf16>
    %105 = vector.shape_cast %104 : vector<2x2x8x16xbf16> to vector<4x8x16xbf16>
    %c0_37 = arith.constant 0 : index
    %c0_38 = arith.constant 0 : index
    %c0_39 = arith.constant 0 : index
    %c0_40 = arith.constant 0 : index
    %106 = vector.load %arg6[%c0_37, %c0_38, %c0_39, %c0_40] : memref<2x2x8x16xbf16, #tpu.memory_space<vmem>>, vector<2x2x8x16xbf16>
    %107 = vector.shape_cast %106 : vector<2x2x8x16xbf16> to vector<4x8x16xbf16>
    "tpu.trace_start"() <{level = 10 : i32, message = "gqd,gkd->gqk"}> : () -> ()
    %cst_41 = arith.constant dense<0.000000e+00> : vector<4x8x8xf32>
    %108 = tpu.matmul %95, %105, %cst_41 {dimension_numbers = #tpu.dot_dimension_numbers<[2], [2], [1], [1], [0, 0, 0, 1, 1, 1], [0], [0]>} : vector<4x8x16xbf16>, vector<4x8x16xbf16>, vector<4x8x8xf32> -> vector<4x8x8xf32>
    %cst_42 = arith.constant dense<0.000000e+00> : vector<4x8x8xf32>
    %109 = tpu.matmul %95, %99, %cst_42 {dimension_numbers = #tpu.dot_dimension_numbers<[2], [2], [1], [1], [0, 0, 0, 1, 1, 1], [0], [0]>} : vector<4x8x16xbf16>, vector<4x8x16xbf16>, vector<4x8x8xf32> -> vector<4x8x8xf32>
    "tpu.trace_stop"() : () -> ()
    %110 = tpu.concatenate %108, %109 in 2 : vector<4x8x8xf32>, vector<4x8x8xf32> -> vector<4x8x16xf32>
    %111 = vector.shape_cast %110 : vector<4x8x16xf32> to vector<2x2x8x16xf32>
    %c0_43 = arith.constant 0 : index
    %c0_44 = arith.constant 0 : index
    %c0_45 = arith.constant 0 : index
    %112 = vector.load %arg4[%c0_43, %c0_44, %c0_45] : memref<2x8x16xi8, #tpu.memory_space<vmem>>, vector<2x8x16xi8>
    %c0_i8 = arith.constant 0 : i8
    %113 = vector.broadcast %c0_i8 : i8 to vector<2x8x16xi8>
    %114 = arith.cmpi ne, %112, %113 : vector<2x8x16xi8>
    %115 = vector.shape_cast %114 : vector<2x8x16xi1> to vector<2x1x8x16xi1>
    %cst_46 = arith.constant -2.000000e+04 : f32
    %116 = vector.shape_cast %115 : vector<2x1x8x16xi1> to vector<2x1x8x16xi1>
    %117 = vector.broadcast %116 : vector<2x1x8x16xi1> to vector<2x2x8x16xi1>
    %118 = vector.broadcast %cst_46 : f32 to vector<2x2x8x16xf32>
    %119 = arith.select %117, %118, %111 : vector<2x2x8x16xi1>, vector<2x2x8x16xf32>
    %cst_47 = arith.constant dense<0xFF800000> : vector<2x2x8xf32>
    %120 = vector.multi_reduction <maximumf>, %119, %cst_47 [3] : vector<2x2x8x16xf32> to vector<2x2x8xf32>
    %121 = vector.shape_cast %120 : vector<2x2x8xf32> to vector<2x2x8x1xf32>
    %122 = vector.broadcast %121 : vector<2x2x8x1xf32> to vector<2x2x8x16xf32>
    %123 = arith.subf %119, %122 : vector<2x2x8x16xf32>
    %124 = math.exp %123 : vector<2x2x8x16xf32>
    %cst_48 = arith.constant dense<0.000000e+00> : vector<2x2x8xf32>
    %125 = vector.multi_reduction <add>, %124, %cst_48 [3] : vector<2x2x8x16xf32> to vector<2x2x8xf32>
    %126 = vector.shape_cast %125 : vector<2x2x8xf32> to vector<2x2x8x1xf32>
    %127 = tpu.reciprocal %126 {approx = true} : vector<2x2x8x1xf32> -> vector<2x2x8x1xf32>
    %128 = vector.broadcast %127 : vector<2x2x8x1xf32> to vector<2x2x8x16xf32>
    %129 = arith.mulf %124, %128 : vector<2x2x8x16xf32>
    %130 = vector.shape_cast %129 : vector<2x2x8x16xf32> to vector<4x8x16xf32>
    %131 = vector.extract_strided_slice %130 {offsets = [0, 0, 0], sizes = [4, 8, 8], strides = [1, 1, 1]} : vector<4x8x16xf32> to vector<4x8x8xf32>
    %132 = arith.truncf %131 : vector<4x8x8xf32> to vector<4x8x8xbf16>
    "tpu.trace_start"() <{level = 10 : i32, message = "gqk,gkd->gqd"}> : () -> ()
    %cst_49 = arith.constant dense<0.000000e+00> : vector<4x8x16xf32>
    %133 = tpu.matmul %132, %107, %cst_49 {dimension_numbers = #tpu.dot_dimension_numbers<[2], [1], [1], [2], [0, 0, 0, 1, 1, 2], [0], [0]>} : vector<4x8x8xbf16>, vector<4x8x16xbf16>, vector<4x8x16xf32> -> vector<4x8x16xf32>
    "tpu.trace_stop"() : () -> ()
    %134 = vector.extract_strided_slice %130 {offsets = [0, 0, 8], sizes = [4, 8, 8], strides = [1, 1, 1]} : vector<4x8x16xf32> to vector<4x8x8xf32>
    %135 = arith.truncf %134 : vector<4x8x8xf32> to vector<4x8x8xbf16>
    "tpu.trace_start"() <{level = 10 : i32, message = "gqk,gkd->gqd"}> : () -> ()
    %cst_50 = arith.constant dense<0.000000e+00> : vector<4x8x16xf32>
    %136 = tpu.matmul %135, %103, %cst_50 {dimension_numbers = #tpu.dot_dimension_numbers<[2], [1], [1], [2], [0, 0, 0, 1, 1, 2], [0], [0]>} : vector<4x8x8xbf16>, vector<4x8x16xbf16>, vector<4x8x16xf32> -> vector<4x8x16xf32>
    "tpu.trace_stop"() : () -> ()
    %137 = arith.addf %133, %136 : vector<4x8x16xf32>
    %138 = vector.shape_cast %137 : vector<4x8x16xf32> to vector<2x2x8x16xf32>
    %139 = tpu.transpose %138, [0, 2, 1, 3] : vector<2x2x8x16xf32> -> vector<2x8x2x16xf32>
    %140 = vector.shape_cast %139 : vector<2x8x2x16xf32> to vector<16x32xf32>
    %141 = arith.truncf %140 : vector<16x32xf32> to vector<16x32xbf16>
    %c0_51 = arith.constant 0 : index
    %c0_52 = arith.constant 0 : index
    %142 = vector.load %arg11[%c0_51, %c0_52] : memref<32x32xbf16, #tpu.memory_space<vmem>>, vector<32x32xbf16>
    %cst_53 = arith.constant dense<0.000000e+00> : vector<16x32xf32>
    %143 = tpu.matmul %141, %142, %cst_53 {dimension_numbers = #tpu.dot_dimension_numbers<[1], [0], [0], [1], [0, 0, 1, 1], [], []>} : vector<16x32xbf16>, vector<32x32xbf16>, vector<16x32xf32> -> vector<16x32xf32>
    %c0_54 = arith.constant 0 : index
    %c0_55 = arith.constant 0 : index
    %144 = vector.load %arg12[%c0_54, %c0_55] : memref<1x32xf32, #tpu.memory_space<vmem>>, vector<1x32xf32>
    %145 = vector.broadcast %144 : vector<1x32xf32> to vector<16x32xf32>
    %146 = arith.addf %143, %145 : vector<16x32xf32>
    %cst_56 = arith.constant 7.48331499 : f32
    %147 = vector.broadcast %cst_56 : f32 to vector<16x32xf32>
    %148 = arith.mulf %33, %147 : vector<16x32xf32>
    %149 = arith.addf %148, %146 : vector<16x32xf32>
    %c0_57 = arith.constant 0 : index
    %c0_58 = arith.constant 0 : index
    %150 = vector.load %arg13[%c0_57, %c0_58] : memref<1x32xf32, #tpu.memory_space<vmem>>, vector<1x32xf32>
    %c0_59 = arith.constant 0 : index
    %c0_60 = arith.constant 0 : index
    %151 = vector.load %arg14[%c0_59, %c0_60] : memref<1x32xf32, #tpu.memory_space<vmem>>, vector<1x32xf32>
    %cst_61 = arith.constant dense<0.000000e+00> : vector<16xf32>
    %152 = vector.multi_reduction <add>, %149, %cst_61 [1] : vector<16x32xf32> to vector<16xf32>
    %153 = vector.shape_cast %152 : vector<16xf32> to vector<16x1xf32>
    %cst_62 = arith.constant 3.200000e+01 : f32
    %154 = vector.broadcast %cst_62 : f32 to vector<16x1xf32>
    %155 = arith.divf %153, %154 : vector<16x1xf32>
    %156 = vector.broadcast %155 : vector<16x1xf32> to vector<16x32xf32>
    %157 = arith.subf %149, %156 : vector<16x32xf32>
    %158 = vector.broadcast %155 : vector<16x1xf32> to vector<16x32xf32>
    %159 = arith.subf %149, %158 : vector<16x32xf32>
    %160 = arith.mulf %157, %159 : vector<16x32xf32>
    %cst_63 = arith.constant dense<0.000000e+00> : vector<16xf32>
    %161 = vector.multi_reduction <add>, %160, %cst_63 [1] : vector<16x32xf32> to vector<16xf32>
    %162 = vector.shape_cast %161 : vector<16xf32> to vector<16x1xf32>
    %cst_64 = arith.constant 3.200000e+01 : f32
    %163 = vector.broadcast %cst_64 : f32 to vector<16x1xf32>
    %164 = arith.divf %162, %163 : vector<16x1xf32>
    %165 = vector.broadcast %155 : vector<16x1xf32> to vector<16x32xf32>
    %166 = arith.subf %149, %165 : vector<16x32xf32>
    %cst_65 = arith.constant 9.99999974E-6 : f32
    %167 = vector.broadcast %cst_65 : f32 to vector<16x1xf32>
    %168 = arith.addf %164, %167 : vector<16x1xf32>
    %169 = math.rsqrt %168 : vector<16x1xf32>
    %170 = vector.broadcast %169 : vector<16x1xf32> to vector<16x32xf32>
    %171 = arith.mulf %166, %170 : vector<16x32xf32>
    %172 = vector.broadcast %150 : vector<1x32xf32> to vector<16x32xf32>
    %173 = arith.mulf %171, %172 : vector<16x32xf32>
    %174 = vector.broadcast %151 : vector<1x32xf32> to vector<16x32xf32>
    %175 = arith.addf %173, %174 : vector<16x32xf32>
    %176 = arith.truncf %175 : vector<16x32xf32> to vector<16x32xbf16>
    %c0_66 = arith.constant 0 : index
    %c0_67 = arith.constant 0 : index
    %177 = vector.load %arg15[%c0_66, %c0_67] : memref<32x128xbf16, #tpu.memory_space<vmem>>, vector<32x128xbf16>
    %cst_68 = arith.constant dense<0.000000e+00> : vector<16x128xf32>
    %178 = tpu.matmul %176, %177, %cst_68 {dimension_numbers = #tpu.dot_dimension_numbers<[1], [0], [0], [1], [0, 0, 1, 1], [], []>} : vector<16x32xbf16>, vector<32x128xbf16>, vector<16x128xf32> -> vector<16x128xf32>
    %c0_69 = arith.constant 0 : index
    %c0_70 = arith.constant 0 : index
    %179 = vector.load %arg16[%c0_69, %c0_70] : memref<1x128xf32, #tpu.memory_space<vmem>>, vector<1x128xf32>
    %180 = vector.broadcast %179 : vector<1x128xf32> to vector<16x128xf32>
    %181 = arith.addf %178, %180 : vector<16x128xf32>
    %cst_71 = arith.constant 5.000000e-01 : f32
    %182 = vector.broadcast %cst_71 : f32 to vector<16x128xf32>
    %183 = arith.mulf %182, %181 : vector<16x128xf32>
    %cst_72 = arith.constant 0.797884583 : f32
    %184 = vector.broadcast %cst_72 : f32 to vector<16x128xf32>
    %185 = arith.mulf %184, %181 : vector<16x128xf32>
    %cst_73 = arith.constant 4.471500e-02 : f32
    %186 = vector.broadcast %cst_73 : f32 to vector<16x128xf32>
    %187 = arith.mulf %186, %181 : vector<16x128xf32>
    %188 = arith.mulf %187, %181 : vector<16x128xf32>
    %cst_74 = arith.constant 1.000000e+00 : f32
    %189 = vector.broadcast %cst_74 : f32 to vector<16x128xf32>
    %190 = arith.addf %189, %188 : vector<16x128xf32>
    %191 = arith.mulf %185, %190 : vector<16x128xf32>
    %192 = math.tanh %191 : vector<16x128xf32>
    %cst_75 = arith.constant 1.000000e+00 : f32
    %193 = vector.broadcast %cst_75 : f32 to vector<16x128xf32>
    %194 = arith.addf %193, %192 : vector<16x128xf32>
    %195 = arith.mulf %183, %194 : vector<16x128xf32>
    %196 = arith.truncf %195 : vector<16x128xf32> to vector<16x128xbf16>
    %c0_76 = arith.constant 0 : index
    %c0_77 = arith.constant 0 : index
    %197 = vector.load %arg17[%c0_76, %c0_77] : memref<128x32xbf16, #tpu.memory_space<vmem>>, vector<128x32xbf16>
    %cst_78 = arith.constant dense<0.000000e+00> : vector<16x32xf32>
    %198 = tpu.matmul %196, %197, %cst_78 {dimension_numbers = #tpu.dot_dimension_numbers<[1], [0], [0], [1], [0, 0, 1, 1], [], []>} : vector<16x128xbf16>, vector<128x32xbf16>, vector<16x32xf32> -> vector<16x32xf32>
    %c0_79 = arith.constant 0 : index
    %c0_80 = arith.constant 0 : index
    %199 = vector.load %arg18[%c0_79, %c0_80] : memref<1x32xf32, #tpu.memory_space<vmem>>, vector<1x32xf32>
    %200 = vector.broadcast %199 : vector<1x32xf32> to vector<16x32xf32>
    %201 = arith.addf %198, %200 : vector<16x32xf32>
    %cst_81 = arith.constant 7.48331499 : f32
    %202 = vector.broadcast %cst_81 : f32 to vector<16x32xf32>
    %203 = arith.mulf %175, %202 : vector<16x32xf32>
    %204 = arith.addf %203, %201 : vector<16x32xf32>
    %205 = vector.shape_cast %204 : vector<16x32xf32> to vector<2x8x32xf32>
    %c0_82 = arith.constant 0 : index
    %c0_83 = arith.constant 0 : index
    %c0_84 = arith.constant 0 : index
    %206 = vector.load %arg19[%c0_82, %c0_83, %c0_84] : memref<2x8x32xf32, #tpu.memory_space<vmem>>, vector<2x8x32xf32>
    tpu.vector_store %arg19[%c0_82, %c0_83, %c0_84], %205 {strides = array<i32>} : memref<2x8x32xf32, #tpu.memory_space<vmem>>, vector<2x8x32xf32>,
    return
  }
  func.func @transform_0(%arg0: i32) -> (i32, i32, i32) {
    %c0_i32 = arith.constant 0 : i32
    %c0_i32_0 = arith.constant 0 : i32
    %c0_i32_1 = arith.constant 0 : i32
    return %arg0, %c0_i32, %c0_i32_0 : i32, i32, i32
  }
  func.func @transform_1(%arg0: i32) -> (i32, i32, i32) {
    %c0_i32 = arith.constant 0 : i32
    %c0_i32_0 = arith.constant 0 : i32
    %c0_i32_1 = arith.constant 0 : i32
    return %arg0, %c0_i32, %c0_i32_0 : i32, i32, i32
  }
  func.func @transform_2(%arg0: i32) -> (i32, i32, i32) {
    %c0_i32 = arith.constant 0 : i32
    %c0_i32_0 = arith.constant 0 : i32
    %c0_i32_1 = arith.constant 0 : i32
    return %arg0, %c0_i32, %c0_i32_0 : i32, i32, i32
  }
  func.func @transform_3(%arg0: i32) -> (i32, i32, i32) {
    %c0_i32 = arith.constant 0 : i32
    %c0_i32_0 = arith.constant 0 : i32
    %c0_i32_1 = arith.constant 0 : i32
    return %arg0, %c0_i32, %c0_i32_0 : i32, i32, i32
  }
  func.func @transform_4(%arg0: i32) -> (i32, i32, i32, i32) {
    %c0_i32 = arith.constant 0 : i32
    %c0_i32_0 = arith.constant 0 : i32
    %c0_i32_1 = arith.constant 0 : i32
    %c0_i32_2 = arith.constant 0 : i32
    return %arg0, %c0_i32, %c0_i32_0, %c0_i32_1 : i32, i32, i32, i32
  }
  func.func @transform_5(%arg0: i32) -> (i32, i32, i32, i32) {
    %c0_i32 = arith.constant 0 : i32
    %c0_i32_0 = arith.constant 0 : i32
    %c0_i32_1 = arith.constant 0 : i32
    %c0_i32_2 = arith.constant 0 : i32
    return %arg0, %c0_i32, %c0_i32_0, %c0_i32_1 : i32, i32, i32, i32
  }
  func.func @transform_6(%arg0: i32) -> (i32, i32) {
    %c0_i32 = arith.constant 0 : i32
    %c0_i32_0 = arith.constant 0 : i32
    %c0_i32_1 = arith.constant 0 : i32
    return %c0_i32, %c0_i32_0 : i32, i32
  }
  func.func @transform_7(%arg0: i32) -> (i32, i32) {
    %c0_i32 = arith.constant 0 : i32
    %c0_i32_0 = arith.constant 0 : i32
    %c0_i32_1 = arith.constant 0 : i32
    return %c0_i32, %c0_i32_0 : i32, i32
  }
  func.func @transform_8(%arg0: i32) -> (i32, i32) {
    %c0_i32 = arith.constant 0 : i32
    %c0_i32_0 = arith.constant 0 : i32
    %c0_i32_1 = arith.constant 0 : i32
    return %c0_i32, %c0_i32_0 : i32, i32
  }
  func.func @transform_9(%arg0: i32) -> (i32, i32) {
    %c0_i32 = arith.constant 0 : i32
    %c0_i32_0 = arith.constant 0 : i32
    %c0_i32_1 = arith.constant 0 : i32
    return %c0_i32, %c0_i32_0 : i32, i32
  }
  func.func @transform_10(%arg0: i32) -> (i32, i32) {
    %c0_i32 = arith.constant 0 : i32
    %c0_i32_0 = arith.constant 0 : i32
    %c0_i32_1 = arith.constant 0 : i32
    return %c0_i32, %c0_i32_0 : i32, i32
  }
  func.func @transform_11(%arg0: i32) -> (i32, i32) {
    %c0_i32 = arith.constant 0 : i32
    %c0_i32_0 = arith.constant 0 : i32
    %c0_i32_1 = arith.constant 0 : i32
    return %c0_i32, %c0_i32_0 : i32, i32
  }
  func.func @transform_12(%arg0: i32) -> (i32, i32) {
    %c0_i32 = arith.constant 0 : i32
    %c0_i32_0 = arith.constant 0 : i32
    %c0_i32_1 = arith.constant 0 : i32
    return %c0_i32, %c0_i32_0 : i32, i32
  }
  func.func @transform_13(%arg0: i32) -> (i32, i32) {
    %c0_i32 = arith.constant 0 : i32
    %c0_i32_0 = arith.constant 0 : i32
    %c0_i32_1 = arith.constant 0 : i32
    return %c0_i32, %c0_i32_0 : i32, i32
  }
  func.func @transform_14(%arg0: i32) -> (i32, i32) {
    %c0_i32 = arith.constant 0 : i32
    %c0_i32_0 = arith.constant 0 : i32
    %c0_i32_1 = arith.constant 0 : i32
    return %c0_i32, %c0_i32_0 : i32, i32
  }
  func.func @transform_15(%arg0: i32) -> (i32, i32) {
    %c0_i32 = arith.constant 0 : i32
    %c0_i32_0 = arith.constant 0 : i32
    %c0_i32_1 = arith.constant 0 : i32
    return %c0_i32, %c0_i32_0 : i32, i32
  }
  func.func @transform_16(%arg0: i32) -> (i32, i32) {
    %c0_i32 = arith.constant 0 : i32
    %c0_i32_0 = arith.constant 0 : i32
    %c0_i32_1 = arith.constant 0 : i32
    return %c0_i32, %c0_i32_0 : i32, i32
  }
  func.func @transform_17(%arg0: i32) -> (i32, i32) {
    %c0_i32 = arith.constant 0 : i32
    %c0_i32_0 = arith.constant 0 : i32
    %c0_i32_1 = arith.constant 0 : i32
    return %c0_i32, %c0_i32_0 : i32, i32
  }
  func.func @transform_18(%arg0: i32) -> (i32, i32, i32) {
    %c0_i32 = arith.constant 0 : i32
    %c0_i32_0 = arith.constant 0 : i32
    %c0_i32_1 = arith.constant 0 : i32
    return %arg0, %c0_i32, %c0_i32_0 : i32, i32, i32
  }
  func.func @transform_19(%arg0: i32) -> (i32, i32, i32) {
    %c0_i32 = arith.constant 0 : i32
    %c0_i32_0 = arith.constant 0 : i32
    %c0_i32_1 = arith.constant 0 : i32
    return %arg0, %c0_i32, %c0_i32_0 : i32, i32, i32
  }
  func.func @transform_20(%arg0: i32) -> (i32, i32, i32) {
    %c0_i32 = arith.constant 0 : i32
    %c0_i32_0 = arith.constant 0 : i32
    %c0_i32_1 = arith.constant 0 : i32
    return %arg0, %c0_i32, %c0_i32_0 : i32, i32, i32
  }
}

</mosaic_0001>

<llo_original>
// kernel: tpu_custom_call.1
$region0: #{tpu_custom_call.1}
  #allocation0 [shape = 'u32[]', space=smem, size = 0x4, offset = 0x4, fixed_abs, tag = 'smem constant byte address 0x4 - core index']
  #allocation1 [shape = 'u32[144,128]{1,0:T(1,128)}', space=vmem, size = 0x12000, scoped, tag = 'internal scratch']
  %s0 = inlined_call_operand.vmem [shape: f32[2,8,32], index: 0, kind: input, shape index: {}]
  %s1 = inlined_call_operand.vmem [shape: f32[2,8,16], index: 1, kind: input, shape index: {}]
  %s2 = inlined_call_operand.vmem [shape: f32[2,8,16], index: 2, kind: input, shape index: {}]
  %s3 = inlined_call_operand.hbm [shape: s8[2,8,16], index: 3, kind: input, shape index: {}]
  %s4 = inlined_call_operand.vmem [shape: bf16[2,2,8,16], index: 4, kind: input, shape index: {}]
  %s5 = inlined_call_operand.vmem [shape: bf16[2,2,8,16], index: 5, kind: input, shape index: {}]
  %s6 = inlined_call_operand.vmem [shape: f32[1,32], index: 6, kind: input, shape index: {}]
  %s7 = inlined_call_operand.hbm [shape: f32[1,32], index: 7, kind: input, shape index: {}]
  %s8 = inlined_call_operand.hbm [shape: bf16[32,96], index: 8, kind: input, shape index: {}]
  %s9 = inlined_call_operand.hbm [shape: f32[1,96], index: 9, kind: input, shape index: {}]
  %s10 = inlined_call_operand.vmem [shape: bf16[32,32], index: 10, kind: input, shape index: {}]
  %s11 = inlined_call_operand.hbm [shape: f32[1,32], index: 11, kind: input, shape index: {}]
  %s12 = inlined_call_operand.hbm [shape: f32[1,32], index: 12, kind: input, shape index: {}]
  %s13 = inlined_call_operand.hbm [shape: f32[1,32], index: 13, kind: input, shape index: {}]
  %s14 = inlined_call_operand.vmem [shape: bf16[32,128], index: 14, kind: input, shape index: {}]
  %s15 = inlined_call_operand.vmem [shape: f32[1,128], index: 15, kind: input, shape index: {}]
  %s16 = inlined_call_operand.vmem [shape: bf16[128,32], index: 16, kind: input, shape index: {}]
  %s17 = inlined_call_operand.vmem [shape: f32[1,32], index: 17, kind: input, shape index: {}]
  %s18 = inlined_call_operand.hbm [shape: f32[2,8,32], index: 18, kind: output, shape index: {0}]
  %s19 = inlined_call_operand.hbm [shape: f32[2,8,32], index: 19, kind: output, shape index: {1}]
  %s20 = inlined_call_operand.hbm [shape: f32[2,8,32], index: 20, kind: output, shape index: {2}]
  %21 = xla_tuple %s18, %s19, %s20
  %s22 = sld [smem:[#allocation0]]
  $region126: #{tpu_custom_call.1} parent=0
    _
  %s24 = ssub.s32 1, %s22
  %s25 = scalar_select 0, %s24, %s22
  $region1: #{tpu_custom_call.1} parent=0
    #allocation2 [shape = 'u8[2048]{0}', space=vmem, size = 0x800, scoped, tag = 'input window, operand 3, single buffered']
    #allocation3 [shape = 's32[1]{0}', space=sflag, size = 0x4, scoped, tag = 'scoped memory for tpu_custom_call.1']
    #allocation4 [shape = 's32[1]{0}', space=sflag, size = 0x4, scoped, tag = 'scoped memory for tpu_custom_call.1']
    #allocation5 [shape = 'u8[512]{0}', space=vmem, size = 0x400, scoped, tag = 'input window, operand 7, single buffered']
    #allocation6 [shape = 's32[1]{0}', space=sflag, size = 0x4, scoped, tag = 'scoped memory for tpu_custom_call.1']
    #allocation7 [shape = 'u8[8192]{0}', space=vmem, size = 0x2000, scoped, tag = 'input window, operand 8, single buffered']
    #allocation8 [shape = 'u8[512]{0}', space=vmem, size = 0x400, scoped, tag = 'input window, operand 9, single buffered']
    #allocation9 [shape = 's32[1]{0}', space=sflag, size = 0x4, scoped, tag = 'scoped memory for tpu_custom_call.1']
    #allocation10 [shape = 'u8[512]{0}', space=vmem, size = 0x400, scoped, tag = 'input window, operand 11, single buffered']
    #allocation11 [shape = 'u8[512]{0}', space=vmem, size = 0x400, scoped, tag = 'input window, operand 12, single buffered']
    #allocation12 [shape = 's32[1]{0}', space=sflag, size = 0x4, scoped, tag = 'scoped memory for tpu_custom_call.1']
    #allocation13 [shape = 'u8[512]{0}', space=vmem, size = 0x400, scoped, tag = 'input window, operand 13, single buffered']
    #allocation14 [shape = 'u8[8192]{0}', space=vmem, size = 0x2000, scoped, tag = 'output window, operand 0, single buffered']
    #allocation15 [shape = 'u8[8192]{0}', space=vmem, size = 0x2000, scoped, tag = 'output window, operand 1, single buffered']
    #allocation16 [shape = 's32[1]{0}', space=sflag, size = 0x4, scoped, tag = 'scoped memory for tpu_custom_call.1']
    #allocation17 [shape = 'u8[8192]{0}', space=vmem, size = 0x2000, scoped, tag = 'output window, operand 2, single buffered']
    %26 = vsyncpa [#allocation3], 0
    %27 = vsyncpa [#allocation6], 0
    %28 = vsyncpa [#allocation9], 0
    %29 = vsyncpa [#allocation12], 0
    %30 = vsyncpa [#allocation4], 0
    %31 = vsyncpa [#allocation16], 0
    // Predicated region
    $region2: #{tpu_custom_call.1} parent=1 // pred_check
      _
    $region3: #{tpu_custom_call.1} parent=1 // pred_check_branch
      %33 = sbr.rel (0) target = $region5
    $region4: #{tpu_custom_call.1} parent=1 // pred_region
      _
    $region5: #{tpu_custom_call.1} parent=1 // pred_fallthru
      _
    // Predicated region
    $region6: #{tpu_custom_call.1} parent=1 // pred_check
      _
    $region7: #{tpu_custom_call.1} parent=1 // pred_check_branch
      %35 = sbr.rel (0) target = $region9
    $region8: #{tpu_custom_call.1} parent=1 // pred_region
      _
    $region9: #{tpu_custom_call.1} parent=1 // pred_fallthru
      _
    // Predicated region
    $region10: #{tpu_custom_call.1} parent=1 // pred_check
      _
    $region11: #{tpu_custom_call.1} parent=1 // pred_check_branch
      %37 = sbr.rel (0) target = $region13
    $region12: #{tpu_custom_call.1} parent=1 // pred_region
      _
    $region13: #{tpu_custom_call.1} parent=1 // pred_fallthru
      _
    // Predicated region
    $region14: #{tpu_custom_call.1} parent=1 // pred_check
      _
    $region15: #{tpu_custom_call.1} parent=1 // pred_check_branch
      %39 = sbr.rel (0) target = $region17
    $region16: #{tpu_custom_call.1} parent=1 // pred_region
      %s41 = ssub.s32 64, 64
      %42 = vsyncadd [#allocation3], %s41
      %s43 = sshll.u32 [#allocation2], 4
      %s44 = int_to_ptr.vmem [resolvable:$true] %s43
      %49 = dma.hbm_to_vmem [thread:$0]  %s3, 64, %s44, [#allocation3], 32, 32, 2
    $region17: #{tpu_custom_call.1} parent=1 // pred_fallthru
      _
    // Predicated region
    $region18: #{tpu_custom_call.1} parent=1 // pred_check
      _
    $region19: #{tpu_custom_call.1} parent=1 // pred_check_branch
      %51 = sbr.rel (0) target = $region21
    $region20: #{tpu_custom_call.1} parent=1 // pred_region
      _
    $region21: #{tpu_custom_call.1} parent=1 // pred_fallthru
      _
    // Predicated region
    $region22: #{tpu_custom_call.1} parent=1 // pred_check
      _
    $region23: #{tpu_custom_call.1} parent=1 // pred_check_branch
      %53 = sbr.rel (0) target = $region25
    $region24: #{tpu_custom_call.1} parent=1 // pred_region
      _
    $region25: #{tpu_custom_call.1} parent=1 // pred_fallthru
      _
    // Predicated region
    $region26: #{tpu_custom_call.1} parent=1 // pred_check
      _
    $region27: #{tpu_custom_call.1} parent=1 // pred_check_branch
      %55 = sbr.rel (0) target = $region29
    $region28: #{tpu_custom_call.1} parent=1 // pred_region
      _
    $region29: #{tpu_custom_call.1} parent=1 // pred_fallthru
      _
    // Predicated region
    $region30: #{tpu_custom_call.1} parent=1 // pred_check
      _
    $region31: #{tpu_custom_call.1} parent=1 // pred_check_branch
      %57 = sbr.rel (0) target = $region33
    $region32: #{tpu_custom_call.1} parent=1 // pred_region
      %s59 = ssub.s32 16, 16
      %60 = vsyncadd [#allocation6], %s59
      %s62 = sshll.u32 [#allocation5], 4
      %s63 = int_to_ptr.vmem [resolvable:$true] %s62
      %65 = dma.hbm_to_vmem [thread:$0]  %s7, 16, %s63, [#allocation6]
    $region33: #{tpu_custom_call.1} parent=1 // pred_fallthru
      _
    // Predicated region
    $region34: #{tpu_custom_call.1} parent=1 // pred_check
      _
    $region35: #{tpu_custom_call.1} parent=1 // pred_check_branch
      %67 = sbr.rel (0) target = $region37
    $region36: #{tpu_custom_call.1} parent=1 // pred_region
      %s69 = ssub.s32 256, 256
      %70 = vsyncadd [#allocation6], %s69
      %s71 = sshll.u32 [#allocation7], 4
      %s72 = int_to_ptr.vmem [resolvable:$true] %s71
      %77 = dma.hbm_to_vmem [thread:$0]  %s8, 256, %s72, [#allocation6], 64, 64, 4
    $region37: #{tpu_custom_call.1} parent=1 // pred_fallthru
      _
    // Predicated region
    $region38: #{tpu_custom_call.1} parent=1 // pred_check
      _
    $region39: #{tpu_custom_call.1} parent=1 // pred_check_branch
      %79 = sbr.rel (0) target = $region41
    $region40: #{tpu_custom_call.1} parent=1 // pred_region
      %s81 = ssub.s32 16, 16
      %82 = vsyncadd [#allocation9], %s81
      %s84 = sshll.u32 [#allocation8], 4
      %s85 = int_to_ptr.vmem [resolvable:$true] %s84
      %87 = dma.hbm_to_vmem [thread:$0]  %s9, 16, %s85, [#allocation9]
    $region41: #{tpu_custom_call.1} parent=1 // pred_fallthru
      _
    // Predicated region
    $region42: #{tpu_custom_call.1} parent=1 // pred_check
      _
    $region43: #{tpu_custom_call.1} parent=1 // pred_check_branch
      %89 = sbr.rel (0) target = $region45
    $region44: #{tpu_custom_call.1} parent=1 // pred_region
      _
    $region45: #{tpu_custom_call.1} parent=1 // pred_fallthru
      _
    // Predicated region
    $region46: #{tpu_custom_call.1} parent=1 // pred_check
      _
    $region47: #{tpu_custom_call.1} parent=1 // pred_check_branch
      %91 = sbr.rel (0) target = $region49
    $region48: #{tpu_custom_call.1} parent=1 // pred_region
      %s93 = ssub.s32 16, 16
      %94 = vsyncadd [#allocation9], %s93
      %s96 = sshll.u32 [#allocation10], 4
      %s97 = int_to_ptr.vmem [resolvable:$true] %s96
      %99 = dma.hbm_to_vmem [thread:$0]  %s11, 16, %s97, [#allocation9]
    $region49: #{tpu_custom_call.1} parent=1 // pred_fallthru
      _
    // Predicated region
    $region50: #{tpu_custom_call.1} parent=1 // pred_check
      _
    $region51: #{tpu_custom_call.1} parent=1 // pred_check_branch
      %101 = sbr.rel (0) target = $region53
    $region52: #{tpu_custom_call.1} parent=1 // pred_region
      %s103 = ssub.s32 16, 16
      %104 = vsyncadd [#allocation12], %s103
      %s106 = sshll.u32 [#allocation11], 4
      %s107 = int_to_ptr.vmem [resolvable:$true] %s106
      %109 = dma.hbm_to_vmem [thread:$0]  %s12, 16, %s107, [#allocation12]
    $region53: #{tpu_custom_call.1} parent=1 // pred_fallthru
      _
    // Predicated region
    $region54: #{tpu_custom_call.1} parent=1 // pred_check
      _
    $region55: #{tpu_custom_call.1} parent=1 // pred_check_branch
      %111 = sbr.rel (0) target = $region57
    $region56: #{tpu_custom_call.1} parent=1 // pred_region
      %s113 = ssub.s32 16, 16
      %114 = vsyncadd [#allocation12], %s113
      %s116 = sshll.u32 [#allocation13], 4
      %s117 = int_to_ptr.vmem [resolvable:$true] %s116
      %119 = dma.hbm_to_vmem [thread:$0]  %s13, 16, %s117, [#allocation12]
    $region57: #{tpu_custom_call.1} parent=1 // pred_fallthru
      _
    // Predicated region
    $region58: #{tpu_custom_call.1} parent=1 // pred_check
      _
    $region59: #{tpu_custom_call.1} parent=1 // pred_check_branch
      %121 = sbr.rel (0) target = $region61
    $region60: #{tpu_custom_call.1} parent=1 // pred_region
      _
    $region61: #{tpu_custom_call.1} parent=1 // pred_fallthru
      _
    // Predicated region
    $region62: #{tpu_custom_call.1} parent=1 // pred_check
      _
    $region63: #{tpu_custom_call.1} parent=1 // pred_check_branch
      %123 = sbr.rel (0) target = $region65
    $region64: #{tpu_custom_call.1} parent=1 // pred_region
      _
    $region65: #{tpu_custom_call.1} parent=1 // pred_fallthru
      _
    // Predicated region
    $region66: #{tpu_custom_call.1} parent=1 // pred_check
      _
    $region67: #{tpu_custom_call.1} parent=1 // pred_check_branch
      %125 = sbr.rel (0) target = $region69
    $region68: #{tpu_custom_call.1} parent=1 // pred_region
      _
    $region69: #{tpu_custom_call.1} parent=1 // pred_fallthru
      _
    // Predicated region
    $region70: #{tpu_custom_call.1} parent=1 // pred_check
      _
    $region71: #{tpu_custom_call.1} parent=1 // pred_check_branch
      %127 = sbr.rel (0) target = $region73
    $region72: #{tpu_custom_call.1} parent=1 // pred_region
      _
    $region73: #{tpu_custom_call.1} parent=1 // pred_fallthru
      _
    // Predicated region
    $region74: #{tpu_custom_call.1} parent=1 // pred_check
      _
    $region75: #{tpu_custom_call.1} parent=1 // pred_check_branch
      %129 = sbr.rel (0) target = $region77
    $region76: #{tpu_custom_call.1} parent=1 // pred_region
      %130 = dma.done [#allocation3], 64
    $region77: #{tpu_custom_call.1} parent=1 // pred_fallthru
      _
    // Predicated region
    $region78: #{tpu_custom_call.1} parent=1 // pred_check
      _
    $region79: #{tpu_custom_call.1} parent=1 // pred_check_branch
      %132 = sbr.rel (0) target = $region81
    $region80: #{tpu_custom_call.1} parent=1 // pred_region
      %133 = dma.done [#allocation6], 16
    $region81: #{tpu_custom_call.1} parent=1 // pred_fallthru
      _
    // Predicated region
    $region82: #{tpu_custom_call.1} parent=1 // pred_check
      _
    $region83: #{tpu_custom_call.1} parent=1 // pred_check_branch
      %135 = sbr.rel (0) target = $region85
    $region84: #{tpu_custom_call.1} parent=1 // pred_region
      %136 = dma.done [#allocation6], 256
    $region85: #{tpu_custom_call.1} parent=1 // pred_fallthru
      _
    // Predicated region
    $region86: #{tpu_custom_call.1} parent=1 // pred_check
      _
    $region87: #{tpu_custom_call.1} parent=1 // pred_check_branch
      %138 = sbr.rel (0) target = $region89
    $region88: #{tpu_custom_call.1} parent=1 // pred_region
      %139 = dma.done [#allocation9], 16
    $region89: #{tpu_custom_call.1} parent=1 // pred_fallthru
      _
    // Predicated region
    $region90: #{tpu_custom_call.1} parent=1 // pred_check
      _
    $region91: #{tpu_custom_call.1} parent=1 // pred_check_branch
      %141 = sbr.rel (0) target = $region93
    $region92: #{tpu_custom_call.1} parent=1 // pred_region
      %142 = dma.done [#allocation9], 16
    $region93: #{tpu_custom_call.1} parent=1 // pred_fallthru
      _
    // Predicated region
    $region94: #{tpu_custom_call.1} parent=1 // pred_check
      _
    $region95: #{tpu_custom_call.1} parent=1 // pred_check_branch
      %144 = sbr.rel (0) target = $region97
    $region96: #{tpu_custom_call.1} parent=1 // pred_region
      %145 = dma.done [#allocation12], 16
    $region97: #{tpu_custom_call.1} parent=1 // pred_fallthru
      _
    // Predicated region
    $region98: #{tpu_custom_call.1} parent=1 // pred_check
      _
    $region99: #{tpu_custom_call.1} parent=1 // pred_check_branch
      %147 = sbr.rel (0) target = $region101
    $region100: #{tpu_custom_call.1} parent=1 // pred_region
      %148 = dma.done [#allocation12], 16
    $region101: #{tpu_custom_call.1} parent=1 // pred_fallthru
      _
    %v152 = vld [vmem:[%s0] sm:$0xff]
    %v153 = vld [vmem:[%s0 + $0x8] sm:$0xff]
    %v154 = vld [vmem:[%s1] sm:$0xff]
    %v155 = vld [vmem:[%s1 + $0x8] sm:$0xff]
    %158 = vrot.lane.b32.xlu0 %v154, 16
    %v159 = vpop.permute.xlu0 %158
    %160 = vrot.lane.b32.xlu0 %v155, 16
    %v161 = vpop.permute.xlu0 %160
    %vm164 = vcmask 130048
    %v165 = vsel %vm164, %v154, %v159
    %v166 = vsel %vm164, %v155, %v161
    %v167 = vld [vmem:[%s2] sm:$0xff]
    %v168 = vld [vmem:[%s2 + $0x8] sm:$0xff]
    %171 = vrot.lane.b32.xlu0 %v167, 16
    %v172 = vpop.permute.xlu0 %171
    %173 = vrot.lane.b32.xlu0 %v168, 16
    %v174 = vpop.permute.xlu0 %173
    %v177 = vsel %vm164, %v167, %v172
    %v178 = vsel %vm164, %v168, %v174
    %v179 = vld [vmem:[%s6] sm:$0x1]
    %v180 = vld [vmem:[#allocation5] sm:$0x1]
    %vm181 = vcmask 261120
    %v182 = vsel %vm181, %v152, 0.0
    %183 = vadd.xlane.f32.xlu0 %v182
    %v184 = vpop.xlane.xlu0 %183
    %v185 = vsel %vm181, %v153, 0.0
    %186 = vadd.xlane.f32.xlu0 %v185
    %v187 = vpop.xlane.xlu0 %186
    %v188 = vrcp.pop 32.0
    %v189 = vmul.f32 %v184, %v188
    %v190 = vmul.f32 %v187, %v188
    %v191 = vsub.f32 %v152, %v189
    %v192 = vsub.f32 %v153, %v190
    %v193 = vmul.f32 %v191, %v191
    %v194 = vmul.f32 %v192, %v192
    %v195 = vsel %vm181, %v193, 0.0
    %196 = vadd.xlane.f32.xlu0 %v195
    %v197 = vpop.xlane.xlu0 %196
    %v198 = vsel %vm181, %v194, 0.0
    %199 = vadd.xlane.f32.xlu0 %v198
    %v200 = vpop.xlane.xlu0 %199
    %v201 = vmul.f32 %v197, %v188
    %v202 = vmul.f32 %v200, %v188
    %v203 = vadd.f32 %v201, 1e-05
    %v204 = vadd.f32 %v202, 1e-05
    %v205 = vrsqrt.pop %v203
    %v206 = vrsqrt.pop %v204
    %v207 = vmul.f32 %v191, %v205
    %v208 = vmul.f32 %v192, %v206
    %v210 = vlaneseq
    %v211 = vshrl.u32 %v210, 7
    %v212 = vsub.s32 0, %v211
    %v213 = vrot.slane %v179, %v212
    %v215 = vmul.f32 %v207, %v213
    %v216 = vmul.f32 %v208, %v213
    %v218 = vlaneseq
    %v219 = vshrl.u32 %v218, 7
    %v220 = vsub.s32 0, %v219
    %v221 = vrot.slane %v180, %v220
    %v223 = vadd.f32 %v215, %v221
    %v224 = vadd.f32 %v216, %v221
    %v225 = vpack.c.bf16 %v224, %v223
    %v226 = vld [vmem:[#allocation7] sm:$0xf]
    %v227 = vld [vmem:[#allocation7 + $0x4] sm:$0xf]
    %v228 = vld [vmem:[#allocation7 + $0x8] sm:$0xf]
    %v229 = vld [vmem:[#allocation7 + $0xc] sm:$0xf]
    %v230 = vld [vmem:[#allocation8] sm:$0x1]
    %v232 = vlaneseq
    %v233 = vshrl.u32 %v232, 7
    %v234 = vsub.s32 0, %v233
    %v235 = vrot.slane %v230, %v234
    %v241 = vunpack.c.l.b16 %v226
    %v242 = vunpack.c.l.b16 %v227
    %v243 = vunpack.c.l.b16 %v228
    %v244 = vunpack.c.l.b16 %v229
    %v245 = vpack.c.b16 %v242, %v241
    %v246 = vpack.c.b16 %v244, %v243
    %v250 = vsel %vm181, %v225, 0
    %252 = vmatprep.subr.bf16.mxu0 0
    %253 = vmatpush1.bf16.msra.mxu0 %v245
    %254 = vmatprep.subr.bf16.mxu0 0
    %255 = vmatpush1.bf16.msra.mxu0 %v246
    %256 = vmatprep.subr.bf16.mxu0 0
    %257 = vmatpush1.bf16.msra.mxu0 0
    %258 = vmatprep.subr.bf16.mxu0 0
    %259 = vmatpush1.bf16.msra.mxu0 0
    %260 = vmatprep.subr.bf16.mxu0 0
    %261 = vmatpush1.bf16.msra.mxu0 0
    %262 = vmatprep.subr.bf16.mxu0 0
    %263 = vmatpush1.bf16.msra.mxu0 0
    %264 = vmatprep.subr.bf16.mxu0 0
    %265 = vmatpush1.bf16.msra.mxu0 0
    %266 = vmatprep.subr.bf16.mxu0 0
    %267 = vmatpush1.bf16.msra.mxu0 0
    %268 = vmatprep.subr.bf16.mxu0 0
    %269 = vmatpush1.bf16.msra.mxu0 0
    %270 = vmatprep.subr.bf16.mxu0 0
    %271 = vmatpush1.bf16.msra.mxu0 0
    %272 = vmatprep.subr.bf16.mxu0 0
    %273 = vmatpush1.bf16.msra.mxu0 0
    %274 = vmatprep.subr.bf16.mxu0 0
    %275 = vmatpush1.bf16.msra.mxu0 0
    %276 = vmatprep.subr.bf16.mxu0 0
    %277 = vmatpush1.bf16.msra.mxu0 0
    %278 = vmatprep.subr.bf16.mxu0 0
    %279 = vmatpush1.bf16.msra.mxu0 0
    %280 = vmatprep.subr.bf16.mxu0 0
    %281 = vmatpush1.bf16.msra.mxu0 0
    %282 = vmatprep.subr.bf16.mxu0 0
    %283 = vmatpush1.bf16.msra.mxu0 0
    %284 = vmatprep.mubr.bf16.mxu0 0
    %285 = vmatmul.mubr.bf16.gmra.mrb[0].mxu0 %v250
    %v286 = vpop.f32.mrb[0].mxu0
    %v287 = vadd.f32 %v235, %v286
    %v288 = vpop.f32.mrb[0].mxu0
    %v289 = vpop.f32.mrb[0].mxu0
    %v290 = vadd.f32 %v235, %v289
    %v291 = vpop.f32.mrb[0].mxu0
    %292 = vdwg.mxu0
    %v293 = vlaneseq
    %v294 = vand.u32 %v293, 127
    %vm295 = vcmp.lt.s32.totalorder %v294, 0
    %v296 = vsub.s32 0, %v294
    %v297 = vsel %vm295, %v296, %v294
    %v298 = vshrl.u32 %v297, 3
    %v299 = vand.u32 %v297, 7
    %v300 = vsub.s32 0, %v299
    %v301 = vsel %vm295, %v300, %v299
    %vm302 = vcmp.ne.s32.totalorder %v301, 0
    %vm303 = vcmp.lt.s32.totalorder %v301, 0
    %vm304 = vmand %vm303, %vm302
    %v305 = vadd.s32 %v301, 8
    %v306 = vsel %vm304, %v305, %v301
    %vm307 = vcmp.lt.s32.totalorder %v306, 4
    %v308 = vmul.f32 %v287, %v165
    %v309 = vmul.f32 %v290, %v166
    %312 = vrot.lane.b32.xlu0 %v287, 100
    %v313 = vpop.permute.xlu0 %312
    %314 = vrot.lane.b32.xlu0 %v290, 100
    %v315 = vpop.permute.xlu0 %314
    %318 = vrot.lane.b32.xlu0 %v287, 4
    %v319 = vpop.permute.xlu0 %318
    %320 = vrot.lane.b32.xlu0 %v290, 4
    %v321 = vpop.permute.xlu0 %320
    %vm324 = vcmask 31744
    %v325 = vsel %vm324, %v313, %v319
    %v326 = vsel %vm324, %v315, %v321
    %327 = vrot.lane.b32.xlu0 %v287, 124
    %v328 = vpop.permute.xlu0 %327
    %329 = vrot.lane.b32.xlu0 %v290, 124
    %v330 = vpop.permute.xlu0 %329
    %333 = vrot.lane.b32.xlu0 %v287, 28
    %v334 = vpop.permute.xlu0 %333
    %335 = vrot.lane.b32.xlu0 %v290, 28
    %v336 = vpop.permute.xlu0 %335
    %vm339 = vcmask 228352
    %v340 = vsel %vm339, %v328, %v334
    %v341 = vsel %vm339, %v330, %v336
    %v342 = vsub.f32 0.0, %v340
    %v343 = vsub.f32 0.0, %v341
    %v344 = vsel %vm307, %v342, %v325
    %v345 = vsel %vm307, %v343, %v326
    %v346 = vmul.f32 %v344, %v177
    %v347 = vmul.f32 %v345, %v178
    %v348 = vadd.f32 %v308, %v346
    %v349 = vadd.f32 %v309, %v347
    %352 = vrot.lane.b32.xlu0 %v165, 32
    %v353 = vpop.permute.xlu0 %352
    %354 = vrot.lane.b32.xlu0 %v166, 32
    %v355 = vpop.permute.xlu0 %354
    %v358 = vmul.f32 %v287, %v353
    %v359 = vmul.f32 %v290, %v355
    %360 = vrot.lane.b32.xlu0 %v287, 68
    %v361 = vpop.permute.xlu0 %360
    %362 = vrot.lane.b32.xlu0 %v290, 68
    %v363 = vpop.permute.xlu0 %362
    %v366 = vsel %vm324, %v361, %v313
    %v367 = vsel %vm324, %v363, %v315
    %368 = vrot.lane.b32.xlu0 %v287, 92
    %v369 = vpop.permute.xlu0 %368
    %370 = vrot.lane.b32.xlu0 %v290, 92
    %v371 = vpop.permute.xlu0 %370
    %v374 = vsel %vm339, %v369, %v328
    %v375 = vsel %vm339, %v371, %v330
    %v376 = vsub.f32 0.0, %v374
    %v377 = vsub.f32 0.0, %v375
    %v378 = vsel %vm307, %v376, %v366
    %v379 = vsel %vm307, %v377, %v367
    %v380 = vmul.f32 %v378, %v177
    %v381 = vmul.f32 %v379, %v178
    %384 = vrot.lane.b32.xlu0 %v380, 32
    %v385 = vpop.permute.xlu0 %384
    %386 = vrot.lane.b32.xlu0 %v381, 32
    %v387 = vpop.permute.xlu0 %386
    %v390 = vadd.f32 %v358, %v385
    %v391 = vadd.f32 %v359, %v387
    %394 = vrot.lane.b32.xlu0 %v390, 96
    %v395 = vpop.permute.xlu0 %394
    %396 = vrot.lane.b32.xlu0 %v391, 96
    %v397 = vpop.permute.xlu0 %396
    %400 = vst.msk [vmem:[#allocation15] sm:$0xff] %vm181, %v395
    %401 = vst.msk [vmem:[#allocation15 + $0x8] sm:$0xff] %vm181, %v397
    %402 = vrot.lane.b32.xlu0 %v287, 64
    %v403 = vpop.permute.xlu0 %402
    %404 = vrot.lane.b32.xlu0 %v290, 64
    %v405 = vpop.permute.xlu0 %404
    %408 = vst.msk [vmem:[#allocation17] sm:$0xff] %vm181, %v403
    %409 = vst.msk [vmem:[#allocation17 + $0x8] sm:$0xff] %vm181, %v405
    %v410 = vmul.f32 %v348, 0.25
    %v411 = vmul.f32 %v349, 0.25
    %414 = vrot.lane.b32.xlu0 %v410, 112
    %v415 = vpop.permute.xlu0 %414
    %416 = vrot.lane.b32.xlu0 %v411, 112
    %v417 = vpop.permute.xlu0 %416
    %v420 = vcombine.high %v410, 0.0
    %v422 = vunpack.c.l.s4 1983009808
    %v423 = vunpack.c.0.s8 %v422
    %v424 = vlaneseq
    %v425 = vshrl.u32 %v424, 7
    %v426 = vsub.s32 %v423, %v425
    %v427 = vrot.slane %v410, %v426
    %v429 = vunpack.c.l.s4 1983009808
    %v430 = vunpack.c.0.s8 %v429
    %v431 = vlaneseq
    %v432 = vshrl.u32 %v431, 7
    %v433 = vsub.s32 %v430, %v432
    %v434 = vrot.slane %v420, %v433
    %v435 = vcombine.high %v415, 0.0
    %v437 = vunpack.c.l.s4 1983009808
    %v438 = vunpack.c.0.s8 %v437
    %v439 = vlaneseq
    %v440 = vshrl.u32 %v439, 7
    %v441 = vsub.s32 %v438, %v440
    %v442 = vrot.slane %v415, %v441
    %v444 = vunpack.c.l.s4 1983009808
    %v445 = vunpack.c.0.s8 %v444
    %v446 = vlaneseq
    %v447 = vshrl.u32 %v446, 7
    %v448 = vsub.s32 %v445, %v447
    %v449 = vrot.slane %v435, %v448
    %v450 = vcombine.low %v427, %v442
    %v451 = vcombine.high %v427, %v442
    %v453 = vunpack.c.l.s4 1934713408
    %v454 = vunpack.c.0.s8 %v453
    %v455 = vlaneseq
    %v456 = vshrl.u32 %v455, 7
    %v457 = vsub.s32 %v454, %v456
    %v458 = vrot.slane %v450, %v457
    %v460 = vunpack.c.l.s4 1934713408
    %v461 = vunpack.c.0.s8 %v460
    %v462 = vlaneseq
    %v463 = vshrl.u32 %v462, 7
    %v464 = vsub.s32 %v461, %v463
    %v465 = vrot.slane %v451, %v464
    %v466 = vcombine.low %v434, %v449
    %v467 = vcombine.high %v434, %v449
    %v469 = vunpack.c.l.s4 1934713408
    %v470 = vunpack.c.0.s8 %v469
    %v471 = vlaneseq
    %v472 = vshrl.u32 %v471, 7
    %v473 = vsub.s32 %v470, %v472
    %v474 = vrot.slane %v466, %v473
    %v476 = vunpack.c.l.s4 1934713408
    %v477 = vunpack.c.0.s8 %v476
    %v478 = vlaneseq
    %v479 = vshrl.u32 %v478, 7
    %v480 = vsub.s32 %v477, %v479
    %v481 = vrot.slane %v467, %v480
    %v482 = vcombine.high %v458, 0.0
    %v483 = vcombine.high %v465, 0.0
    %v484 = vcombine.high %v474, 0.0
    %v485 = vcombine.high %v481, 0.0
    %v486 = vcombine.high %v411, 0.0
    %v488 = vunpack.c.l.s4 1983009808
    %v489 = vunpack.c.0.s8 %v488
    %v490 = vlaneseq
    %v491 = vshrl.u32 %v490, 7
    %v492 = vsub.s32 %v489, %v491
    %v493 = vrot.slane %v411, %v492
    %v495 = vunpack.c.l.s4 1983009808
    %v496 = vunpack.c.0.s8 %v495
    %v497 = vlaneseq
    %v498 = vshrl.u32 %v497, 7
    %v499 = vsub.s32 %v496, %v498
    %v500 = vrot.slane %v486, %v499
    %v501 = vcombine.high %v417, 0.0
    %v503 = vunpack.c.l.s4 1983009808
    %v504 = vunpack.c.0.s8 %v503
    %v505 = vlaneseq
    %v506 = vshrl.u32 %v505, 7
    %v507 = vsub.s32 %v504, %v506
    %v508 = vrot.slane %v417, %v507
    %v510 = vunpack.c.l.s4 1983009808
    %v511 = vunpack.c.0.s8 %v510
    %v512 = vlaneseq
    %v513 = vshrl.u32 %v512, 7
    %v514 = vsub.s32 %v511, %v513
    %v515 = vrot.slane %v501, %v514
    %v516 = vcombine.low %v493, %v508
    %v517 = vcombine.high %v493, %v508
    %v519 = vunpack.c.l.s4 1934713408
    %v520 = vunpack.c.0.s8 %v519
    %v521 = vlaneseq
    %v522 = vshrl.u32 %v521, 7
    %v523 = vsub.s32 %v520, %v522
    %v524 = vrot.slane %v516, %v523
    %v526 = vunpack.c.l.s4 1934713408
    %v527 = vunpack.c.0.s8 %v526
    %v528 = vlaneseq
    %v529 = vshrl.u32 %v528, 7
    %v530 = vsub.s32 %v527, %v529
    %v531 = vrot.slane %v517, %v530
    %v532 = vcombine.low %v500, %v515
    %v533 = vcombine.high %v500, %v515
    %v535 = vunpack.c.l.s4 1934713408
    %v536 = vunpack.c.0.s8 %v535
    %v537 = vlaneseq
    %v538 = vshrl.u32 %v537, 7
    %v539 = vsub.s32 %v536, %v538
    %v540 = vrot.slane %v532, %v539
    %v542 = vunpack.c.l.s4 1934713408
    %v543 = vunpack.c.0.s8 %v542
    %v544 = vlaneseq
    %v545 = vshrl.u32 %v544, 7
    %v546 = vsub.s32 %v543, %v545
    %v547 = vrot.slane %v533, %v546
    %v548 = vcombine.high %v524, 0.0
    %v549 = vcombine.high %v531, 0.0
    %v550 = vcombine.high %v540, 0.0
    %v551 = vcombine.high %v547, 0.0
    %v552 = vcombine.low %v458, %v465
    %v554 = vunpack.c.l.s4 1983009808
    %v555 = vunpack.c.0.s8 %v554
    %v556 = vlaneseq
    %v557 = vshrl.u32 %v556, 7
    %v558 = vsub.s32 %v555, %v557
    %v559 = vrot.slane %v552, %v558
    %v560 = vcombine.low %v482, %v483
    %v562 = vunpack.c.l.s4 1983009808
    %v563 = vunpack.c.0.s8 %v562
    %v564 = vlaneseq
    %v565 = vshrl.u32 %v564, 7
    %v566 = vsub.s32 %v563, %v565
    %v567 = vrot.slane %v560, %v566
    %v568 = vcombine.low %v474, %v481
    %v570 = vunpack.c.l.s4 1983009808
    %v571 = vunpack.c.0.s8 %v570
    %v572 = vlaneseq
    %v573 = vshrl.u32 %v572, 7
    %v574 = vsub.s32 %v571, %v573
    %v575 = vrot.slane %v568, %v574
    %v576 = vcombine.low %v484, %v485
    %v578 = vunpack.c.l.s4 1983009808
    %v579 = vunpack.c.0.s8 %v578
    %v580 = vlaneseq
    %v581 = vshrl.u32 %v580, 7
    %v582 = vsub.s32 %v579, %v581
    %v583 = vrot.slane %v576, %v582
    %v584 = vcombine.low %v559, %v567
    %v586 = vunpack.c.l.s4 1934713408
    %v587 = vunpack.c.0.s8 %v586
    %v588 = vlaneseq
    %v589 = vshrl.u32 %v588, 7
    %v590 = vsub.s32 %v587, %v589
    %v591 = vrot.slane %v584, %v590
    %v592 = vcombine.low %v575, %v583
    %v594 = vunpack.c.l.s4 1934713408
    %v595 = vunpack.c.0.s8 %v594
    %v596 = vlaneseq
    %v597 = vshrl.u32 %v596, 7
    %v598 = vsub.s32 %v595, %v597
    %v599 = vrot.slane %v592, %v598
    %v600 = vcombine.low %v591, %v599
    %v601 = vcombine.high %v591, %v599
    %v602 = vcombine.low %v524, %v531
    %v604 = vunpack.c.l.s4 1983009808
    %v605 = vunpack.c.0.s8 %v604
    %v606 = vlaneseq
    %v607 = vshrl.u32 %v606, 7
    %v608 = vsub.s32 %v605, %v607
    %v609 = vrot.slane %v602, %v608
    %v610 = vcombine.low %v548, %v549
    %v612 = vunpack.c.l.s4 1983009808
    %v613 = vunpack.c.0.s8 %v612
    %v614 = vlaneseq
    %v615 = vshrl.u32 %v614, 7
    %v616 = vsub.s32 %v613, %v615
    %v617 = vrot.slane %v610, %v616
    %v618 = vcombine.low %v540, %v547
    %v620 = vunpack.c.l.s4 1983009808
    %v621 = vunpack.c.0.s8 %v620
    %v622 = vlaneseq
    %v623 = vshrl.u32 %v622, 7
    %v624 = vsub.s32 %v621, %v623
    %v625 = vrot.slane %v618, %v624
    %v626 = vcombine.low %v550, %v551
    %v628 = vunpack.c.l.s4 1983009808
    %v629 = vunpack.c.0.s8 %v628
    %v630 = vlaneseq
    %v631 = vshrl.u32 %v630, 7
    %v632 = vsub.s32 %v629, %v631
    %v633 = vrot.slane %v626, %v632
    %v634 = vcombine.low %v609, %v617
    %v636 = vunpack.c.l.s4 1934713408
    %v637 = vunpack.c.0.s8 %v636
    %v638 = vlaneseq
    %v639 = vshrl.u32 %v638, 7
    %v640 = vsub.s32 %v637, %v639
    %v641 = vrot.slane %v634, %v640
    %v642 = vcombine.low %v625, %v633
    %v644 = vunpack.c.l.s4 1934713408
    %v645 = vunpack.c.0.s8 %v644
    %v646 = vlaneseq
    %v647 = vshrl.u32 %v646, 7
    %v648 = vsub.s32 %v645, %v647
    %v649 = vrot.slane %v642, %v648
    %v650 = vcombine.low %v641, %v649
    %v651 = vcombine.high %v641, %v649
    %v652 = vpack.c.bf16 %v600, %v600
    %v653 = vpack.c.bf16 %v601, %v601
    %v654 = vpack.c.bf16 %v650, %v650
    %v655 = vpack.c.bf16 %v651, %v651
    %656 = vrot.lane.b32.xlu0 %v390, 112
    %v657 = vpop.permute.xlu0 %656
    %658 = vrot.lane.b32.xlu0 %v391, 112
    %v659 = vpop.permute.xlu0 %658
    %660 = vrot.lane.b32.xlu0 %v657, 96
    %v661 = vpop.permute.xlu0 %660
    %662 = vrot.lane.b32.xlu0 %v659, 96
    %v663 = vpop.permute.xlu0 %662
    %v666 = vcombine.high %v395, 0.0
    %v668 = vunpack.c.l.s4 1983009808
    %v669 = vunpack.c.0.s8 %v668
    %v670 = vlaneseq
    %v671 = vshrl.u32 %v670, 7
    %v672 = vsub.s32 %v669, %v671
    %v673 = vrot.slane %v395, %v672
    %v675 = vunpack.c.l.s4 1983009808
    %v676 = vunpack.c.0.s8 %v675
    %v677 = vlaneseq
    %v678 = vshrl.u32 %v677, 7
    %v679 = vsub.s32 %v676, %v678
    %v680 = vrot.slane %v666, %v679
    %v681 = vcombine.high %v661, 0.0
    %v683 = vunpack.c.l.s4 1983009808
    %v684 = vunpack.c.0.s8 %v683
    %v685 = vlaneseq
    %v686 = vshrl.u32 %v685, 7
    %v687 = vsub.s32 %v684, %v686
    %v688 = vrot.slane %v661, %v687
    %v690 = vunpack.c.l.s4 1983009808
    %v691 = vunpack.c.0.s8 %v690
    %v692 = vlaneseq
    %v693 = vshrl.u32 %v692, 7
    %v694 = vsub.s32 %v691, %v693
    %v695 = vrot.slane %v681, %v694
    %v696 = vcombine.low %v673, %v688
    %v697 = vcombine.high %v673, %v688
    %v699 = vunpack.c.l.s4 1934713408
    %v700 = vunpack.c.0.s8 %v699
    %v701 = vlaneseq
    %v702 = vshrl.u32 %v701, 7
    %v703 = vsub.s32 %v700, %v702
    %v704 = vrot.slane %v696, %v703
    %v706 = vunpack.c.l.s4 1934713408
    %v707 = vunpack.c.0.s8 %v706
    %v708 = vlaneseq
    %v709 = vshrl.u32 %v708, 7
    %v710 = vsub.s32 %v707, %v709
    %v711 = vrot.slane %v697, %v710
    %v712 = vcombine.low %v680, %v695
    %v713 = vcombine.high %v680, %v695
    %v715 = vunpack.c.l.s4 1934713408
    %v716 = vunpack.c.0.s8 %v715
    %v717 = vlaneseq
    %v718 = vshrl.u32 %v717, 7
    %v719 = vsub.s32 %v716, %v718
    %v720 = vrot.slane %v712, %v719
    %v722 = vunpack.c.l.s4 1934713408
    %v723 = vunpack.c.0.s8 %v722
    %v724 = vlaneseq
    %v725 = vshrl.u32 %v724, 7
    %v726 = vsub.s32 %v723, %v725
    %v727 = vrot.slane %v713, %v726
    %v728 = vcombine.high %v704, 0.0
    %v729 = vcombine.high %v711, 0.0
    %v730 = vcombine.high %v720, 0.0
    %v731 = vcombine.high %v727, 0.0
    %v732 = vcombine.high %v397, 0.0
    %v734 = vunpack.c.l.s4 1983009808
    %v735 = vunpack.c.0.s8 %v734
    %v736 = vlaneseq
    %v737 = vshrl.u32 %v736, 7
    %v738 = vsub.s32 %v735, %v737
    %v739 = vrot.slane %v397, %v738
    %v741 = vunpack.c.l.s4 1983009808
    %v742 = vunpack.c.0.s8 %v741
    %v743 = vlaneseq
    %v744 = vshrl.u32 %v743, 7
    %v745 = vsub.s32 %v742, %v744
    %v746 = vrot.slane %v732, %v745
    %v747 = vcombine.high %v663, 0.0
    %v749 = vunpack.c.l.s4 1983009808
    %v750 = vunpack.c.0.s8 %v749
    %v751 = vlaneseq
    %v752 = vshrl.u32 %v751, 7
    %v753 = vsub.s32 %v750, %v752
    %v754 = vrot.slane %v663, %v753
    %v756 = vunpack.c.l.s4 1983009808
    %v757 = vunpack.c.0.s8 %v756
    %v758 = vlaneseq
    %v759 = vshrl.u32 %v758, 7
    %v760 = vsub.s32 %v757, %v759
    %v761 = vrot.slane %v747, %v760
    %v762 = vcombine.low %v739, %v754
    %v763 = vcombine.high %v739, %v754
    %v765 = vunpack.c.l.s4 1934713408
    %v766 = vunpack.c.0.s8 %v765
    %v767 = vlaneseq
    %v768 = vshrl.u32 %v767, 7
    %v769 = vsub.s32 %v766, %v768
    %v770 = vrot.slane %v762, %v769
    %v772 = vunpack.c.l.s4 1934713408
    %v773 = vunpack.c.0.s8 %v772
    %v774 = vlaneseq
    %v775 = vshrl.u32 %v774, 7
    %v776 = vsub.s32 %v773, %v775
    %v777 = vrot.slane %v763, %v776
    %v778 = vcombine.low %v746, %v761
    %v779 = vcombine.high %v746, %v761
    %v781 = vunpack.c.l.s4 1934713408
    %v782 = vunpack.c.0.s8 %v781
    %v783 = vlaneseq
    %v784 = vshrl.u32 %v783, 7
    %v785 = vsub.s32 %v782, %v784
    %v786 = vrot.slane %v778, %v785
    %v788 = vunpack.c.l.s4 1934713408
    %v789 = vunpack.c.0.s8 %v788
    %v790 = vlaneseq
    %v791 = vshrl.u32 %v790, 7
    %v792 = vsub.s32 %v789, %v791
    %v793 = vrot.slane %v779, %v792
    %v794 = vcombine.high %v770, 0.0
    %v795 = vcombine.high %v777, 0.0
    %v796 = vcombine.high %v786, 0.0
    %v797 = vcombine.high %v793, 0.0
    %v798 = vcombine.low %v704, %v711
    %v800 = vunpack.c.l.s4 1983009808
    %v801 = vunpack.c.0.s8 %v800
    %v802 = vlaneseq
    %v803 = vshrl.u32 %v802, 7
    %v804 = vsub.s32 %v801, %v803
    %v805 = vrot.slane %v798, %v804
    %v806 = vcombine.low %v728, %v729
    %v808 = vunpack.c.l.s4 1983009808
    %v809 = vunpack.c.0.s8 %v808
    %v810 = vlaneseq
    %v811 = vshrl.u32 %v810, 7
    %v812 = vsub.s32 %v809, %v811
    %v813 = vrot.slane %v806, %v812
    %v814 = vcombine.low %v720, %v727
    %v816 = vunpack.c.l.s4 1983009808
    %v817 = vunpack.c.0.s8 %v816
    %v818 = vlaneseq
    %v819 = vshrl.u32 %v818, 7
    %v820 = vsub.s32 %v817, %v819
    %v821 = vrot.slane %v814, %v820
    %v822 = vcombine.low %v730, %v731
    %v824 = vunpack.c.l.s4 1983009808
    %v825 = vunpack.c.0.s8 %v824
    %v826 = vlaneseq
    %v827 = vshrl.u32 %v826, 7
    %v828 = vsub.s32 %v825, %v827
    %v829 = vrot.slane %v822, %v828
    %v830 = vcombine.low %v805, %v813
    %v832 = vunpack.c.l.s4 1934713408
    %v833 = vunpack.c.0.s8 %v832
    %v834 = vlaneseq
    %v835 = vshrl.u32 %v834, 7
    %v836 = vsub.s32 %v833, %v835
    %v837 = vrot.slane %v830, %v836
    %v838 = vcombine.low %v821, %v829
    %v840 = vunpack.c.l.s4 1934713408
    %v841 = vunpack.c.0.s8 %v840
    %v842 = vlaneseq
    %v843 = vshrl.u32 %v842, 7
    %v844 = vsub.s32 %v841, %v843
    %v845 = vrot.slane %v838, %v844
    %v846 = vcombine.low %v837, %v845
    %v847 = vcombine.high %v837, %v845
    %v848 = vcombine.low %v770, %v777
    %v850 = vunpack.c.l.s4 1983009808
    %v851 = vunpack.c.0.s8 %v850
    %v852 = vlaneseq
    %v853 = vshrl.u32 %v852, 7
    %v854 = vsub.s32 %v851, %v853
    %v855 = vrot.slane %v848, %v854
    %v856 = vcombine.low %v794, %v795
    %v858 = vunpack.c.l.s4 1983009808
    %v859 = vunpack.c.0.s8 %v858
    %v860 = vlaneseq
    %v861 = vshrl.u32 %v860, 7
    %v862 = vsub.s32 %v859, %v861
    %v863 = vrot.slane %v856, %v862
    %v864 = vcombine.low %v786, %v793
    %v866 = vunpack.c.l.s4 1983009808
    %v867 = vunpack.c.0.s8 %v866
    %v868 = vlaneseq
    %v869 = vshrl.u32 %v868, 7
    %v870 = vsub.s32 %v867, %v869
    %v871 = vrot.slane %v864, %v870
    %v872 = vcombine.low %v796, %v797
    %v874 = vunpack.c.l.s4 1983009808
    %v875 = vunpack.c.0.s8 %v874
    %v876 = vlaneseq
    %v877 = vshrl.u32 %v876, 7
    %v878 = vsub.s32 %v875, %v877
    %v879 = vrot.slane %v872, %v878
    %v880 = vcombine.low %v855, %v863
    %v882 = vunpack.c.l.s4 1934713408
    %v883 = vunpack.c.0.s8 %v882
    %v884 = vlaneseq
    %v885 = vshrl.u32 %v884, 7
    %v886 = vsub.s32 %v883, %v885
    %v887 = vrot.slane %v880, %v886
    %v888 = vcombine.low %v871, %v879
    %v890 = vunpack.c.l.s4 1934713408
    %v891 = vunpack.c.0.s8 %v890
    %v892 = vlaneseq
    %v893 = vshrl.u32 %v892, 7
    %v894 = vsub.s32 %v891, %v893
    %v895 = vrot.slane %v888, %v894
    %v896 = vcombine.low %v887, %v895
    %v897 = vcombine.high %v887, %v895
    %v898 = vpack.c.bf16 %v846, %v846
    %v899 = vpack.c.bf16 %v847, %v847
    %v900 = vpack.c.bf16 %v896, %v896
    %v901 = vpack.c.bf16 %v897, %v897
    %902 = vrot.lane.b32.xlu0 %v287, 112
    %v903 = vpop.permute.xlu0 %902
    %904 = vrot.lane.b32.xlu0 %v290, 112
    %v905 = vpop.permute.xlu0 %904
    %906 = vrot.lane.b32.xlu0 %v903, 64
    %v907 = vpop.permute.xlu0 %906
    %908 = vrot.lane.b32.xlu0 %v905, 64
    %v909 = vpop.permute.xlu0 %908
    %v912 = vcombine.high %v403, 0.0
    %v914 = vunpack.c.l.s4 1983009808
    %v915 = vunpack.c.0.s8 %v914
    %v916 = vlaneseq
    %v917 = vshrl.u32 %v916, 7
    %v918 = vsub.s32 %v915, %v917
    %v919 = vrot.slane %v403, %v918
    %v921 = vunpack.c.l.s4 1983009808
    %v922 = vunpack.c.0.s8 %v921
    %v923 = vlaneseq
    %v924 = vshrl.u32 %v923, 7
    %v925 = vsub.s32 %v922, %v924
    %v926 = vrot.slane %v912, %v925
    %v927 = vcombine.high %v907, 0.0
    %v929 = vunpack.c.l.s4 1983009808
    %v930 = vunpack.c.0.s8 %v929
    %v931 = vlaneseq
    %v932 = vshrl.u32 %v931, 7
    %v933 = vsub.s32 %v930, %v932
    %v934 = vrot.slane %v907, %v933
    %v936 = vunpack.c.l.s4 1983009808
    %v937 = vunpack.c.0.s8 %v936
    %v938 = vlaneseq
    %v939 = vshrl.u32 %v938, 7
    %v940 = vsub.s32 %v937, %v939
    %v941 = vrot.slane %v927, %v940
    %v942 = vcombine.low %v919, %v934
    %v943 = vcombine.high %v919, %v934
    %v945 = vunpack.c.l.s4 1934713408
    %v946 = vunpack.c.0.s8 %v945
    %v947 = vlaneseq
    %v948 = vshrl.u32 %v947, 7
    %v949 = vsub.s32 %v946, %v948
    %v950 = vrot.slane %v942, %v949
    %v952 = vunpack.c.l.s4 1934713408
    %v953 = vunpack.c.0.s8 %v952
    %v954 = vlaneseq
    %v955 = vshrl.u32 %v954, 7
    %v956 = vsub.s32 %v953, %v955
    %v957 = vrot.slane %v943, %v956
    %v958 = vcombine.low %v926, %v941
    %v959 = vcombine.high %v926, %v941
    %v961 = vunpack.c.l.s4 1934713408
    %v962 = vunpack.c.0.s8 %v961
    %v963 = vlaneseq
    %v964 = vshrl.u32 %v963, 7
    %v965 = vsub.s32 %v962, %v964
    %v966 = vrot.slane %v958, %v965
    %v968 = vunpack.c.l.s4 1934713408
    %v969 = vunpack.c.0.s8 %v968
    %v970 = vlaneseq
    %v971 = vshrl.u32 %v970, 7
    %v972 = vsub.s32 %v969, %v971
    %v973 = vrot.slane %v959, %v972
    %v974 = vcombine.high %v950, 0.0
    %v975 = vcombine.high %v957, 0.0
    %v976 = vcombine.high %v966, 0.0
    %v977 = vcombine.high %v973, 0.0
    %v978 = vcombine.high %v405, 0.0
    %v980 = vunpack.c.l.s4 1983009808
    %v981 = vunpack.c.0.s8 %v980
    %v982 = vlaneseq
    %v983 = vshrl.u32 %v982, 7
    %v984 = vsub.s32 %v981, %v983
    %v985 = vrot.slane %v405, %v984
    %v987 = vunpack.c.l.s4 1983009808
    %v988 = vunpack.c.0.s8 %v987
    %v989 = vlaneseq
    %v990 = vshrl.u32 %v989, 7
    %v991 = vsub.s32 %v988, %v990
    %v992 = vrot.slane %v978, %v991
    %v993 = vcombine.high %v909, 0.0
    %v995 = vunpack.c.l.s4 1983009808
    %v996 = vunpack.c.0.s8 %v995
    %v997 = vlaneseq
    %v998 = vshrl.u32 %v997, 7
    %v999 = vsub.s32 %v996, %v998
    %v1000 = vrot.slane %v909, %v999
    %v1002 = vunpack.c.l.s4 1983009808
    %v1003 = vunpack.c.0.s8 %v1002
    %v1004 = vlaneseq
    %v1005 = vshrl.u32 %v1004, 7
    %v1006 = vsub.s32 %v1003, %v1005
    %v1007 = vrot.slane %v993, %v1006
    %v1008 = vcombine.low %v985, %v1000
    %v1009 = vcombine.high %v985, %v1000
    %v1011 = vunpack.c.l.s4 1934713408
    %v1012 = vunpack.c.0.s8 %v1011
    %v1013 = vlaneseq
    %v1014 = vshrl.u32 %v1013, 7
    %v1015 = vsub.s32 %v1012, %v1014
    %v1016 = vrot.slane %v1008, %v1015
    %v1018 = vunpack.c.l.s4 1934713408
    %v1019 = vunpack.c.0.s8 %v1018
    %v1020 = vlaneseq
    %v1021 = vshrl.u32 %v1020, 7
    %v1022 = vsub.s32 %v1019, %v1021
    %v1023 = vrot.slane %v1009, %v1022
    %v1024 = vcombine.low %v992, %v1007
    %v1025 = vcombine.high %v992, %v1007
    %v1027 = vunpack.c.l.s4 1934713408
    %v1028 = vunpack.c.0.s8 %v1027
    %v1029 = vlaneseq
    %v1030 = vshrl.u32 %v1029, 7
    %v1031 = vsub.s32 %v1028, %v1030
    %v1032 = vrot.slane %v1024, %v1031
    %v1034 = vunpack.c.l.s4 1934713408
    %v1035 = vunpack.c.0.s8 %v1034
    %v1036 = vlaneseq
    %v1037 = vshrl.u32 %v1036, 7
    %v1038 = vsub.s32 %v1035, %v1037
    %v1039 = vrot.slane %v1025, %v1038
    %v1040 = vcombine.high %v1016, 0.0
    %v1041 = vcombine.high %v1023, 0.0
    %v1042 = vcombine.high %v1032, 0.0
    %v1043 = vcombine.high %v1039, 0.0
    %v1044 = vcombine.low %v950, %v957
    %v1046 = vunpack.c.l.s4 1983009808
    %v1047 = vunpack.c.0.s8 %v1046
    %v1048 = vlaneseq
    %v1049 = vshrl.u32 %v1048, 7
    %v1050 = vsub.s32 %v1047, %v1049
    %v1051 = vrot.slane %v1044, %v1050
    %v1052 = vcombine.low %v974, %v975
    %v1054 = vunpack.c.l.s4 1983009808
    %v1055 = vunpack.c.0.s8 %v1054
    %v1056 = vlaneseq
    %v1057 = vshrl.u32 %v1056, 7
    %v1058 = vsub.s32 %v1055, %v1057
    %v1059 = vrot.slane %v1052, %v1058
    %v1060 = vcombine.low %v966, %v973
    %v1062 = vunpack.c.l.s4 1983009808
    %v1063 = vunpack.c.0.s8 %v1062
    %v1064 = vlaneseq
    %v1065 = vshrl.u32 %v1064, 7
    %v1066 = vsub.s32 %v1063, %v1065
    %v1067 = vrot.slane %v1060, %v1066
    %v1068 = vcombine.low %v976, %v977
    %v1070 = vunpack.c.l.s4 1983009808
    %v1071 = vunpack.c.0.s8 %v1070
    %v1072 = vlaneseq
    %v1073 = vshrl.u32 %v1072, 7
    %v1074 = vsub.s32 %v1071, %v1073
    %v1075 = vrot.slane %v1068, %v1074
    %v1076 = vcombine.low %v1051, %v1059
    %v1078 = vunpack.c.l.s4 1934713408
    %v1079 = vunpack.c.0.s8 %v1078
    %v1080 = vlaneseq
    %v1081 = vshrl.u32 %v1080, 7
    %v1082 = vsub.s32 %v1079, %v1081
    %v1083 = vrot.slane %v1076, %v1082
    %v1084 = vcombine.low %v1067, %v1075
    %v1086 = vunpack.c.l.s4 1934713408
    %v1087 = vunpack.c.0.s8 %v1086
    %v1088 = vlaneseq
    %v1089 = vshrl.u32 %v1088, 7
    %v1090 = vsub.s32 %v1087, %v1089
    %v1091 = vrot.slane %v1084, %v1090
    %v1092 = vcombine.low %v1083, %v1091
    %v1093 = vcombine.high %v1083, %v1091
    %v1094 = vcombine.low %v1016, %v1023
    %v1096 = vunpack.c.l.s4 1983009808
    %v1097 = vunpack.c.0.s8 %v1096
    %v1098 = vlaneseq
    %v1099 = vshrl.u32 %v1098, 7
    %v1100 = vsub.s32 %v1097, %v1099
    %v1101 = vrot.slane %v1094, %v1100
    %v1102 = vcombine.low %v1040, %v1041
    %v1104 = vunpack.c.l.s4 1983009808
    %v1105 = vunpack.c.0.s8 %v1104
    %v1106 = vlaneseq
    %v1107 = vshrl.u32 %v1106, 7
    %v1108 = vsub.s32 %v1105, %v1107
    %v1109 = vrot.slane %v1102, %v1108
    %v1110 = vcombine.low %v1032, %v1039
    %v1112 = vunpack.c.l.s4 1983009808
    %v1113 = vunpack.c.0.s8 %v1112
    %v1114 = vlaneseq
    %v1115 = vshrl.u32 %v1114, 7
    %v1116 = vsub.s32 %v1113, %v1115
    %v1117 = vrot.slane %v1110, %v1116
    %v1118 = vcombine.low %v1042, %v1043
    %v1120 = vunpack.c.l.s4 1983009808
    %v1121 = vunpack.c.0.s8 %v1120
    %v1122 = vlaneseq
    %v1123 = vshrl.u32 %v1122, 7
    %v1124 = vsub.s32 %v1121, %v1123
    %v1125 = vrot.slane %v1118, %v1124
    %v1126 = vcombine.low %v1101, %v1109
    %v1128 = vunpack.c.l.s4 1934713408
    %v1129 = vunpack.c.0.s8 %v1128
    %v1130 = vlaneseq
    %v1131 = vshrl.u32 %v1130, 7
    %v1132 = vsub.s32 %v1129, %v1131
    %v1133 = vrot.slane %v1126, %v1132
    %v1134 = vcombine.low %v1117, %v1125
    %v1136 = vunpack.c.l.s4 1934713408
    %v1137 = vunpack.c.0.s8 %v1136
    %v1138 = vlaneseq
    %v1139 = vshrl.u32 %v1138, 7
    %v1140 = vsub.s32 %v1137, %v1139
    %v1141 = vrot.slane %v1134, %v1140
    %v1142 = vcombine.low %v1133, %v1141
    %v1143 = vcombine.high %v1133, %v1141
    %v1144 = vpack.c.bf16 %v1092, %v1092
    %v1145 = vpack.c.bf16 %v1093, %v1093
    %v1146 = vpack.c.bf16 %v1142, %v1142
    %v1147 = vpack.c.bf16 %v1143, %v1143
    %v1148 = vld [vmem:[%s4] sm:$0xf]
    %v1149 = vld [vmem:[%s4 + $0x4] sm:$0xf]
    %v1150 = vld [vmem:[%s4 + $0x8] sm:$0xf]
    %v1151 = vld [vmem:[%s4 + $0xc] sm:$0xf]
    %v1152 = vld [vmem:[%s5] sm:$0xf]
    %v1153 = vld [vmem:[%s5 + $0x4] sm:$0xf]
    %v1154 = vld [vmem:[%s5 + $0x8] sm:$0xf]
    %v1155 = vld [vmem:[%s5 + $0xc] sm:$0xf]
    %v1157 = vsel %vm164, %v652, 0
    %v1160 = vsel %vm164, %v1148, 0
    %1162 = vmatprep.subr.bf16.mxu0 0
    %1163 = vmatpush1.bf16.xpose.msra.mxu0 %v1160
    %1164 = vmatprep.subr.bf16.mxu0 0
    %1165 = vmatpush1.bf16.xpose.msra.mxu0 0
    %1166 = vmatprep.subr.bf16.mxu0 0
    %1167 = vmatpush1.bf16.xpose.msra.mxu0 0
    %1168 = vmatprep.subr.bf16.mxu0 0
    %1169 = vmatpush1.bf16.xpose.msra.mxu0 0
    %1170 = vmatprep.subr.bf16.mxu0 0
    %1171 = vmatpush1.bf16.xpose.msra.mxu0 0
    %1172 = vmatprep.subr.bf16.mxu0 0
    %1173 = vmatpush1.bf16.xpose.msra.mxu0 0
    %1174 = vmatprep.subr.bf16.mxu0 0
    %1175 = vmatpush1.bf16.xpose.msra.mxu0 0
    %1176 = vmatprep.subr.bf16.mxu0 0
    %1177 = vmatpush1.bf16.xpose.msra.mxu0 0
    %1178 = vmatprep.subr.bf16.mxu0 0
    %1179 = vmatpush1.bf16.xpose.msra.mxu0 0
    %1180 = vmatprep.subr.bf16.mxu0 0
    %1181 = vmatpush1.bf16.xpose.msra.mxu0 0
    %1182 = vmatprep.subr.bf16.mxu0 0
    %1183 = vmatpush1.bf16.xpose.msra.mxu0 0
    %1184 = vmatprep.subr.bf16.mxu0 0
    %1185 = vmatpush1.bf16.xpose.msra.mxu0 0
    %1186 = vmatprep.subr.bf16.mxu0 0
    %1187 = vmatpush1.bf16.xpose.msra.mxu0 0
    %1188 = vmatprep.subr.bf16.mxu0 0
    %1189 = vmatpush1.bf16.xpose.msra.mxu0 0
    %1190 = vmatprep.subr.bf16.mxu0 0
    %1191 = vmatpush1.bf16.xpose.msra.mxu0 0
    %1192 = vmatprep.subr.bf16.mxu0 0
    %1193 = vmatpush1.bf16.xpose.msra.mxu0 0
    %1194 = vmatprep.mubr.bf16.mxu0 0
    %1195 = vmatmul.mubr.bf16.gmra.mrb[0].mxu0 %v1157
    %v1196 = vpop.f32.mrb[0].mxu0
    %v1197 = vadd.f32 0.0, %v1196
    %v1198 = vpop.f32.mrb[0].mxu0
    %v1199 = vpop.f32.mrb[0].mxu0
    %v1200 = vpop.f32.mrb[0].mxu0
    %1201 = vdwg.mxu0
    %v1203 = vsel %vm164, %v653, 0
    %v1206 = vsel %vm164, %v1149, 0
    %1208 = vmatprep.subr.bf16.mxu0 0
    %1209 = vmatpush1.bf16.xpose.msra.mxu0 %v1206
    %1210 = vmatprep.subr.bf16.mxu0 0
    %1211 = vmatpush1.bf16.xpose.msra.mxu0 0
    %1212 = vmatprep.subr.bf16.mxu0 0
    %1213 = vmatpush1.bf16.xpose.msra.mxu0 0
    %1214 = vmatprep.subr.bf16.mxu0 0
    %1215 = vmatpush1.bf16.xpose.msra.mxu0 0
    %1216 = vmatprep.subr.bf16.mxu0 0
    %1217 = vmatpush1.bf16.xpose.msra.mxu0 0
    %1218 = vmatprep.subr.bf16.mxu0 0
    %1219 = vmatpush1.bf16.xpose.msra.mxu0 0
    %1220 = vmatprep.subr.bf16.mxu0 0
    %1221 = vmatpush1.bf16.xpose.msra.mxu0 0
    %1222 = vmatprep.subr.bf16.mxu0 0
    %1223 = vmatpush1.bf16.xpose.msra.mxu0 0
    %1224 = vmatprep.subr.bf16.mxu0 0
    %1225 = vmatpush1.bf16.xpose.msra.mxu0 0
    %1226 = vmatprep.subr.bf16.mxu0 0
    %1227 = vmatpush1.bf16.xpose.msra.mxu0 0
    %1228 = vmatprep.subr.bf16.mxu0 0
    %1229 = vmatpush1.bf16.xpose.msra.mxu0 0
    %1230 = vmatprep.subr.bf16.mxu0 0
    %1231 = vmatpush1.bf16.xpose.msra.mxu0 0
    %1232 = vmatprep.subr.bf16.mxu0 0
    %1233 = vmatpush1.bf16.xpose.msra.mxu0 0
    %1234 = vmatprep.subr.bf16.mxu0 0
    %1235 = vmatpush1.bf16.xpose.msra.mxu0 0
    %1236 = vmatprep.subr.bf16.mxu0 0
    %1237 = vmatpush1.bf16.xpose.msra.mxu0 0
    %1238 = vmatprep.subr.bf16.mxu0 0
    %1239 = vmatpush1.bf16.xpose.msra.mxu0 0
    %1240 = vmatprep.mubr.bf16.mxu0 0
    %1241 = vmatmul.mubr.bf16.gmra.mrb[0].mxu0 %v1203
    %v1242 = vpop.f32.mrb[0].mxu0
    %v1243 = vadd.f32 0.0, %v1242
    %v1244 = vpop.f32.mrb[0].mxu0
    %v1245 = vpop.f32.mrb[0].mxu0
    %v1246 = vpop.f32.mrb[0].mxu0
    %1247 = vdwg.mxu0
    %v1249 = vsel %vm164, %v654, 0
    %v1252 = vsel %vm164, %v1150, 0
    %1254 = vmatprep.subr.bf16.mxu0 0
    %1255 = vmatpush1.bf16.xpose.msra.mxu0 %v1252
    %1256 = vmatprep.subr.bf16.mxu0 0
    %1257 = vmatpush1.bf16.xpose.msra.mxu0 0
    %1258 = vmatprep.subr.bf16.mxu0 0
    %1259 = vmatpush1.bf16.xpose.msra.mxu0 0
    %1260 = vmatprep.subr.bf16.mxu0 0
    %1261 = vmatpush1.bf16.xpose.msra.mxu0 0
    %1262 = vmatprep.subr.bf16.mxu0 0
    %1263 = vmatpush1.bf16.xpose.msra.mxu0 0
    %1264 = vmatprep.subr.bf16.mxu0 0
    %1265 = vmatpush1.bf16.xpose.msra.mxu0 0
    %1266 = vmatprep.subr.bf16.mxu0 0
    %1267 = vmatpush1.bf16.xpose.msra.mxu0 0
    %1268 = vmatprep.subr.bf16.mxu0 0
    %1269 = vmatpush1.bf16.xpose.msra.mxu0 0
    %1270 = vmatprep.subr.bf16.mxu0 0
    %1271 = vmatpush1.bf16.xpose.msra.mxu0 0
    %1272 = vmatprep.subr.bf16.mxu0 0
    %1273 = vmatpush1.bf16.xpose.msra.mxu0 0
    %1274 = vmatprep.subr.bf16.mxu0 0
    %1275 = vmatpush1.bf16.xpose.msra.mxu0 0
    %1276 = vmatprep.subr.bf16.mxu0 0
    %1277 = vmatpush1.bf16.xpose.msra.mxu0 0
    %1278 = vmatprep.subr.bf16.mxu0 0
    %1279 = vmatpush1.bf16.xpose.msra.mxu0 0
    %1280 = vmatprep.subr.bf16.mxu0 0
    %1281 = vmatpush1.bf16.xpose.msra.mxu0 0
    %1282 = vmatprep.subr.bf16.mxu0 0
    %1283 = vmatpush1.bf16.xpose.msra.mxu0 0
    %1284 = vmatprep.subr.bf16.mxu0 0
    %1285 = vmatpush1.bf16.xpose.msra.mxu0 0
    %1286 = vmatprep.mubr.bf16.mxu0 0
    %1287 = vmatmul.mubr.bf16.gmra.mrb[0].mxu0 %v1249
    %v1288 = vpop.f32.mrb[0].mxu0
    %v1289 = vadd.f32 0.0, %v1288
    %v1290 = vpop.f32.mrb[0].mxu0
    %v1291 = vpop.f32.mrb[0].mxu0
    %v1292 = vpop.f32.mrb[0].mxu0
    %1293 = vdwg.mxu0
    %v1295 = vsel %vm164, %v655, 0
    %v1298 = vsel %vm164, %v1151, 0
    %1300 = vmatprep.subr.bf16.mxu0 0
    %1301 = vmatpush1.bf16.xpose.msra.mxu0 %v1298
    %1302 = vmatprep.subr.bf16.mxu0 0
    %1303 = vmatpush1.bf16.xpose.msra.mxu0 0
    %1304 = vmatprep.subr.bf16.mxu0 0
    %1305 = vmatpush1.bf16.xpose.msra.mxu0 0
    %1306 = vmatprep.subr.bf16.mxu0 0
    %1307 = vmatpush1.bf16.xpose.msra.mxu0 0
    %1308 = vmatprep.subr.bf16.mxu0 0
    %1309 = vmatpush1.bf16.xpose.msra.mxu0 0
    %1310 = vmatprep.subr.bf16.mxu0 0
    %1311 = vmatpush1.bf16.xpose.msra.mxu0 0
    %1312 = vmatprep.subr.bf16.mxu0 0
    %1313 = vmatpush1.bf16.xpose.msra.mxu0 0
    %1314 = vmatprep.subr.bf16.mxu0 0
    %1315 = vmatpush1.bf16.xpose.msra.mxu0 0
    %1316 = vmatprep.subr.bf16.mxu0 0
    %1317 = vmatpush1.bf16.xpose.msra.mxu0 0
    %1318 = vmatprep.subr.bf16.mxu0 0
    %1319 = vmatpush1.bf16.xpose.msra.mxu0 0
    %1320 = vmatprep.subr.bf16.mxu0 0
    %1321 = vmatpush1.bf16.xpose.msra.mxu0 0
    %1322 = vmatprep.subr.bf16.mxu0 0
    %1323 = vmatpush1.bf16.xpose.msra.mxu0 0
    %1324 = vmatprep.subr.bf16.mxu0 0
    %1325 = vmatpush1.bf16.xpose.msra.mxu0 0
    %1326 = vmatprep.subr.bf16.mxu0 0
    %1327 = vmatpush1.bf16.xpose.msra.mxu0 0
    %1328 = vmatprep.subr.bf16.mxu0 0
    %1329 = vmatpush1.bf16.xpose.msra.mxu0 0
    %1330 = vmatprep.subr.bf16.mxu0 0
    %1331 = vmatpush1.bf16.xpose.msra.mxu0 0
    %1332 = vmatprep.mubr.bf16.mxu0 0
    %1333 = vmatmul.mubr.bf16.gmra.mrb[0].mxu0 %v1295
    %v1334 = vpop.f32.mrb[0].mxu0
    %v1335 = vadd.f32 0.0, %v1334
    %v1336 = vpop.f32.mrb[0].mxu0
    %v1337 = vpop.f32.mrb[0].mxu0
    %v1338 = vpop.f32.mrb[0].mxu0
    %1339 = vdwg.mxu0
    %v1341 = vsel %vm164, %v898, 0
    %1343 = vmatprep.subr.bf16.mxu0 0
    %1344 = vmatpush1.bf16.xpose.msra.mxu0 %v1341
    %1345 = vmatprep.subr.bf16.mxu0 0
    %1346 = vmatpush1.bf16.xpose.msra.mxu0 0
    %1347 = vmatprep.subr.bf16.mxu0 0
    %1348 = vmatpush1.bf16.xpose.msra.mxu0 0
    %1349 = vmatprep.subr.bf16.mxu0 0
    %1350 = vmatpush1.bf16.xpose.msra.mxu0 0
    %1351 = vmatprep.subr.bf16.mxu0 0
    %1352 = vmatpush1.bf16.xpose.msra.mxu0 0
    %1353 = vmatprep.subr.bf16.mxu0 0
    %1354 = vmatpush1.bf16.xpose.msra.mxu0 0
    %1355 = vmatprep.subr.bf16.mxu0 0
    %1356 = vmatpush1.bf16.xpose.msra.mxu0 0
    %1357 = vmatprep.subr.bf16.mxu0 0
    %1358 = vmatpush1.bf16.xpose.msra.mxu0 0
    %1359 = vmatprep.subr.bf16.mxu0 0
    %1360 = vmatpush1.bf16.xpose.msra.mxu0 0
    %1361 = vmatprep.subr.bf16.mxu0 0
    %1362 = vmatpush1.bf16.xpose.msra.mxu0 0
    %1363 = vmatprep.subr.bf16.mxu0 0
    %1364 = vmatpush1.bf16.xpose.msra.mxu0 0
    %1365 = vmatprep.subr.bf16.mxu0 0
    %1366 = vmatpush1.bf16.xpose.msra.mxu0 0
    %1367 = vmatprep.subr.bf16.mxu0 0
    %1368 = vmatpush1.bf16.xpose.msra.mxu0 0
    %1369 = vmatprep.subr.bf16.mxu0 0
    %1370 = vmatpush1.bf16.xpose.msra.mxu0 0
    %1371 = vmatprep.subr.bf16.mxu0 0
    %1372 = vmatpush1.bf16.xpose.msra.mxu0 0
    %1373 = vmatprep.subr.bf16.mxu0 0
    %1374 = vmatpush1.bf16.xpose.msra.mxu0 0
    %1375 = vmatprep.mubr.bf16.mxu0 0
    %1376 = vmatmul.mubr.bf16.gmra.mrb[0].mxu0 %v1157
    %v1377 = vpop.f32.mrb[0].mxu0
    %v1378 = vadd.f32 0.0, %v1377
    %v1379 = vpop.f32.mrb[0].mxu0
    %v1380 = vpop.f32.mrb[0].mxu0
    %v1381 = vpop.f32.mrb[0].mxu0
    %1382 = vdwg.mxu0
    %v1384 = vsel %vm164, %v899, 0
    %1386 = vmatprep.subr.bf16.mxu0 0
    %1387 = vmatpush1.bf16.xpose.msra.mxu0 %v1384
    %1388 = vmatprep.subr.bf16.mxu0 0
    %1389 = vmatpush1.bf16.xpose.msra.mxu0 0
    %1390 = vmatprep.subr.bf16.mxu0 0
    %1391 = vmatpush1.bf16.xpose.msra.mxu0 0
    %1392 = vmatprep.subr.bf16.mxu0 0
    %1393 = vmatpush1.bf16.xpose.msra.mxu0 0
    %1394 = vmatprep.subr.bf16.mxu0 0
    %1395 = vmatpush1.bf16.xpose.msra.mxu0 0
    %1396 = vmatprep.subr.bf16.mxu0 0
    %1397 = vmatpush1.bf16.xpose.msra.mxu0 0
    %1398 = vmatprep.subr.bf16.mxu0 0
    %1399 = vmatpush1.bf16.xpose.msra.mxu0 0
    %1400 = vmatprep.subr.bf16.mxu0 0
    %1401 = vmatpush1.bf16.xpose.msra.mxu0 0
    %1402 = vmatprep.subr.bf16.mxu0 0
    %1403 = vmatpush1.bf16.xpose.msra.mxu0 0
    %1404 = vmatprep.subr.bf16.mxu0 0
    %1405 = vmatpush1.bf16.xpose.msra.mxu0 0
    %1406 = vmatprep.subr.bf16.mxu0 0
    %1407 = vmatpush1.bf16.xpose.msra.mxu0 0
    %1408 = vmatprep.subr.bf16.mxu0 0
    %1409 = vmatpush1.bf16.xpose.msra.mxu0 0
    %1410 = vmatprep.subr.bf16.mxu0 0
    %1411 = vmatpush1.bf16.xpose.msra.mxu0 0
    %1412 = vmatprep.subr.bf16.mxu0 0
    %1413 = vmatpush1.bf16.xpose.msra.mxu0 0
    %1414 = vmatprep.subr.bf16.mxu0 0
    %1415 = vmatpush1.bf16.xpose.msra.mxu0 0
    %1416 = vmatprep.subr.bf16.mxu0 0
    %1417 = vmatpush1.bf16.xpose.msra.mxu0 0
    %1418 = vmatprep.mubr.bf16.mxu0 0
    %1419 = vmatmul.mubr.bf16.gmra.mrb[0].mxu0 %v1203
    %v1420 = vpop.f32.mrb[0].mxu0
    %v1421 = vadd.f32 0.0, %v1420
    %v1422 = vpop.f32.mrb[0].mxu0
    %v1423 = vpop.f32.mrb[0].mxu0
    %v1424 = vpop.f32.mrb[0].mxu0
    %1425 = vdwg.mxu0
    %v1427 = vsel %vm164, %v900, 0
    %1429 = vmatprep.subr.bf16.mxu0 0
    %1430 = vmatpush1.bf16.xpose.msra.mxu0 %v1427
    %1431 = vmatprep.subr.bf16.mxu0 0
    %1432 = vmatpush1.bf16.xpose.msra.mxu0 0
    %1433 = vmatprep.subr.bf16.mxu0 0
    %1434 = vmatpush1.bf16.xpose.msra.mxu0 0
    %1435 = vmatprep.subr.bf16.mxu0 0
    %1436 = vmatpush1.bf16.xpose.msra.mxu0 0
    %1437 = vmatprep.subr.bf16.mxu0 0
    %1438 = vmatpush1.bf16.xpose.msra.mxu0 0
    %1439 = vmatprep.subr.bf16.mxu0 0
    %1440 = vmatpush1.bf16.xpose.msra.mxu0 0
    %1441 = vmatprep.subr.bf16.mxu0 0
    %1442 = vmatpush1.bf16.xpose.msra.mxu0 0
    %1443 = vmatprep.subr.bf16.mxu0 0
    %1444 = vmatpush1.bf16.xpose.msra.mxu0 0
    %1445 = vmatprep.subr.bf16.mxu0 0
    %1446 = vmatpush1.bf16.xpose.msra.mxu0 0
    %1447 = vmatprep.subr.bf16.mxu0 0
    %1448 = vmatpush1.bf16.xpose.msra.mxu0 0
    %1449 = vmatprep.subr.bf16.mxu0 0
    %1450 = vmatpush1.bf16.xpose.msra.mxu0 0
    %1451 = vmatprep.subr.bf16.mxu0 0
    %1452 = vmatpush1.bf16.xpose.msra.mxu0 0
    %1453 = vmatprep.subr.bf16.mxu0 0
    %1454 = vmatpush1.bf16.xpose.msra.mxu0 0
    %1455 = vmatprep.subr.bf16.mxu0 0
    %1456 = vmatpush1.bf16.xpose.msra.mxu0 0
    %1457 = vmatprep.subr.bf16.mxu0 0
    %1458 = vmatpush1.bf16.xpose.msra.mxu0 0
    %1459 = vmatprep.subr.bf16.mxu0 0
    %1460 = vmatpush1.bf16.xpose.msra.mxu0 0
    %1461 = vmatprep.mubr.bf16.mxu0 0
    %1462 = vmatmul.mubr.bf16.gmra.mrb[0].mxu0 %v1249
    %v1463 = vpop.f32.mrb[0].mxu0
    %v1464 = vadd.f32 0.0, %v1463
    %v1465 = vpop.f32.mrb[0].mxu0
    %v1466 = vpop.f32.mrb[0].mxu0
    %v1467 = vpop.f32.mrb[0].mxu0
    %1468 = vdwg.mxu0
    %v1470 = vsel %vm164, %v901, 0
    %1472 = vmatprep.subr.bf16.mxu0 0
    %1473 = vmatpush1.bf16.xpose.msra.mxu0 %v1470
    %1474 = vmatprep.subr.bf16.mxu0 0
    %1475 = vmatpush1.bf16.xpose.msra.mxu0 0
    %1476 = vmatprep.subr.bf16.mxu0 0
    %1477 = vmatpush1.bf16.xpose.msra.mxu0 0
    %1478 = vmatprep.subr.bf16.mxu0 0
    %1479 = vmatpush1.bf16.xpose.msra.mxu0 0
    %1480 = vmatprep.subr.bf16.mxu0 0
    %1481 = vmatpush1.bf16.xpose.msra.mxu0 0
    %1482 = vmatprep.subr.bf16.mxu0 0
    %1483 = vmatpush1.bf16.xpose.msra.mxu0 0
    %1484 = vmatprep.subr.bf16.mxu0 0
    %1485 = vmatpush1.bf16.xpose.msra.mxu0 0
    %1486 = vmatprep.subr.bf16.mxu0 0
    %1487 = vmatpush1.bf16.xpose.msra.mxu0 0
    %1488 = vmatprep.subr.bf16.mxu0 0
    %1489 = vmatpush1.bf16.xpose.msra.mxu0 0
    %1490 = vmatprep.subr.bf16.mxu0 0
    %1491 = vmatpush1.bf16.xpose.msra.mxu0 0
    %1492 = vmatprep.subr.bf16.mxu0 0
    %1493 = vmatpush1.bf16.xpose.msra.mxu0 0
    %1494 = vmatprep.subr.bf16.mxu0 0
    %1495 = vmatpush1.bf16.xpose.msra.mxu0 0
    %1496 = vmatprep.subr.bf16.mxu0 0
    %1497 = vmatpush1.bf16.xpose.msra.mxu0 0
    %1498 = vmatprep.subr.bf16.mxu0 0
    %1499 = vmatpush1.bf16.xpose.msra.mxu0 0
    %1500 = vmatprep.subr.bf16.mxu0 0
    %1501 = vmatpush1.bf16.xpose.msra.mxu0 0
    %1502 = vmatprep.subr.bf16.mxu0 0
    %1503 = vmatpush1.bf16.xpose.msra.mxu0 0
    %1504 = vmatprep.mubr.bf16.mxu0 0
    %1505 = vmatmul.mubr.bf16.gmra.mrb[0].mxu0 %v1295
    %v1506 = vpop.f32.mrb[0].mxu0
    %v1507 = vadd.f32 0.0, %v1506
    %v1508 = vpop.f32.mrb[0].mxu0
    %v1509 = vpop.f32.mrb[0].mxu0
    %v1510 = vpop.f32.mrb[0].mxu0
    %1511 = vdwg.mxu0
    %1516 = vrot.lane.b32.xlu0 %v1378, 8
    %v1517 = vpop.permute.xlu0 %1516
    %1518 = vrot.lane.b32.xlu0 %v1421, 8
    %v1519 = vpop.permute.xlu0 %1518
    %1520 = vrot.lane.b32.xlu0 %v1464, 8
    %v1521 = vpop.permute.xlu0 %1520
    %1522 = vrot.lane.b32.xlu0 %v1507, 8
    %v1523 = vpop.permute.xlu0 %1522
    %vm1528 = vcmask 64512
    %v1529 = vsel %vm1528, %v1197, %v1517
    %v1530 = vsel %vm1528, %v1243, %v1519
    %v1531 = vsel %vm1528, %v1289, %v1521
    %v1532 = vsel %vm1528, %v1335, %v1523
    %v1533 = vld [vmem:[#allocation2] sm:$0x3]
    %v1534 = vld [vmem:[#allocation2 + $0x2] sm:$0x3]
    %vm1535 = vnez %v1533
    %vm1536 = vnez %v1534
    %v1537 = vsel %vm1535, 16843009, 0
    %v1538 = vsel %vm1536, 16843009, 0
    %v1539 = vunpack.c.0.s8 %v1537
    %v1540 = vunpack.c.0.s8 %v1538
    %vm1541 = vcmp.ne.s32.totalorder %v1539, 0
    %vm1542 = vcmp.ne.s32.totalorder %v1540, 0
    %v1543 = vsel %vm1541, 1, 0
    %v1544 = vsel %vm1542, 1, 0
    %vm1545 = vcmp.eq.s32.totalorder %v1543, 1
    %vm1546 = vcmp.eq.s32.totalorder %v1544, 1
    %v1547 = vsel %vm1545, -20000.0, %v1529
    %v1548 = vsel %vm1545, -20000.0, %v1530
    %v1549 = vsel %vm1546, -20000.0, %v1531
    %v1550 = vsel %vm1546, -20000.0, %v1532
    %v1551 = vsel %vm164, %v1547, -inf
    %1552 = vmax.xlane.f32.xlu0 %v1551
    %v1553 = vpop.xlane.xlu0 %1552
    %v1554 = vsel %vm164, %v1548, -inf
    %1555 = vmax.xlane.f32.xlu0 %v1554
    %v1556 = vpop.xlane.xlu0 %1555
    %v1557 = vsel %vm164, %v1549, -inf
    %1558 = vmax.xlane.f32.xlu0 %v1557
    %v1559 = vpop.xlane.xlu0 %1558
    %v1560 = vsel %vm164, %v1550, -inf
    %1561 = vmax.xlane.f32.xlu0 %v1560
    %v1562 = vpop.xlane.xlu0 %1561
    %v1563 = vsub.f32 %v1547, %v1553
    %v1564 = vsub.f32 %v1548, %v1556
    %v1565 = vsub.f32 %v1549, %v1559
    %v1566 = vsub.f32 %v1550, %v1562
    %v1567 = vmul.f32 %v1563, 1.442695
    %v1568 = vpow.pop %v1567
    %v1569 = vmul.f32 %v1564, 1.442695
    %v1570 = vpow.pop %v1569
    %v1571 = vmul.f32 %v1565, 1.442695
    %v1572 = vpow.pop %v1571
    %v1573 = vmul.f32 %v1566, 1.442695
    %v1574 = vpow.pop %v1573
    %v1575 = vsel %vm164, %v1568, 0.0
    %1576 = vadd.xlane.f32.xlu0 %v1575
    %v1577 = vpop.xlane.xlu0 %1576
    %v1578 = vsel %vm164, %v1570, 0.0
    %1579 = vadd.xlane.f32.xlu0 %v1578
    %v1580 = vpop.xlane.xlu0 %1579
    %v1581 = vsel %vm164, %v1572, 0.0
    %1582 = vadd.xlane.f32.xlu0 %v1581
    %v1583 = vpop.xlane.xlu0 %1582
    %v1584 = vsel %vm164, %v1574, 0.0
    %1585 = vadd.xlane.f32.xlu0 %v1584
    %v1586 = vpop.xlane.xlu0 %1585
    %v1587 = vrcp.pop %v1577
    %v1588 = vrcp.pop %v1580
    %v1589 = vrcp.pop %v1583
    %v1590 = vrcp.pop %v1586
    %v1591 = vmul.f32 %v1568, %v1587
    %v1592 = vmul.f32 %v1570, %v1588
    %v1593 = vmul.f32 %v1572, %v1589
    %v1594 = vmul.f32 %v1574, %v1590
    %v1595 = vpack.c.bf16 %v1591, %v1591
    %v1596 = vpack.c.bf16 %v1592, %v1592
    %v1597 = vpack.c.bf16 %v1593, %v1593
    %v1598 = vpack.c.bf16 %v1594, %v1594
    %1600 = vrot.lane.b32.xlu0 %v1595, 120
    %v1601 = vpop.permute.xlu0 %1600
    %v1603 = vsel %vm1528, %v1601, 0
    %vm1605 = vcmask 1043456
    %v1607 = vsel %vm1605, %v1144, 0
    %1609 = vmatprep.subr.bf16.mxu0 0
    %1610 = vmatpush1.bf16.msra.mxu0 %v1607
    %1611 = vmatprep.subr.bf16.mxu0 0
    %1612 = vmatpush1.bf16.msra.mxu0 0
    %1613 = vmatprep.subr.bf16.mxu0 0
    %1614 = vmatpush1.bf16.msra.mxu0 0
    %1615 = vmatprep.subr.bf16.mxu0 0
    %1616 = vmatpush1.bf16.msra.mxu0 0
    %1617 = vmatprep.subr.bf16.mxu0 0
    %1618 = vmatpush1.bf16.msra.mxu0 0
    %1619 = vmatprep.subr.bf16.mxu0 0
    %1620 = vmatpush1.bf16.msra.mxu0 0
    %1621 = vmatprep.subr.bf16.mxu0 0
    %1622 = vmatpush1.bf16.msra.mxu0 0
    %1623 = vmatprep.subr.bf16.mxu0 0
    %1624 = vmatpush1.bf16.msra.mxu0 0
    %1625 = vmatprep.subr.bf16.mxu0 0
    %1626 = vmatpush1.bf16.msra.mxu0 0
    %1627 = vmatprep.subr.bf16.mxu0 0
    %1628 = vmatpush1.bf16.msra.mxu0 0
    %1629 = vmatprep.subr.bf16.mxu0 0
    %1630 = vmatpush1.bf16.msra.mxu0 0
    %1631 = vmatprep.subr.bf16.mxu0 0
    %1632 = vmatpush1.bf16.msra.mxu0 0
    %1633 = vmatprep.subr.bf16.mxu0 0
    %1634 = vmatpush1.bf16.msra.mxu0 0
    %1635 = vmatprep.subr.bf16.mxu0 0
    %1636 = vmatpush1.bf16.msra.mxu0 0
    %1637 = vmatprep.subr.bf16.mxu0 0
    %1638 = vmatpush1.bf16.msra.mxu0 0
    %1639 = vmatprep.subr.bf16.mxu0 0
    %1640 = vmatpush1.bf16.msra.mxu0 0
    %1641 = vmatprep.mubr.bf16.mxu0 0
    %1642 = vmatmul.mubr.bf16.gmra.mrb[0].mxu0 %v1603
    %v1643 = vpop.f32.mrb[0].mxu0
    %v1644 = vadd.f32 0.0, %v1643
    %v1645 = vpop.f32.mrb[0].mxu0
    %v1646 = vpop.f32.mrb[0].mxu0
    %v1647 = vpop.f32.mrb[0].mxu0
    %1648 = vdwg.mxu0
    %1650 = vrot.lane.b32.xlu0 %v1596, 120
    %v1651 = vpop.permute.xlu0 %1650
    %v1653 = vsel %vm1528, %v1651, 0
    %v1656 = vsel %vm1605, %v1145, 0
    %1658 = vmatprep.subr.bf16.mxu0 0
    %1659 = vmatpush1.bf16.msra.mxu0 %v1656
    %1660 = vmatprep.subr.bf16.mxu0 0
    %1661 = vmatpush1.bf16.msra.mxu0 0
    %1662 = vmatprep.subr.bf16.mxu0 0
    %1663 = vmatpush1.bf16.msra.mxu0 0
    %1664 = vmatprep.subr.bf16.mxu0 0
    %1665 = vmatpush1.bf16.msra.mxu0 0
    %1666 = vmatprep.subr.bf16.mxu0 0
    %1667 = vmatpush1.bf16.msra.mxu0 0
    %1668 = vmatprep.subr.bf16.mxu0 0
    %1669 = vmatpush1.bf16.msra.mxu0 0
    %1670 = vmatprep.subr.bf16.mxu0 0
    %1671 = vmatpush1.bf16.msra.mxu0 0
    %1672 = vmatprep.subr.bf16.mxu0 0
    %1673 = vmatpush1.bf16.msra.mxu0 0
    %1674 = vmatprep.subr.bf16.mxu0 0
    %1675 = vmatpush1.bf16.msra.mxu0 0
    %1676 = vmatprep.subr.bf16.mxu0 0
    %1677 = vmatpush1.bf16.msra.mxu0 0
    %1678 = vmatprep.subr.bf16.mxu0 0
    %1679 = vmatpush1.bf16.msra.mxu0 0
    %1680 = vmatprep.subr.bf16.mxu0 0
    %1681 = vmatpush1.bf16.msra.mxu0 0
    %1682 = vmatprep.subr.bf16.mxu0 0
    %1683 = vmatpush1.bf16.msra.mxu0 0
    %1684 = vmatprep.subr.bf16.mxu0 0
    %1685 = vmatpush1.bf16.msra.mxu0 0
    %1686 = vmatprep.subr.bf16.mxu0 0
    %1687 = vmatpush1.bf16.msra.mxu0 0
    %1688 = vmatprep.subr.bf16.mxu0 0
    %1689 = vmatpush1.bf16.msra.mxu0 0
    %1690 = vmatprep.mubr.bf16.mxu0 0
    %1691 = vmatmul.mubr.bf16.gmra.mrb[0].mxu0 %v1653
    %v1692 = vpop.f32.mrb[0].mxu0
    %v1693 = vadd.f32 0.0, %v1692
    %v1694 = vpop.f32.mrb[0].mxu0
    %v1695 = vpop.f32.mrb[0].mxu0
    %v1696 = vpop.f32.mrb[0].mxu0
    %1697 = vdwg.mxu0
    %1699 = vrot.lane.b32.xlu0 %v1597, 120
    %v1700 = vpop.permute.xlu0 %1699
    %v1702 = vsel %vm1528, %v1700, 0
    %v1705 = vsel %vm1605, %v1146, 0
    %1707 = vmatprep.subr.bf16.mxu0 0
    %1708 = vmatpush1.bf16.msra.mxu0 %v1705
    %1709 = vmatprep.subr.bf16.mxu0 0
    %1710 = vmatpush1.bf16.msra.mxu0 0
    %1711 = vmatprep.subr.bf16.mxu0 0
    %1712 = vmatpush1.bf16.msra.mxu0 0
    %1713 = vmatprep.subr.bf16.mxu0 0
    %1714 = vmatpush1.bf16.msra.mxu0 0
    %1715 = vmatprep.subr.bf16.mxu0 0
    %1716 = vmatpush1.bf16.msra.mxu0 0
    %1717 = vmatprep.subr.bf16.mxu0 0
    %1718 = vmatpush1.bf16.msra.mxu0 0
    %1719 = vmatprep.subr.bf16.mxu0 0
    %1720 = vmatpush1.bf16.msra.mxu0 0
    %1721 = vmatprep.subr.bf16.mxu0 0
    %1722 = vmatpush1.bf16.msra.mxu0 0
    %1723 = vmatprep.subr.bf16.mxu0 0
    %1724 = vmatpush1.bf16.msra.mxu0 0
    %1725 = vmatprep.subr.bf16.mxu0 0
    %1726 = vmatpush1.bf16.msra.mxu0 0
    %1727 = vmatprep.subr.bf16.mxu0 0
    %1728 = vmatpush1.bf16.msra.mxu0 0
    %1729 = vmatprep.subr.bf16.mxu0 0
    %1730 = vmatpush1.bf16.msra.mxu0 0
    %1731 = vmatprep.subr.bf16.mxu0 0
    %1732 = vmatpush1.bf16.msra.mxu0 0
    %1733 = vmatprep.subr.bf16.mxu0 0
    %1734 = vmatpush1.bf16.msra.mxu0 0
    %1735 = vmatprep.subr.bf16.mxu0 0
    %1736 = vmatpush1.bf16.msra.mxu0 0
    %1737 = vmatprep.subr.bf16.mxu0 0
    %1738 = vmatpush1.bf16.msra.mxu0 0
    %1739 = vmatprep.mubr.bf16.mxu0 0
    %1740 = vmatmul.mubr.bf16.gmra.mrb[0].mxu0 %v1702
    %v1741 = vpop.f32.mrb[0].mxu0
    %v1742 = vadd.f32 0.0, %v1741
    %v1743 = vpop.f32.mrb[0].mxu0
    %v1744 = vpop.f32.mrb[0].mxu0
    %v1745 = vpop.f32.mrb[0].mxu0
    %1746 = vdwg.mxu0
    %1748 = vrot.lane.b32.xlu0 %v1598, 120
    %v1749 = vpop.permute.xlu0 %1748
    %v1751 = vsel %vm1528, %v1749, 0
    %v1754 = vsel %vm1605, %v1147, 0
    %1756 = vmatprep.subr.bf16.mxu0 0
    %1757 = vmatpush1.bf16.msra.mxu0 %v1754
    %1758 = vmatprep.subr.bf16.mxu0 0
    %1759 = vmatpush1.bf16.msra.mxu0 0
    %1760 = vmatprep.subr.bf16.mxu0 0
    %1761 = vmatpush1.bf16.msra.mxu0 0
    %1762 = vmatprep.subr.bf16.mxu0 0
    %1763 = vmatpush1.bf16.msra.mxu0 0
    %1764 = vmatprep.subr.bf16.mxu0 0
    %1765 = vmatpush1.bf16.msra.mxu0 0
    %1766 = vmatprep.subr.bf16.mxu0 0
    %1767 = vmatpush1.bf16.msra.mxu0 0
    %1768 = vmatprep.subr.bf16.mxu0 0
    %1769 = vmatpush1.bf16.msra.mxu0 0
    %1770 = vmatprep.subr.bf16.mxu0 0
    %1771 = vmatpush1.bf16.msra.mxu0 0
    %1772 = vmatprep.subr.bf16.mxu0 0
    %1773 = vmatpush1.bf16.msra.mxu0 0
    %1774 = vmatprep.subr.bf16.mxu0 0
    %1775 = vmatpush1.bf16.msra.mxu0 0
    %1776 = vmatprep.subr.bf16.mxu0 0
    %1777 = vmatpush1.bf16.msra.mxu0 0
    %1778 = vmatprep.subr.bf16.mxu0 0
    %1779 = vmatpush1.bf16.msra.mxu0 0
    %1780 = vmatprep.subr.bf16.mxu0 0
    %1781 = vmatpush1.bf16.msra.mxu0 0
    %1782 = vmatprep.subr.bf16.mxu0 0
    %1783 = vmatpush1.bf16.msra.mxu0 0
    %1784 = vmatprep.subr.bf16.mxu0 0
    %1785 = vmatpush1.bf16.msra.mxu0 0
    %1786 = vmatprep.subr.bf16.mxu0 0
    %1787 = vmatpush1.bf16.msra.mxu0 0
    %1788 = vmatprep.mubr.bf16.mxu0 0
    %1789 = vmatmul.mubr.bf16.gmra.mrb[0].mxu0 %v1751
    %v1790 = vpop.f32.mrb[0].mxu0
    %v1791 = vadd.f32 0.0, %v1790
    %v1792 = vpop.f32.mrb[0].mxu0
    %v1793 = vpop.f32.mrb[0].mxu0
    %v1794 = vpop.f32.mrb[0].mxu0
    %1795 = vdwg.mxu0
    %v1797 = vsel %vm1528, %v1595, 0
    %v1800 = vsel %vm1605, %v1152, 0
    %1802 = vmatprep.subr.bf16.mxu0 0
    %1803 = vmatpush1.bf16.msra.mxu0 %v1800
    %1804 = vmatprep.subr.bf16.mxu0 0
    %1805 = vmatpush1.bf16.msra.mxu0 0
    %1806 = vmatprep.subr.bf16.mxu0 0
    %1807 = vmatpush1.bf16.msra.mxu0 0
    %1808 = vmatprep.subr.bf16.mxu0 0
    %1809 = vmatpush1.bf16.msra.mxu0 0
    %1810 = vmatprep.subr.bf16.mxu0 0
    %1811 = vmatpush1.bf16.msra.mxu0 0
    %1812 = vmatprep.subr.bf16.mxu0 0
    %1813 = vmatpush1.bf16.msra.mxu0 0
    %1814 = vmatprep.subr.bf16.mxu0 0
    %1815 = vmatpush1.bf16.msra.mxu0 0
    %1816 = vmatprep.subr.bf16.mxu0 0
    %1817 = vmatpush1.bf16.msra.mxu0 0
    %1818 = vmatprep.subr.bf16.mxu0 0
    %1819 = vmatpush1.bf16.msra.mxu0 0
    %1820 = vmatprep.subr.bf16.mxu0 0
    %1821 = vmatpush1.bf16.msra.mxu0 0
    %1822 = vmatprep.subr.bf16.mxu0 0
    %1823 = vmatpush1.bf16.msra.mxu0 0
    %1824 = vmatprep.subr.bf16.mxu0 0
    %1825 = vmatpush1.bf16.msra.mxu0 0
    %1826 = vmatprep.subr.bf16.mxu0 0
    %1827 = vmatpush1.bf16.msra.mxu0 0
    %1828 = vmatprep.subr.bf16.mxu0 0
    %1829 = vmatpush1.bf16.msra.mxu0 0
    %1830 = vmatprep.subr.bf16.mxu0 0
    %1831 = vmatpush1.bf16.msra.mxu0 0
    %1832 = vmatprep.subr.bf16.mxu0 0
    %1833 = vmatpush1.bf16.msra.mxu0 0
    %1834 = vmatprep.mubr.bf16.mxu0 0
    %1835 = vmatmul.mubr.bf16.gmra.mrb[0].mxu0 %v1797
    %v1836 = vpop.f32.mrb[0].mxu0
    %v1837 = vadd.f32 %v1644, %v1836
    %v1838 = vpop.f32.mrb[0].mxu0
    %v1839 = vpop.f32.mrb[0].mxu0
    %v1840 = vpop.f32.mrb[0].mxu0
    %1841 = vdwg.mxu0
    %v1843 = vsel %vm1528, %v1596, 0
    %v1846 = vsel %vm1605, %v1153, 0
    %1848 = vmatprep.subr.bf16.mxu0 0
    %1849 = vmatpush1.bf16.msra.mxu0 %v1846
    %1850 = vmatprep.subr.bf16.mxu0 0
    %1851 = vmatpush1.bf16.msra.mxu0 0
    %1852 = vmatprep.subr.bf16.mxu0 0
    %1853 = vmatpush1.bf16.msra.mxu0 0
    %1854 = vmatprep.subr.bf16.mxu0 0
    %1855 = vmatpush1.bf16.msra.mxu0 0
    %1856 = vmatprep.subr.bf16.mxu0 0
    %1857 = vmatpush1.bf16.msra.mxu0 0
    %1858 = vmatprep.subr.bf16.mxu0 0
    %1859 = vmatpush1.bf16.msra.mxu0 0
    %1860 = vmatprep.subr.bf16.mxu0 0
    %1861 = vmatpush1.bf16.msra.mxu0 0
    %1862 = vmatprep.subr.bf16.mxu0 0
    %1863 = vmatpush1.bf16.msra.mxu0 0
    %1864 = vmatprep.subr.bf16.mxu0 0
    %1865 = vmatpush1.bf16.msra.mxu0 0
    %1866 = vmatprep.subr.bf16.mxu0 0
    %1867 = vmatpush1.bf16.msra.mxu0 0
    %1868 = vmatprep.subr.bf16.mxu0 0
    %1869 = vmatpush1.bf16.msra.mxu0 0
    %1870 = vmatprep.subr.bf16.mxu0 0
    %1871 = vmatpush1.bf16.msra.mxu0 0
    %1872 = vmatprep.subr.bf16.mxu0 0
    %1873 = vmatpush1.bf16.msra.mxu0 0
    %1874 = vmatprep.subr.bf16.mxu0 0
    %1875 = vmatpush1.bf16.msra.mxu0 0
    %1876 = vmatprep.subr.bf16.mxu0 0
    %1877 = vmatpush1.bf16.msra.mxu0 0
    %1878 = vmatprep.subr.bf16.mxu0 0
    %1879 = vmatpush1.bf16.msra.mxu0 0
    %1880 = vmatprep.mubr.bf16.mxu0 0
    %1881 = vmatmul.mubr.bf16.gmra.mrb[0].mxu0 %v1843
    %v1882 = vpop.f32.mrb[0].mxu0
    %v1883 = vadd.f32 %v1693, %v1882
    %v1884 = vpop.f32.mrb[0].mxu0
    %v1885 = vpop.f32.mrb[0].mxu0
    %v1886 = vpop.f32.mrb[0].mxu0
    %1887 = vdwg.mxu0
    %v1889 = vsel %vm1528, %v1597, 0
    %v1892 = vsel %vm1605, %v1154, 0
    %1894 = vmatprep.subr.bf16.mxu0 0
    %1895 = vmatpush1.bf16.msra.mxu0 %v1892
    %1896 = vmatprep.subr.bf16.mxu0 0
    %1897 = vmatpush1.bf16.msra.mxu0 0
    %1898 = vmatprep.subr.bf16.mxu0 0
    %1899 = vmatpush1.bf16.msra.mxu0 0
    %1900 = vmatprep.subr.bf16.mxu0 0
    %1901 = vmatpush1.bf16.msra.mxu0 0
    %1902 = vmatprep.subr.bf16.mxu0 0
    %1903 = vmatpush1.bf16.msra.mxu0 0
    %1904 = vmatprep.subr.bf16.mxu0 0
    %1905 = vmatpush1.bf16.msra.mxu0 0
    %1906 = vmatprep.subr.bf16.mxu0 0
    %1907 = vmatpush1.bf16.msra.mxu0 0
    %1908 = vmatprep.subr.bf16.mxu0 0
    %1909 = vmatpush1.bf16.msra.mxu0 0
    %1910 = vmatprep.subr.bf16.mxu0 0
    %1911 = vmatpush1.bf16.msra.mxu0 0
    %1912 = vmatprep.subr.bf16.mxu0 0
    %1913 = vmatpush1.bf16.msra.mxu0 0
    %1914 = vmatprep.subr.bf16.mxu0 0
    %1915 = vmatpush1.bf16.msra.mxu0 0
    %1916 = vmatprep.subr.bf16.mxu0 0
    %1917 = vmatpush1.bf16.msra.mxu0 0
    %1918 = vmatprep.subr.bf16.mxu0 0
    %1919 = vmatpush1.bf16.msra.mxu0 0
    %1920 = vmatprep.subr.bf16.mxu0 0
    %1921 = vmatpush1.bf16.msra.mxu0 0
    %1922 = vmatprep.subr.bf16.mxu0 0
    %1923 = vmatpush1.bf16.msra.mxu0 0
    %1924 = vmatprep.subr.bf16.mxu0 0
    %1925 = vmatpush1.bf16.msra.mxu0 0
    %1926 = vmatprep.mubr.bf16.mxu0 0
    %1927 = vmatmul.mubr.bf16.gmra.mrb[0].mxu0 %v1889
    %v1928 = vpop.f32.mrb[0].mxu0
    %v1929 = vadd.f32 %v1742, %v1928
    %v1930 = vpop.f32.mrb[0].mxu0
    %v1931 = vpop.f32.mrb[0].mxu0
    %v1932 = vpop.f32.mrb[0].mxu0
    %1933 = vdwg.mxu0
    %v1935 = vsel %vm1528, %v1598, 0
    %v1938 = vsel %vm1605, %v1155, 0
    %1940 = vmatprep.subr.bf16.mxu0 0
    %1941 = vmatpush1.bf16.msra.mxu0 %v1938
    %1942 = vmatprep.subr.bf16.mxu0 0
    %1943 = vmatpush1.bf16.msra.mxu0 0
    %1944 = vmatprep.subr.bf16.mxu0 0
    %1945 = vmatpush1.bf16.msra.mxu0 0
    %1946 = vmatprep.subr.bf16.mxu0 0
    %1947 = vmatpush1.bf16.msra.mxu0 0
    %1948 = vmatprep.subr.bf16.mxu0 0
    %1949 = vmatpush1.bf16.msra.mxu0 0
    %1950 = vmatprep.subr.bf16.mxu0 0
    %1951 = vmatpush1.bf16.msra.mxu0 0
    %1952 = vmatprep.subr.bf16.mxu0 0
    %1953 = vmatpush1.bf16.msra.mxu0 0
    %1954 = vmatprep.subr.bf16.mxu0 0
    %1955 = vmatpush1.bf16.msra.mxu0 0
    %1956 = vmatprep.subr.bf16.mxu0 0
    %1957 = vmatpush1.bf16.msra.mxu0 0
    %1958 = vmatprep.subr.bf16.mxu0 0
    %1959 = vmatpush1.bf16.msra.mxu0 0
    %1960 = vmatprep.subr.bf16.mxu0 0
    %1961 = vmatpush1.bf16.msra.mxu0 0
    %1962 = vmatprep.subr.bf16.mxu0 0
    %1963 = vmatpush1.bf16.msra.mxu0 0
    %1964 = vmatprep.subr.bf16.mxu0 0
    %1965 = vmatpush1.bf16.msra.mxu0 0
    %1966 = vmatprep.subr.bf16.mxu0 0
    %1967 = vmatpush1.bf16.msra.mxu0 0
    %1968 = vmatprep.subr.bf16.mxu0 0
    %1969 = vmatpush1.bf16.msra.mxu0 0
    %1970 = vmatprep.subr.bf16.mxu0 0
    %1971 = vmatpush1.bf16.msra.mxu0 0
    %1972 = vmatprep.mubr.bf16.mxu0 0
    %1973 = vmatmul.mubr.bf16.gmra.mrb[0].mxu0 %v1935
    %v1974 = vpop.f32.mrb[0].mxu0
    %v1975 = vadd.f32 %v1791, %v1974
    %v1976 = vpop.f32.mrb[0].mxu0
    %v1977 = vpop.f32.mrb[0].mxu0
    %v1978 = vpop.f32.mrb[0].mxu0
    %1979 = vdwg.mxu0
    %v1980 = vcombine.high %v1837, 0.0
    %v1982 = vunpack.c.l.s4 1983009808
    %v1983 = vunpack.c.0.s8 %v1982
    %v1984 = vlaneseq
    %v1985 = vshrl.u32 %v1984, 7
    %v1986 = vsub.s32 %v1983, %v1985
    %v1987 = vrot.slane %v1837, %v1986
    %v1989 = vunpack.c.l.s4 1983009808
    %v1990 = vunpack.c.0.s8 %v1989
    %v1991 = vlaneseq
    %v1992 = vshrl.u32 %v1991, 7
    %v1993 = vsub.s32 %v1990, %v1992
    %v1994 = vrot.slane %v1980, %v1993
    %v1995 = vcombine.high %v1883, 0.0
    %v1997 = vunpack.c.l.s4 1983009808
    %v1998 = vunpack.c.0.s8 %v1997
    %v1999 = vlaneseq
    %v2000 = vshrl.u32 %v1999, 7
    %v2001 = vsub.s32 %v1998, %v2000
    %v2002 = vrot.slane %v1883, %v2001
    %v2004 = vunpack.c.l.s4 1983009808
    %v2005 = vunpack.c.0.s8 %v2004
    %v2006 = vlaneseq
    %v2007 = vshrl.u32 %v2006, 7
    %v2008 = vsub.s32 %v2005, %v2007
    %v2009 = vrot.slane %v1995, %v2008
    %v2010 = vcombine.low %v1987, %v2002
    %v2011 = vcombine.high %v1987, %v2002
    %v2013 = vunpack.c.l.s4 1934713408
    %v2014 = vunpack.c.0.s8 %v2013
    %v2015 = vlaneseq
    %v2016 = vshrl.u32 %v2015, 7
    %v2017 = vsub.s32 %v2014, %v2016
    %v2018 = vrot.slane %v2010, %v2017
    %v2020 = vunpack.c.l.s4 1934713408
    %v2021 = vunpack.c.0.s8 %v2020
    %v2022 = vlaneseq
    %v2023 = vshrl.u32 %v2022, 7
    %v2024 = vsub.s32 %v2021, %v2023
    %v2025 = vrot.slane %v2011, %v2024
    %v2026 = vcombine.low %v1994, %v2009
    %v2027 = vcombine.high %v1994, %v2009
    %v2029 = vunpack.c.l.s4 1934713408
    %v2030 = vunpack.c.0.s8 %v2029
    %v2031 = vlaneseq
    %v2032 = vshrl.u32 %v2031, 7
    %v2033 = vsub.s32 %v2030, %v2032
    %v2034 = vrot.slane %v2026, %v2033
    %v2036 = vunpack.c.l.s4 1934713408
    %v2037 = vunpack.c.0.s8 %v2036
    %v2038 = vlaneseq
    %v2039 = vshrl.u32 %v2038, 7
    %v2040 = vsub.s32 %v2037, %v2039
    %v2041 = vrot.slane %v2027, %v2040
    %v2042 = vcombine.high %v2018, 0.0
    %v2043 = vcombine.high %v2025, 0.0
    %v2044 = vcombine.high %v2034, 0.0
    %v2045 = vcombine.high %v2041, 0.0
    %v2046 = vcombine.high %v1929, 0.0
    %v2048 = vunpack.c.l.s4 1983009808
    %v2049 = vunpack.c.0.s8 %v2048
    %v2050 = vlaneseq
    %v2051 = vshrl.u32 %v2050, 7
    %v2052 = vsub.s32 %v2049, %v2051
    %v2053 = vrot.slane %v1929, %v2052
    %v2055 = vunpack.c.l.s4 1983009808
    %v2056 = vunpack.c.0.s8 %v2055
    %v2057 = vlaneseq
    %v2058 = vshrl.u32 %v2057, 7
    %v2059 = vsub.s32 %v2056, %v2058
    %v2060 = vrot.slane %v2046, %v2059
    %v2061 = vcombine.high %v1975, 0.0
    %v2063 = vunpack.c.l.s4 1983009808
    %v2064 = vunpack.c.0.s8 %v2063
    %v2065 = vlaneseq
    %v2066 = vshrl.u32 %v2065, 7
    %v2067 = vsub.s32 %v2064, %v2066
    %v2068 = vrot.slane %v1975, %v2067
    %v2070 = vunpack.c.l.s4 1983009808
    %v2071 = vunpack.c.0.s8 %v2070
    %v2072 = vlaneseq
    %v2073 = vshrl.u32 %v2072, 7
    %v2074 = vsub.s32 %v2071, %v2073
    %v2075 = vrot.slane %v2061, %v2074
    %v2076 = vcombine.low %v2053, %v2068
    %v2077 = vcombine.high %v2053, %v2068
    %v2079 = vunpack.c.l.s4 1934713408
    %v2080 = vunpack.c.0.s8 %v2079
    %v2081 = vlaneseq
    %v2082 = vshrl.u32 %v2081, 7
    %v2083 = vsub.s32 %v2080, %v2082
    %v2084 = vrot.slane %v2076, %v2083
    %v2086 = vunpack.c.l.s4 1934713408
    %v2087 = vunpack.c.0.s8 %v2086
    %v2088 = vlaneseq
    %v2089 = vshrl.u32 %v2088, 7
    %v2090 = vsub.s32 %v2087, %v2089
    %v2091 = vrot.slane %v2077, %v2090
    %v2092 = vcombine.low %v2060, %v2075
    %v2093 = vcombine.high %v2060, %v2075
    %v2095 = vunpack.c.l.s4 1934713408
    %v2096 = vunpack.c.0.s8 %v2095
    %v2097 = vlaneseq
    %v2098 = vshrl.u32 %v2097, 7
    %v2099 = vsub.s32 %v2096, %v2098
    %v2100 = vrot.slane %v2092, %v2099
    %v2102 = vunpack.c.l.s4 1934713408
    %v2103 = vunpack.c.0.s8 %v2102
    %v2104 = vlaneseq
    %v2105 = vshrl.u32 %v2104, 7
    %v2106 = vsub.s32 %v2103, %v2105
    %v2107 = vrot.slane %v2093, %v2106
    %v2108 = vcombine.high %v2084, 0.0
    %v2109 = vcombine.high %v2091, 0.0
    %v2110 = vcombine.high %v2100, 0.0
    %v2111 = vcombine.high %v2107, 0.0
    %v2112 = vcombine.low %v2018, %v2025
    %v2114 = vunpack.c.l.s4 1983009808
    %v2115 = vunpack.c.0.s8 %v2114
    %v2116 = vlaneseq
    %v2117 = vshrl.u32 %v2116, 7
    %v2118 = vsub.s32 %v2115, %v2117
    %v2119 = vrot.slane %v2112, %v2118
    %v2120 = vcombine.low %v2042, %v2043
    %v2122 = vunpack.c.l.s4 1983009808
    %v2123 = vunpack.c.0.s8 %v2122
    %v2124 = vlaneseq
    %v2125 = vshrl.u32 %v2124, 7
    %v2126 = vsub.s32 %v2123, %v2125
    %v2127 = vrot.slane %v2120, %v2126
    %v2128 = vcombine.low %v2034, %v2041
    %v2130 = vunpack.c.l.s4 1983009808
    %v2131 = vunpack.c.0.s8 %v2130
    %v2132 = vlaneseq
    %v2133 = vshrl.u32 %v2132, 7
    %v2134 = vsub.s32 %v2131, %v2133
    %v2135 = vrot.slane %v2128, %v2134
    %v2136 = vcombine.low %v2044, %v2045
    %v2138 = vunpack.c.l.s4 1983009808
    %v2139 = vunpack.c.0.s8 %v2138
    %v2140 = vlaneseq
    %v2141 = vshrl.u32 %v2140, 7
    %v2142 = vsub.s32 %v2139, %v2141
    %v2143 = vrot.slane %v2136, %v2142
    %v2144 = vcombine.low %v2119, %v2127
    %v2146 = vunpack.c.l.s4 1934713408
    %v2147 = vunpack.c.0.s8 %v2146
    %v2148 = vlaneseq
    %v2149 = vshrl.u32 %v2148, 7
    %v2150 = vsub.s32 %v2147, %v2149
    %v2151 = vrot.slane %v2144, %v2150
    %v2152 = vcombine.low %v2135, %v2143
    %v2154 = vunpack.c.l.s4 1934713408
    %v2155 = vunpack.c.0.s8 %v2154
    %v2156 = vlaneseq
    %v2157 = vshrl.u32 %v2156, 7
    %v2158 = vsub.s32 %v2155, %v2157
    %v2159 = vrot.slane %v2152, %v2158
    %v2160 = vcombine.low %v2151, %v2159
    %v2161 = vcombine.high %v2151, %v2159
    %v2162 = vcombine.low %v2084, %v2091
    %v2164 = vunpack.c.l.s4 1983009808
    %v2165 = vunpack.c.0.s8 %v2164
    %v2166 = vlaneseq
    %v2167 = vshrl.u32 %v2166, 7
    %v2168 = vsub.s32 %v2165, %v2167
    %v2169 = vrot.slane %v2162, %v2168
    %v2170 = vcombine.low %v2108, %v2109
    %v2172 = vunpack.c.l.s4 1983009808
    %v2173 = vunpack.c.0.s8 %v2172
    %v2174 = vlaneseq
    %v2175 = vshrl.u32 %v2174, 7
    %v2176 = vsub.s32 %v2173, %v2175
    %v2177 = vrot.slane %v2170, %v2176
    %v2178 = vcombine.low %v2100, %v2107
    %v2180 = vunpack.c.l.s4 1983009808
    %v2181 = vunpack.c.0.s8 %v2180
    %v2182 = vlaneseq
    %v2183 = vshrl.u32 %v2182, 7
    %v2184 = vsub.s32 %v2181, %v2183
    %v2185 = vrot.slane %v2178, %v2184
    %v2186 = vcombine.low %v2110, %v2111
    %v2188 = vunpack.c.l.s4 1983009808
    %v2189 = vunpack.c.0.s8 %v2188
    %v2190 = vlaneseq
    %v2191 = vshrl.u32 %v2190, 7
    %v2192 = vsub.s32 %v2189, %v2191
    %v2193 = vrot.slane %v2186, %v2192
    %v2194 = vcombine.low %v2169, %v2177
    %v2196 = vunpack.c.l.s4 1934713408
    %v2197 = vunpack.c.0.s8 %v2196
    %v2198 = vlaneseq
    %v2199 = vshrl.u32 %v2198, 7
    %v2200 = vsub.s32 %v2197, %v2199
    %v2201 = vrot.slane %v2194, %v2200
    %v2202 = vcombine.low %v2185, %v2193
    %v2204 = vunpack.c.l.s4 1934713408
    %v2205 = vunpack.c.0.s8 %v2204
    %v2206 = vlaneseq
    %v2207 = vshrl.u32 %v2206, 7
    %v2208 = vsub.s32 %v2205, %v2207
    %v2209 = vrot.slane %v2202, %v2208
    %v2210 = vcombine.low %v2201, %v2209
    %v2211 = vcombine.high %v2201, %v2209
    %2214 = vrot.lane.b32.xlu0 %v2161, 16
    %v2215 = vpop.permute.xlu0 %2214
    %2216 = vrot.lane.b32.xlu0 %v2211, 16
    %v2217 = vpop.permute.xlu0 %2216
    %v2220 = vsel %vm164, %v2160, %v2215
    %v2221 = vsel %vm164, %v2210, %v2217
    %v2222 = vpack.c.bf16 %v2221, %v2220
    %v2223 = vld [vmem:[%s10] sm:$0xf]
    %v2224 = vld [vmem:[%s10 + $0x4] sm:$0xf]
    %v2225 = vld [vmem:[%s10 + $0x8] sm:$0xf]
    %v2226 = vld [vmem:[%s10 + $0xc] sm:$0xf]
    %v2227 = vld [vmem:[#allocation10] sm:$0x1]
    %v2229 = vlaneseq
    %v2230 = vshrl.u32 %v2229, 7
    %v2231 = vsub.s32 0, %v2230
    %v2232 = vrot.slane %v2227, %v2231
    %v2238 = vunpack.c.l.b16 %v2223
    %v2239 = vunpack.c.l.b16 %v2224
    %v2240 = vunpack.c.l.b16 %v2225
    %v2241 = vunpack.c.l.b16 %v2226
    %v2242 = vpack.c.b16 %v2239, %v2238
    %v2243 = vpack.c.b16 %v2241, %v2240
    %v2247 = vsel %vm181, %v2222, 0
    %2249 = vmatprep.subr.bf16.mxu0 0
    %2250 = vmatpush1.bf16.msra.mxu0 %v2242
    %2251 = vmatprep.subr.bf16.mxu0 0
    %2252 = vmatpush1.bf16.msra.mxu0 %v2243
    %2253 = vmatprep.subr.bf16.mxu0 0
    %2254 = vmatpush1.bf16.msra.mxu0 0
    %2255 = vmatprep.subr.bf16.mxu0 0
    %2256 = vmatpush1.bf16.msra.mxu0 0
    %2257 = vmatprep.subr.bf16.mxu0 0
    %2258 = vmatpush1.bf16.msra.mxu0 0
    %2259 = vmatprep.subr.bf16.mxu0 0
    %2260 = vmatpush1.bf16.msra.mxu0 0
    %2261 = vmatprep.subr.bf16.mxu0 0
    %2262 = vmatpush1.bf16.msra.mxu0 0
    %2263 = vmatprep.subr.bf16.mxu0 0
    %2264 = vmatpush1.bf16.msra.mxu0 0
    %2265 = vmatprep.subr.bf16.mxu0 0
    %2266 = vmatpush1.bf16.msra.mxu0 0
    %2267 = vmatprep.subr.bf16.mxu0 0
    %2268 = vmatpush1.bf16.msra.mxu0 0
    %2269 = vmatprep.subr.bf16.mxu0 0
    %2270 = vmatpush1.bf16.msra.mxu0 0
    %2271 = vmatprep.subr.bf16.mxu0 0
    %2272 = vmatpush1.bf16.msra.mxu0 0
    %2273 = vmatprep.subr.bf16.mxu0 0
    %2274 = vmatpush1.bf16.msra.mxu0 0
    %2275 = vmatprep.subr.bf16.mxu0 0
    %2276 = vmatpush1.bf16.msra.mxu0 0
    %2277 = vmatprep.subr.bf16.mxu0 0
    %2278 = vmatpush1.bf16.msra.mxu0 0
    %2279 = vmatprep.subr.bf16.mxu0 0
    %2280 = vmatpush1.bf16.msra.mxu0 0
    %2281 = vmatprep.mubr.bf16.mxu0 0
    %2282 = vmatmul.mubr.bf16.gmra.mrb[0].mxu0 %v2247
    %v2283 = vpop.f32.mrb[0].mxu0
    %v2284 = vadd.f32 %v2232, %v2283
    %v2285 = vpop.f32.mrb[0].mxu0
    %v2286 = vpop.f32.mrb[0].mxu0
    %v2287 = vadd.f32 %v2232, %v2286
    %v2288 = vpop.f32.mrb[0].mxu0
    %2289 = vdwg.mxu0
    %v2290 = vmul.f32 %v223, 7.483315
    %v2291 = vmul.f32 %v224, 7.483315
    %v2292 = vadd.f32 %v2290, %v2284
    %v2293 = vadd.f32 %v2291, %v2287
    %v2294 = vld [vmem:[#allocation11] sm:$0x1]
    %v2295 = vld [vmem:[#allocation13] sm:$0x1]
    %v2296 = vsel %vm181, %v2292, 0.0
    %2297 = vadd.xlane.f32.xlu0 %v2296
    %v2298 = vpop.xlane.xlu0 %2297
    %v2299 = vsel %vm181, %v2293, 0.0
    %2300 = vadd.xlane.f32.xlu0 %v2299
    %v2301 = vpop.xlane.xlu0 %2300
    %v2302 = vmul.f32 %v2298, %v188
    %v2303 = vmul.f32 %v2301, %v188
    %v2304 = vsub.f32 %v2292, %v2302
    %v2305 = vsub.f32 %v2293, %v2303
    %v2306 = vmul.f32 %v2304, %v2304
    %v2307 = vmul.f32 %v2305, %v2305
    %v2308 = vsel %vm181, %v2306, 0.0
    %2309 = vadd.xlane.f32.xlu0 %v2308
    %v2310 = vpop.xlane.xlu0 %2309
    %v2311 = vsel %vm181, %v2307, 0.0
    %2312 = vadd.xlane.f32.xlu0 %v2311
    %v2313 = vpop.xlane.xlu0 %2312
    %v2314 = vmul.f32 %v2310, %v188
    %v2315 = vmul.f32 %v2313, %v188
    %v2316 = vadd.f32 %v2314, 1e-05
    %v2317 = vadd.f32 %v2315, 1e-05
    %v2318 = vrsqrt.pop %v2316
    %v2319 = vrsqrt.pop %v2317
    %v2320 = vmul.f32 %v2304, %v2318
    %v2321 = vmul.f32 %v2305, %v2319
    %v2323 = vlaneseq
    %v2324 = vshrl.u32 %v2323, 7
    %v2325 = vsub.s32 0, %v2324
    %v2326 = vrot.slane %v2294, %v2325
    %v2328 = vmul.f32 %v2320, %v2326
    %v2329 = vmul.f32 %v2321, %v2326
    %v2331 = vlaneseq
    %v2332 = vshrl.u32 %v2331, 7
    %v2333 = vsub.s32 0, %v2332
    %v2334 = vrot.slane %v2295, %v2333
    %v2336 = vadd.f32 %v2328, %v2334
    %v2337 = vadd.f32 %v2329, %v2334
    %v2338 = vpack.c.bf16 %v2337, %v2336
    %v2339 = vld [vmem:[%s14] sm:$0xf]
    %v2340 = vld [vmem:[%s14 + $0x4] sm:$0xf]
    %v2341 = vld [vmem:[%s14 + $0x8] sm:$0xf]
    %v2342 = vld [vmem:[%s14 + $0xc] sm:$0xf]
    %v2343 = vld [vmem:[%s15] sm:$0x1]
    %v2345 = vlaneseq
    %v2346 = vshrl.u32 %v2345, 7
    %v2347 = vsub.s32 0, %v2346
    %v2348 = vrot.slane %v2343, %v2347
    %v2354 = vunpack.c.l.b16 %v2339
    %v2355 = vunpack.c.l.b16 %v2340
    %v2356 = vunpack.c.l.b16 %v2341
    %v2357 = vunpack.c.l.b16 %v2342
    %v2358 = vpack.c.b16 %v2355, %v2354
    %v2359 = vpack.c.b16 %v2357, %v2356
    %v2363 = vsel %vm181, %v2338, 0
    %2365 = vmatprep.subr.bf16.mxu0 0
    %2366 = vmatpush1.bf16.msra.mxu0 %v2358
    %2367 = vmatprep.subr.bf16.mxu0 0
    %2368 = vmatpush1.bf16.msra.mxu0 %v2359
    %2369 = vmatprep.subr.bf16.mxu0 0
    %2370 = vmatpush1.bf16.msra.mxu0 0
    %2371 = vmatprep.subr.bf16.mxu0 0
    %2372 = vmatpush1.bf16.msra.mxu0 0
    %2373 = vmatprep.subr.bf16.mxu0 0
    %2374 = vmatpush1.bf16.msra.mxu0 0
    %2375 = vmatprep.subr.bf16.mxu0 0
    %2376 = vmatpush1.bf16.msra.mxu0 0
    %2377 = vmatprep.subr.bf16.mxu0 0
    %2378 = vmatpush1.bf16.msra.mxu0 0
    %2379 = vmatprep.subr.bf16.mxu0 0
    %2380 = vmatpush1.bf16.msra.mxu0 0
    %2381 = vmatprep.subr.bf16.mxu0 0
    %2382 = vmatpush1.bf16.msra.mxu0 0
    %2383 = vmatprep.subr.bf16.mxu0 0
    %2384 = vmatpush1.bf16.msra.mxu0 0
    %2385 = vmatprep.subr.bf16.mxu0 0
    %2386 = vmatpush1.bf16.msra.mxu0 0
    %2387 = vmatprep.subr.bf16.mxu0 0
    %2388 = vmatpush1.bf16.msra.mxu0 0
    %2389 = vmatprep.subr.bf16.mxu0 0
    %2390 = vmatpush1.bf16.msra.mxu0 0
    %2391 = vmatprep.subr.bf16.mxu0 0
    %2392 = vmatpush1.bf16.msra.mxu0 0
    %2393 = vmatprep.subr.bf16.mxu0 0
    %2394 = vmatpush1.bf16.msra.mxu0 0
    %2395 = vmatprep.subr.bf16.mxu0 0
    %2396 = vmatpush1.bf16.msra.mxu0 0
    %2397 = vmatprep.mubr.bf16.mxu0 0
    %2398 = vmatmul.mubr.bf16.gmra.mrb[0].mxu0 %v2363
    %v2399 = vpop.f32.mrb[0].mxu0
    %v2400 = vadd.f32 %v2348, %v2399
    %v2401 = vpop.f32.mrb[0].mxu0
    %v2402 = vpop.f32.mrb[0].mxu0
    %v2403 = vadd.f32 %v2348, %v2402
    %v2404 = vpop.f32.mrb[0].mxu0
    %2405 = vdwg.mxu0
    %v2406 = vmul.f32 %v2400, 0.5
    %v2407 = vmul.f32 %v2403, 0.5
    %v2408 = vmul.f32 %v2400, 0.7978846
    %v2409 = vmul.f32 %v2403, 0.7978846
    %v2410 = vmul.f32 %v2400, 0.044715
    %v2411 = vmul.f32 %v2403, 0.044715
    %v2412 = vmul.f32 %v2410, %v2400
    %v2413 = vmul.f32 %v2411, %v2403
    %v2414 = vadd.f32 %v2412, 1.0
    %v2415 = vadd.f32 %v2413, 1.0
    %v2416 = vmul.f32 %v2408, %v2414
    %v2417 = vmul.f32 %v2409, %v2415
    %v2418 = vtanh.pop %v2416
    %v2419 = vtanh.pop %v2417
    %v2420 = vadd.f32 %v2418, 1.0
    %v2421 = vadd.f32 %v2419, 1.0
    %v2422 = vmul.f32 %v2406, %v2420
    %v2423 = vmul.f32 %v2407, %v2421
    %v2424 = vpack.c.bf16 %v2423, %v2422
    %v2425 = vld [vmem:[%s16] sm:$0xf]
    %v2426 = vld [vmem:[%s16 + $0x4] sm:$0xf]
    %v2427 = vld [vmem:[%s16 + $0x8] sm:$0xf]
    %v2428 = vld [vmem:[%s16 + $0xc] sm:$0xf]
    %v2429 = vld [vmem:[%s16 + $0x10] sm:$0xf]
    %v2430 = vld [vmem:[%s16 + $0x14] sm:$0xf]
    %v2431 = vld [vmem:[%s16 + $0x18] sm:$0xf]
    %v2432 = vld [vmem:[%s16 + $0x1c] sm:$0xf]
    %v2433 = vld [vmem:[%s16 + $0x20] sm:$0xf]
    %v2434 = vld [vmem:[%s16 + $0x24] sm:$0xf]
    %v2435 = vld [vmem:[%s16 + $0x28] sm:$0xf]
    %v2436 = vld [vmem:[%s16 + $0x2c] sm:$0xf]
    %v2437 = vld [vmem:[%s16 + $0x30] sm:$0xf]
    %v2438 = vld [vmem:[%s16 + $0x34] sm:$0xf]
    %v2439 = vld [vmem:[%s16 + $0x38] sm:$0xf]
    %v2440 = vld [vmem:[%s16 + $0x3c] sm:$0xf]
    %v2441 = vld [vmem:[%s17] sm:$0x1]
    %v2443 = vlaneseq
    %v2444 = vshrl.u32 %v2443, 7
    %v2445 = vsub.s32 0, %v2444
    %v2446 = vrot.slane %v2441, %v2445
    %v2464 = vunpack.c.l.b16 %v2425
    %v2465 = vunpack.c.l.b16 %v2426
    %v2466 = vunpack.c.l.b16 %v2427
    %v2467 = vunpack.c.l.b16 %v2428
    %v2468 = vunpack.c.l.b16 %v2429
    %v2469 = vunpack.c.l.b16 %v2430
    %v2470 = vunpack.c.l.b16 %v2431
    %v2471 = vunpack.c.l.b16 %v2432
    %v2472 = vunpack.c.l.b16 %v2433
    %v2473 = vunpack.c.l.b16 %v2434
    %v2474 = vunpack.c.l.b16 %v2435
    %v2475 = vunpack.c.l.b16 %v2436
    %v2476 = vunpack.c.l.b16 %v2437
    %v2477 = vunpack.c.l.b16 %v2438
    %v2478 = vunpack.c.l.b16 %v2439
    %v2479 = vunpack.c.l.b16 %v2440
    %v2480 = vpack.c.b16 %v2465, %v2464
    %v2481 = vpack.c.b16 %v2467, %v2466
    %v2482 = vpack.c.b16 %v2469, %v2468
    %v2483 = vpack.c.b16 %v2471, %v2470
    %v2484 = vpack.c.b16 %v2473, %v2472
    %v2485 = vpack.c.b16 %v2475, %v2474
    %v2486 = vpack.c.b16 %v2477, %v2476
    %v2487 = vpack.c.b16 %v2479, %v2478
    %2496 = vmatprep.subr.bf16.mxu0 0
    %2497 = vmatpush1.bf16.msra.mxu0 %v2480
    %2498 = vmatprep.subr.bf16.mxu0 0
    %2499 = vmatpush1.bf16.msra.mxu0 %v2481
    %2500 = vmatprep.subr.bf16.mxu0 0
    %2501 = vmatpush1.bf16.msra.mxu0 %v2482
    %2502 = vmatprep.subr.bf16.mxu0 0
    %2503 = vmatpush1.bf16.msra.mxu0 %v2483
    %2504 = vmatprep.subr.bf16.mxu0 0
    %2505 = vmatpush1.bf16.msra.mxu0 %v2484
    %2506 = vmatprep.subr.bf16.mxu0 0
    %2507 = vmatpush1.bf16.msra.mxu0 %v2485
    %2508 = vmatprep.subr.bf16.mxu0 0
    %2509 = vmatpush1.bf16.msra.mxu0 %v2486
    %2510 = vmatprep.subr.bf16.mxu0 0
    %2511 = vmatpush1.bf16.msra.mxu0 %v2487
    %2512 = vmatprep.subr.bf16.mxu0 0
    %2513 = vmatpush1.bf16.msra.mxu0 0
    %2514 = vmatprep.subr.bf16.mxu0 0
    %2515 = vmatpush1.bf16.msra.mxu0 0
    %2516 = vmatprep.subr.bf16.mxu0 0
    %2517 = vmatpush1.bf16.msra.mxu0 0
    %2518 = vmatprep.subr.bf16.mxu0 0
    %2519 = vmatpush1.bf16.msra.mxu0 0
    %2520 = vmatprep.subr.bf16.mxu0 0
    %2521 = vmatpush1.bf16.msra.mxu0 0
    %2522 = vmatprep.subr.bf16.mxu0 0
    %2523 = vmatpush1.bf16.msra.mxu0 0
    %2524 = vmatprep.subr.bf16.mxu0 0
    %2525 = vmatpush1.bf16.msra.mxu0 0
    %2526 = vmatprep.subr.bf16.mxu0 0
    %2527 = vmatpush1.bf16.msra.mxu0 0
    %2528 = vmatprep.mubr.bf16.mxu0 0
    %2529 = vmatmul.mubr.bf16.gmra.mrb[0].mxu0 %v2424
    %v2530 = vpop.f32.mrb[0].mxu0
    %v2531 = vadd.f32 %v2446, %v2530
    %v2532 = vpop.f32.mrb[0].mxu0
    %v2533 = vpop.f32.mrb[0].mxu0
    %v2534 = vadd.f32 %v2446, %v2533
    %v2535 = vpop.f32.mrb[0].mxu0
    %2536 = vdwg.mxu0
    %v2537 = vmul.f32 %v2336, 7.483315
    %v2538 = vmul.f32 %v2337, 7.483315
    %v2539 = vadd.f32 %v2537, %v2531
    %v2540 = vadd.f32 %v2538, %v2534
    %2541 = vst.msk [vmem:[#allocation14] sm:$0xff] %vm181, %v2539
    %2542 = vst.msk [vmem:[#allocation14 + $0x8] sm:$0xff] %vm181, %v2540
    // Predicated region
    $region102: #{tpu_custom_call.1} parent=1 // pred_check
      _
    $region103: #{tpu_custom_call.1} parent=1 // pred_check_branch
      %2544 = sbr.rel (0) target = $region105
    $region104: #{tpu_custom_call.1} parent=1 // pred_region
      %s2546 = ssub.s32 256, 256
      %2547 = vsyncadd [#allocation4], %s2546
      %s2548 = sshll.u32 [#allocation14], 4
      %s2549 = int_to_ptr.vmem [resolvable:$true] %s2548
      %2554 = dma.vmem_to_hbm [thread:$0]  %s2549, 256, %s18, [#allocation4], 128, 128, 8
    $region105: #{tpu_custom_call.1} parent=1 // pred_fallthru
      _
    // Predicated region
    $region106: #{tpu_custom_call.1} parent=1 // pred_check
      _
    $region107: #{tpu_custom_call.1} parent=1 // pred_check_branch
      %2556 = sbr.rel (0) target = $region109
    $region108: #{tpu_custom_call.1} parent=1 // pred_region
      %s2558 = ssub.s32 256, 256
      %2559 = vsyncadd [#allocation16], %s2558
      %s2560 = sshll.u32 [#allocation15], 4
      %s2561 = int_to_ptr.vmem [resolvable:$true] %s2560
      %2566 = dma.vmem_to_hbm [thread:$0]  %s2561, 256, %s19, [#allocation16], 128, 128, 8
    $region109: #{tpu_custom_call.1} parent=1 // pred_fallthru
      _
    // Predicated region
    $region110: #{tpu_custom_call.1} parent=1 // pred_check
      _
    $region111: #{tpu_custom_call.1} parent=1 // pred_check_branch
      %2568 = sbr.rel (0) target = $region113
    $region112: #{tpu_custom_call.1} parent=1 // pred_region
      %s2570 = ssub.s32 256, 256
      %2571 = vsyncadd [#allocation16], %s2570
      %s2572 = sshll.u32 [#allocation17], 4
      %s2573 = int_to_ptr.vmem [resolvable:$true] %s2572
      %2578 = dma.vmem_to_hbm [thread:$0]  %s2573, 256, %s20, [#allocation16], 128, 128, 8
    $region113: #{tpu_custom_call.1} parent=1 // pred_fallthru
      _
    // Predicated region
    $region114: #{tpu_custom_call.1} parent=1 // pred_check
      _
    $region115: #{tpu_custom_call.1} parent=1 // pred_check_branch
      %2580 = sbr.rel (0) target = $region117
    $region116: #{tpu_custom_call.1} parent=1 // pred_region
      %2581 = dma.done [#allocation4], 256
    $region117: #{tpu_custom_call.1} parent=1 // pred_fallthru
      _
    // Predicated region
    $region118: #{tpu_custom_call.1} parent=1 // pred_check
      _
    $region119: #{tpu_custom_call.1} parent=1 // pred_check_branch
      %2583 = sbr.rel (0) target = $region121
    $region120: #{tpu_custom_call.1} parent=1 // pred_region
      %2584 = dma.done [#allocation16], 256
    $region121: #{tpu_custom_call.1} parent=1 // pred_fallthru
      _
    // Predicated region
    $region122: #{tpu_custom_call.1} parent=1 // pred_check
      _
    $region123: #{tpu_custom_call.1} parent=1 // pred_check_branch
      %2586 = sbr.rel (0) target = $region125
    $region124: #{tpu_custom_call.1} parent=1 // pred_region
      %2587 = dma.done [#allocation16], 256
    $region125: #{tpu_custom_call.1} parent=1 // pred_fallthru
      _
    %2588 = vsyncpa [#allocation3], 1
    %2589 = vsyncpa [#allocation6], 1
    %2590 = vsyncpa [#allocation9], 1
    %2591 = vsyncpa [#allocation12], 1
    %2592 = vsyncpa [#allocation4], 1
    %2593 = vsyncpa [#allocation16], 1

</llo_original>
